<compile_context>
chip_gen: v7x
topology: tpu7x:2x2x1
jax: 0.10.0
libtpu: 0.0.40
codegen_flags: <defaults>
</compile_context>

<pallas_src>
import jax
import jax.numpy as jnp
from jax.experimental import pallas as pl
from jax.experimental.pallas import tpu as pltpu


NEG_INF = jnp.float32(-1e30)
NEG_SLOPE = 0.2

_VMEM = pl.BlockSpec(memory_space=pltpu.MemorySpace.VMEM)


# ----------------------------------------------------------------------------
# In-kernel building block: dense multi-head GATv2 (PyG semantics, concat=True)
# ----------------------------------------------------------------------------
def _gatv2_dense(h, mask, wlr, blr, a_full, bias, *, relu=True):
    """All-heads-fused dense GATv2 layer.

    h      : (n, f_in)   f32 node features (n padded to a multiple of 8)
    mask   : (n, n)      f32 additive mask (target x source): 0 on edges/self-loops, -1e30 else
    wlr    : (f_in, 2hc) bf16 fused [lin_l | lin_r] weights (hc = heads * out_ch)
    blr    : (1, 2hc)    f32 fused biases
    a_full : (hc, hc)    bf16 block-diagonal attention matrix; one MXU matmul yields every head's
                         logit already replicated across that head's out_ch lanes
    bias   : (1, hc)     f32 output bias
    """
    n = h.shape[0]
    hc = a_full.shape[0]
    lr = jnp.dot(h.astype(jnp.bfloat16), wlr, preferred_element_type=jnp.float32) + blr
    left = lr[:, :hc]            # lin_l(x): source / message term (lane-aligned slice)
    right = lr[:, hc:]           # lin_r(x): target term
    s = right[:, None, :] + left[None, :, :]                      # (n, n, hc) lane-full
    s = jnp.maximum(s, NEG_SLOPE * s)                             # leaky_relu(0.2), mul+max only
    # All-head logits via one bf16 MXU matmul with f32 accumulation.
    e = jnp.dot(s.astype(jnp.bfloat16).reshape(n * n, hc), a_full,
                preferred_element_type=jnp.float32).reshape(n, n, hc)
    e = e + mask[:, :, None]                                      # additive mask (broadcast)
    m = jnp.max(e, axis=1, keepdims=True)                         # (n, 1, hc)
    p = jnp.exp(e - m)                                            # masked entries underflow to 0
    denom = jnp.sum(p, axis=1, keepdims=True)
    alpha = p * pl.reciprocal(denom, approx=True)                 # softmax over sources (EUP)
    # TODO(synk): attention dropout (p=0.6) is training-only; eval-mode identity here.
    out = jnp.sum(alpha * left[None, :, :], axis=1) + bias        # (n, hc)
    if relu:
        out = jnp.maximum(out, 0.0)
    return out


# ----------------------------------------------------------------------------
# Single fused kernel: agent branch (emb + 2x GATv2 + global GATv2) + map branch (emb + 2x GATv2)
# ----------------------------------------------------------------------------
def _vectornet_kernel(
    # agent branch inputs
    ax_ref, amask_ref, aew_ref, aeb_ref,
    a1w_ref, a1b_ref, a1a_ref, a1c_ref,
    a2w_ref, a2b_ref, a2a_ref, a2c_ref,
    agw_ref, agb_ref, aga_ref, agc_ref,
    # map branch inputs
    mx_ref, mmask_ref, mew_ref, meb_ref,
    m1w_ref, m1b_ref, m1a_ref, m1c_ref,
    m2w_ref, m2b_ref, m2a_ref, m2c_ref,
    # outputs
    afeat_ref, aglob_ref, mfeat_ref,
):
    # TODO(synk): on v7x, split the two branches across the 2 TensorCores via core_map.
    # ---- agent branch ----
    amask = amask_ref[...].astype(jnp.float32)
    h = jnp.dot(ax_ref[...].astype(jnp.bfloat16), aew_ref[...],
                preferred_element_type=jnp.float32) + aeb_ref[...]
    h = jnp.maximum(h, 0.0)                                               # agent embedding + relu
    h = _gatv2_dense(h, amask, a1w_ref[...], a1b_ref[...], a1a_ref[...], a1c_ref[...])
    h = _gatv2_dense(h, amask, a2w_ref[...], a2b_ref[...], a2a_ref[...], a2c_ref[...])
    afeat_ref[...] = h.astype(afeat_ref.dtype)                            # full 128-lane store
    g = _gatv2_dense(h, amask, agw_ref[...], agb_ref[...], aga_ref[...], agc_ref[...])
    aglob_ref[...] = g.astype(aglob_ref.dtype)                            # padded to 128 lanes

    # ---- map branch ----
    mmask = mmask_ref[...].astype(jnp.float32)
    h = jnp.dot(mx_ref[...].astype(jnp.bfloat16), mew_ref[...],
                preferred_element_type=jnp.float32) + meb_ref[...]
    h = jnp.maximum(h, 0.0)                                               # map embedding + relu
    h = _gatv2_dense(h, mmask, m1w_ref[...], m1b_ref[...], m1a_ref[...], m1c_ref[...])
    h = _gatv2_dense(h, mmask, m2w_ref[...], m2b_ref[...], m2a_ref[...], m2c_ref[...])
    mfeat_ref[...] = h.astype(mfeat_ref.dtype)


def _vmem_limit_bytes(n_max, hc):
    # Live set per GAT layer ~ {s, s_bf16, e, p, alpha} (n, n, hc) slabs + weights/activations.
    per_layer = 6 * n_max * n_max * hc * 4
    est = per_layer + (8 << 20)
    # Never below the v6e default scoped limit; cap at 48 MiB (v7x has 64 MiB physical VMEM).
    return int(min(48 << 20, max(32 << 20, est)))


def _fused_branches(agent_x_p, agent_mask, map_x_p, map_mask, pp):
    na, nl = agent_x_p.shape[0], map_x_p.shape[0]
    hc = pp["agent_sub1"][2].shape[0]        # heads * out_ch (=128)
    gcp = pp["global_graph"][2].shape[0]     # padded global width (=128, lane-dense)
    args = (agent_x_p, agent_mask, *pp["agent_embedding"],
            *pp["agent_sub1"], *pp["agent_sub2"], *pp["global_graph"],
            map_x_p, map_mask, *pp["map_embedding"],
            *pp["map_sub1"], *pp["map_sub2"])
    return pl.pallas_call(
        _vectornet_kernel,
        out_shape=(jax.ShapeDtypeStruct((na, hc), jnp.float32),
                   jax.ShapeDtypeStruct((na, gcp), jnp.float32),
                   jax.ShapeDtypeStruct((nl, hc), jnp.float32)),
        in_specs=[_VMEM] * len(args),
        out_specs=(_VMEM, _VMEM, _VMEM),
        compiler_params=pltpu.CompilerParams(
            vmem_limit_bytes=_vmem_limit_bytes(max(na, nl), hc)),
    )(*args)


# ----------------------------------------------------------------------------
# Plain-JAX glue: parameter packing, padding, masks (hoisted out of the forward path)
# ----------------------------------------------------------------------------
def init_linear(key, fan_in, fan_out):
    k1, k2 = jax.random.split(key)
    w = jax.random.normal(k1, (fan_in, fan_out), jnp.float32) / jnp.sqrt(float(fan_in))
    b = 0.01 * jax.random.normal(k2, (fan_out,), jnp.float32)
    return w, b


def init_gatv2(key, fan_in, out_ch, heads):
    k1, k2, k3 = jax.random.split(key, 3)
    wl, bl = init_linear(k1, fan_in, heads * out_ch)   # lin_l
    wr, br = init_linear(k2, fan_in, heads * out_ch)   # lin_r
    att = 0.1 * jax.random.normal(k3, (heads, out_ch), jnp.float32)
    bias = jnp.zeros((heads * out_ch,), jnp.float32)
    return (wl, bl, wr, br, att, bias)


def _round_up(n, m):
    return ((n + m - 1) // m) * m


def _pad_rows(a, n_pad):
    return jnp.pad(a, ((0, n_pad - a.shape[0]), (0, 0)))


def _prep_linear(w, b):
    return (w.astype(jnp.bfloat16), b.reshape(1, -1).astype(jnp.float32))


def _prep_gatv2(params, pad_to=None):
    """Pack one GATv2 layer: fused [lin_l | lin_r] bf16 weight, block-diag bf16 attention matrix
    (each head's logit replicated across its out_ch lanes), optional lane-dense output padding."""
    wl, bl, wr, br, att, bias = params
    heads, out_ch = att.shape
    hc = heads * out_ch
    a_full = (jnp.kron(jnp.eye(heads, dtype=jnp.float32),
                       jnp.ones((out_ch, out_ch), jnp.float32))
              * att.reshape(hc, 1))
    hcp = hc if pad_to is None else max(pad_to, hc)
    if hcp != hc:
        pad = hcp - hc
        a_full = jnp.pad(a_full, ((0, pad), (0, pad)))
        wl = jnp.pad(wl, ((0, 0), (0, pad)))
        wr = jnp.pad(wr, ((0, 0), (0, pad)))
        bl = jnp.pad(bl, (0, pad))
        br = jnp.pad(br, (0, pad))
        bias = jnp.pad(bias, (0, pad))
    wlr = jnp.concatenate([wl, wr], axis=1).astype(jnp.bfloat16)
    blr = jnp.concatenate([bl, br]).reshape(1, 2 * hcp).astype(jnp.float32)
    return (wlr, blr, a_full.astype(jnp.bfloat16), bias.reshape(1, hcp).astype(jnp.float32))


def prepare_params(params):
    """One-time parameter packing (called once per weight set, NOT per forward)."""
    gc = int(params["global_graph"][4].size)            # heads * out_ch of global graph (=32)
    return {
        "agent_embedding":      _prep_linear(*params["agent_embedding"]),
        "agent_sub1":           _prep_gatv2(params["agent_sub1"]),
        "agent_sub2":           _prep_gatv2(params["agent_sub2"]),
        "global_graph":         _prep_gatv2(params["global_graph"], pad_to=_round_up(gc, 128)),
        "map_embedding":        _prep_linear(*params["map_embedding"]),
        "map_sub1":             _prep_gatv2(params["map_sub1"]),
        "map_sub2":             _prep_gatv2(params["map_sub2"]),
        "global_out_dim":       gc,
        "centerline_processor": params["centerline_processor"],
        "fc":                   params["fc"],
    }


def _mask_bias(edge_index, n_pad):
    """Compact additive attention mask, shape (n_pad, n_pad) bf16 = (target, source):
    0 where an edge src->tgt or a self-loop exists (PyG add_self_loops=True), -1e30 otherwise.
    Padded rows keep their self-loop so softmax denominators never vanish."""
    src, tgt = edge_index[0], edge_index[1]
    mb = jnp.full((n_pad, n_pad), NEG_INF, jnp.float32)
    mb = mb.at[tgt, src].set(0.0)
    diag = jnp.arange(n_pad)
    mb = mb.at[diag, diag].set(0.0)
    return mb.astype(jnp.bfloat16)


def preprocess_graphs(data):
    """One-time per-graph preprocessing (row padding + mask scatter), hoisted out of the
    per-forward path so no XLA scatter sits in front of the fused kernel launch."""
    n_agents = data["x"].shape[0]
    agent_x = data["x"].reshape(n_agents, -1).astype(jnp.float32)          # view(N, -1)
    na = _round_up(n_agents, 8)
    n_lanes = data["lane_x"].shape[0]
    nl = _round_up(n_lanes, 8)
    return {
        "agent_x":    _pad_rows(agent_x, na),
        "agent_mask": _mask_bias(data["edge_index"], na),
        "map_x":      _pad_rows(data["lane_x"].astype(jnp.float32), nl),
        "map_mask":   _mask_bias(data["lane_edge_index"], nl),
        "n_agents":   n_agents,
        "n_lanes":    n_lanes,
    }


def vectornet_forward(prepped, data, graph=None):
    if graph is None:
        graph = preprocess_graphs(data)
    n_agents, n_lanes = graph["n_agents"], graph["n_lanes"]

    # ---- fused Pallas kernel: both branches, all GAT layers ----
    afeat_p, aglob_p, mfeat_p = _fused_branches(
        graph["agent_x"], graph["agent_mask"], graph["map_x"], graph["map_mask"], prepped)

    gc = prepped["global_out_dim"]
    agent_features = afeat_p[:n_agents]
    global_features = aglob_p[:n_agents, :gc]
    map_features = mfeat_p[:n_lanes]

    # ---- global mean pools (computed in the reference forward but unused downstream) ----
    num_graphs = data["num_graphs"]
    seg_sum = jax.ops.segment_sum(agent_features, data["batch"], num_segments=num_graphs)
    seg_cnt = jax.ops.segment_sum(jnp.ones((n_agents, 1), jnp.float32),
                                  data["batch"], num_segments=num_graphs)
    agent_global_features = seg_sum / seg_cnt                              # noqa: F841 (unused, as in reference)
    map_global_features = jnp.mean(map_features, axis=0, keepdims=True)    # noqa: F841 (unused, as in reference)

    # ---- focal gather + centerlines + head (tiny linears left to XLA: overhead > compute) ----
    focal = global_features[data["focal_idx"]]
    cw, cb = prepped["centerline_processor"]
    cl_means = jnp.stack([jnp.mean(cl, axis=0) for cl in data["centerline"]], axis=0)  # (F, 2)
    processed_cl = cl_means @ cw + cb
    if processed_cl.shape[0] != focal.shape[0]:
        processed_cl = jnp.broadcast_to(processed_cl[0:1],
                                        (focal.shape[0], processed_cl.shape[1]))
    fw, fb = prepped["fc"]
    combined = jnp.concatenate([focal, processed_cl], axis=1)              # (F, 2*hidden)
    return combined @ fw + fb


# ----------------------------------------------------------------------------
if __name__ == "__main__":
    key = jax.random.PRNGKey(0)
    in_channels, out_channels, hidden, seq_len, heads = 4, 6, 32, 5, 4
    n_agents, n_lanes, n_focal = 8, 12, 2

    ks = jax.random.split(key, 16)
    params = {
        "agent_embedding":      init_linear(ks[0], in_channels * seq_len, hidden),
        "agent_sub1":           init_gatv2(ks[1], hidden, hidden, heads),
        "agent_sub2":           init_gatv2(ks[2], hidden * heads, hidden, heads),
        "map_embedding":        init_linear(ks[3], 2, hidden),
        "map_sub1":             init_gatv2(ks[4], hidden, hidden, heads),
        "map_sub2":             init_gatv2(ks[5], hidden * heads, hidden, heads),
        "centerline_processor": init_linear(ks[6], 2, hidden),
        "global_graph":         init_gatv2(ks[7], hidden * heads, hidden, 1),
        "fc":                   init_linear(ks[8], hidden + hidden, out_channels),
    }

    x = jax.random.normal(ks[9], (n_agents, seq_len, in_channels), jnp.float32)
    edge_index = jnp.array(
        [[0, 1, 2, 3, 4, 5, 6, 7, 0, 2, 4, 6],
         [1, 2, 3, 4, 5, 6, 7, 0, 4, 6, 0, 2]], dtype=jnp.int32)
    lane_x = jax.random.normal(ks[10], (n_lanes, 2), jnp.float32)
    lsrc = jnp.arange(n_lanes, dtype=jnp.int32)
    lane_edge_index = jnp.stack([lsrc, (lsrc + 1) % n_lanes])
    batch = jnp.array([0, 0, 0, 0, 1, 1, 1, 1], dtype=jnp.int32)
    focal_idx = jnp.array([0, 4], dtype=jnp.int32)
    centerline = [jax.random.normal(ks[11], (10, 2), jnp.float32),
                  jax.random.normal(ks[12], (7, 2), jnp.float32)]

    data = dict(x=x, edge_index=edge_index, lane_x=lane_x,
                lane_edge_index=lane_edge_index, batch=batch, num_graphs=2,
                focal_idx=focal_idx, centerline=centerline)

    prepped = prepare_params(params)        # hoisted: once per weight set
    graph = preprocess_graphs(data)         # hoisted: once per graph topology

    out = vectornet_forward(prepped, data, graph)
    jax.block_until_ready(out)
    assert out.shape == (n_focal, out_channels), out.shape
    print("KERNEL_OK")
</pallas_src>

<mosaic_0001>
module attributes {stable_mosaic.version = 11 : i64} {
  func.func @_vectornet_kernel(%arg0: memref<8x20xf32, #tpu.memory_space<vmem>>, %arg1: memref<8x8xbf16, #tpu.memory_space<vmem>>, %arg2: memref<20x32xbf16, #tpu.memory_space<vmem>>, %arg3: memref<1x32xf32, #tpu.memory_space<vmem>>, %arg4: memref<32x256xbf16, #tpu.memory_space<vmem>>, %arg5: memref<1x256xf32, #tpu.memory_space<vmem>>, %arg6: memref<128x128xbf16, #tpu.memory_space<vmem>>, %arg7: memref<1x128xf32, #tpu.memory_space<vmem>>, %arg8: memref<128x256xbf16, #tpu.memory_space<vmem>>, %arg9: memref<1x256xf32, #tpu.memory_space<vmem>>, %arg10: memref<128x128xbf16, #tpu.memory_space<vmem>>, %arg11: memref<1x128xf32, #tpu.memory_space<vmem>>, %arg12: memref<128x256xbf16, #tpu.memory_space<vmem>>, %arg13: memref<1x256xf32, #tpu.memory_space<vmem>>, %arg14: memref<128x128xbf16, #tpu.memory_space<vmem>>, %arg15: memref<1x128xf32, #tpu.memory_space<vmem>>, %arg16: memref<16x2xf32, #tpu.memory_space<vmem>>, %arg17: memref<16x16xbf16, #tpu.memory_space<vmem>>, %arg18: memref<2x32xbf16, #tpu.memory_space<vmem>>, %arg19: memref<1x32xf32, #tpu.memory_space<vmem>>, %arg20: memref<32x256xbf16, #tpu.memory_space<vmem>>, %arg21: memref<1x256xf32, #tpu.memory_space<vmem>>, %arg22: memref<128x128xbf16, #tpu.memory_space<vmem>>, %arg23: memref<1x128xf32, #tpu.memory_space<vmem>>, %arg24: memref<128x256xbf16, #tpu.memory_space<vmem>>, %arg25: memref<1x256xf32, #tpu.memory_space<vmem>>, %arg26: memref<128x128xbf16, #tpu.memory_space<vmem>>, %arg27: memref<1x128xf32, #tpu.memory_space<vmem>>, %arg28: memref<8x128xf32, #tpu.memory_space<vmem>>, %arg29: memref<8x128xf32, #tpu.memory_space<vmem>>, %arg30: memref<16x128xf32, #tpu.memory_space<vmem>>) attributes {dimension_semantics = [], scalar_prefetch = 0 : i64, scratch_operands = 0 : i64, tpu.core_type = #tpu.core_type<tc>} {
    %c0 = arith.constant 0 : index
    %c0_0 = arith.constant 0 : index
    %0 = vector.load %arg1[%c0, %c0_0] : memref<8x8xbf16, #tpu.memory_space<vmem>>, vector<8x8xbf16>
    %1 = arith.extf %0 : vector<8x8xbf16> to vector<8x8xf32>
    %c0_1 = arith.constant 0 : index
    %c0_2 = arith.constant 0 : index
    %2 = vector.load %arg0[%c0_1, %c0_2] : memref<8x20xf32, #tpu.memory_space<vmem>>, vector<8x20xf32>
    %3 = arith.truncf %2 : vector<8x20xf32> to vector<8x20xbf16>
    %c0_3 = arith.constant 0 : index
    %c0_4 = arith.constant 0 : index
    %4 = vector.load %arg2[%c0_3, %c0_4] : memref<20x32xbf16, #tpu.memory_space<vmem>>, vector<20x32xbf16>
    %cst = arith.constant dense<0.000000e+00> : vector<8x32xf32>
    %5 = tpu.matmul %3, %4, %cst {dimension_numbers = #tpu.dot_dimension_numbers<[1], [0], [0], [1], [0, 0, 1, 1], [], []>} : vector<8x20xbf16>, vector<20x32xbf16>, vector<8x32xf32> -> vector<8x32xf32>
    %c0_5 = arith.constant 0 : index
    %c0_6 = arith.constant 0 : index
    %6 = vector.load %arg3[%c0_5, %c0_6] : memref<1x32xf32, #tpu.memory_space<vmem>>, vector<1x32xf32>
    %7 = vector.broadcast %6 : vector<1x32xf32> to vector<8x32xf32>
    %8 = arith.addf %5, %7 : vector<8x32xf32>
    %cst_7 = arith.constant 0.000000e+00 : f32
    %9 = vector.broadcast %cst_7 : f32 to vector<8x32xf32>
    %10 = arith.maximumf %8, %9 : vector<8x32xf32>
    %c0_8 = arith.constant 0 : index
    %c0_9 = arith.constant 0 : index
    %11 = vector.load %arg4[%c0_8, %c0_9] : memref<32x256xbf16, #tpu.memory_space<vmem>>, vector<32x256xbf16>
    %c0_10 = arith.constant 0 : index
    %c0_11 = arith.constant 0 : index
    %12 = vector.load %arg5[%c0_10, %c0_11] : memref<1x256xf32, #tpu.memory_space<vmem>>, vector<1x256xf32>
    %c0_12 = arith.constant 0 : index
    %c0_13 = arith.constant 0 : index
    %13 = vector.load %arg6[%c0_12, %c0_13] : memref<128x128xbf16, #tpu.memory_space<vmem>>, vector<128x128xbf16>
    %c0_14 = arith.constant 0 : index
    %c0_15 = arith.constant 0 : index
    %14 = vector.load %arg7[%c0_14, %c0_15] : memref<1x128xf32, #tpu.memory_space<vmem>>, vector<1x128xf32>
    %15 = arith.truncf %10 : vector<8x32xf32> to vector<8x32xbf16>
    %cst_16 = arith.constant dense<0.000000e+00> : vector<8x256xf32>
    %16 = tpu.matmul %15, %11, %cst_16 {dimension_numbers = #tpu.dot_dimension_numbers<[1], [0], [0], [1], [0, 0, 1, 1], [], []>} : vector<8x32xbf16>, vector<32x256xbf16>, vector<8x256xf32> -> vector<8x256xf32>
    %17 = vector.broadcast %12 : vector<1x256xf32> to vector<8x256xf32>
    %18 = arith.addf %16, %17 : vector<8x256xf32>
    %19 = vector.extract_strided_slice %18 {offsets = [0, 0], sizes = [8, 128], strides = [1, 1]} : vector<8x256xf32> to vector<8x128xf32>
    %20 = vector.extract_strided_slice %18 {offsets = [0, 128], sizes = [8, 128], strides = [1, 1]} : vector<8x256xf32> to vector<8x128xf32>
    %21 = vector.shape_cast %20 : vector<8x128xf32> to vector<8x1x128xf32>
    %22 = vector.shape_cast %19 : vector<8x128xf32> to vector<1x8x128xf32>
    %23 = vector.broadcast %21 : vector<8x1x128xf32> to vector<8x8x128xf32>
    %24 = vector.broadcast %22 : vector<1x8x128xf32> to vector<8x8x128xf32>
    %25 = arith.addf %23, %24 : vector<8x8x128xf32>
    %cst_17 = arith.constant 2.000000e-01 : f32
    %26 = vector.broadcast %cst_17 : f32 to vector<8x8x128xf32>
    %27 = arith.mulf %26, %25 : vector<8x8x128xf32>
    %28 = arith.maximumf %25, %27 : vector<8x8x128xf32>
    %29 = arith.truncf %28 : vector<8x8x128xf32> to vector<8x8x128xbf16>
    %30 = vector.shape_cast %29 : vector<8x8x128xbf16> to vector<64x128xbf16>
    %cst_18 = arith.constant dense<0.000000e+00> : vector<64x128xf32>
    %31 = tpu.matmul %30, %13, %cst_18 {dimension_numbers = #tpu.dot_dimension_numbers<[1], [0], [0], [1], [0, 0, 1, 1], [], []>} : vector<64x128xbf16>, vector<128x128xbf16>, vector<64x128xf32> -> vector<64x128xf32>
    %32 = vector.shape_cast %31 : vector<64x128xf32> to vector<8x8x128xf32>
    %33 = vector.shape_cast %1 : vector<8x8xf32> to vector<8x8x1xf32>
    %34 = vector.broadcast %33 : vector<8x8x1xf32> to vector<8x8x128xf32>
    %35 = arith.addf %32, %34 : vector<8x8x128xf32>
    %cst_19 = arith.constant dense<0xFF800000> : vector<8x128xf32>
    %36 = vector.multi_reduction <maximumf>, %35, %cst_19 [1] : vector<8x8x128xf32> to vector<8x128xf32>
    %37 = vector.shape_cast %36 : vector<8x128xf32> to vector<8x1x128xf32>
    %38 = vector.broadcast %37 : vector<8x1x128xf32> to vector<8x8x128xf32>
    %39 = arith.subf %35, %38 : vector<8x8x128xf32>
    %40 = math.exp %39 : vector<8x8x128xf32>
    %cst_20 = arith.constant dense<0.000000e+00> : vector<8x128xf32>
    %41 = vector.multi_reduction <add>, %40, %cst_20 [1] : vector<8x8x128xf32> to vector<8x128xf32>
    %42 = vector.shape_cast %41 : vector<8x128xf32> to vector<8x1x128xf32>
    %43 = tpu.reciprocal %42 {approx = true} : vector<8x1x128xf32> -> vector<8x1x128xf32>
    %44 = vector.broadcast %43 : vector<8x1x128xf32> to vector<8x8x128xf32>
    %45 = arith.mulf %40, %44 : vector<8x8x128xf32>
    %46 = vector.shape_cast %19 : vector<8x128xf32> to vector<1x8x128xf32>
    %47 = vector.broadcast %46 : vector<1x8x128xf32> to vector<8x8x128xf32>
    %48 = arith.mulf %45, %47 : vector<8x8x128xf32>
    %cst_21 = arith.constant dense<0.000000e+00> : vector<8x128xf32>
    %49 = vector.multi_reduction <add>, %48, %cst_21 [1] : vector<8x8x128xf32> to vector<8x128xf32>
    %50 = vector.broadcast %14 : vector<1x128xf32> to vector<8x128xf32>
    %51 = arith.addf %49, %50 : vector<8x128xf32>
    %cst_22 = arith.constant 0.000000e+00 : f32
    %52 = vector.broadcast %cst_22 : f32 to vector<8x128xf32>
    %53 = arith.maximumf %51, %52 : vector<8x128xf32>
    %c0_23 = arith.constant 0 : index
    %c0_24 = arith.constant 0 : index
    %54 = vector.load %arg8[%c0_23, %c0_24] : memref<128x256xbf16, #tpu.memory_space<vmem>>, vector<128x256xbf16>
    %c0_25 = arith.constant 0 : index
    %c0_26 = arith.constant 0 : index
    %55 = vector.load %arg9[%c0_25, %c0_26] : memref<1x256xf32, #tpu.memory_space<vmem>>, vector<1x256xf32>
    %c0_27 = arith.constant 0 : index
    %c0_28 = arith.constant 0 : index
    %56 = vector.load %arg10[%c0_27, %c0_28] : memref<128x128xbf16, #tpu.memory_space<vmem>>, vector<128x128xbf16>
    %c0_29 = arith.constant 0 : index
    %c0_30 = arith.constant 0 : index
    %57 = vector.load %arg11[%c0_29, %c0_30] : memref<1x128xf32, #tpu.memory_space<vmem>>, vector<1x128xf32>
    %58 = arith.truncf %53 : vector<8x128xf32> to vector<8x128xbf16>
    %cst_31 = arith.constant dense<0.000000e+00> : vector<8x256xf32>
    %59 = tpu.matmul %58, %54, %cst_31 {dimension_numbers = #tpu.dot_dimension_numbers<[1], [0], [0], [1], [0, 0, 1, 1], [], []>} : vector<8x128xbf16>, vector<128x256xbf16>, vector<8x256xf32> -> vector<8x256xf32>
    %60 = vector.broadcast %55 : vector<1x256xf32> to vector<8x256xf32>
    %61 = arith.addf %59, %60 : vector<8x256xf32>
    %62 = vector.extract_strided_slice %61 {offsets = [0, 0], sizes = [8, 128], strides = [1, 1]} : vector<8x256xf32> to vector<8x128xf32>
    %63 = vector.extract_strided_slice %61 {offsets = [0, 128], sizes = [8, 128], strides = [1, 1]} : vector<8x256xf32> to vector<8x128xf32>
    %64 = vector.shape_cast %63 : vector<8x128xf32> to vector<8x1x128xf32>
    %65 = vector.shape_cast %62 : vector<8x128xf32> to vector<1x8x128xf32>
    %66 = vector.broadcast %64 : vector<8x1x128xf32> to vector<8x8x128xf32>
    %67 = vector.broadcast %65 : vector<1x8x128xf32> to vector<8x8x128xf32>
    %68 = arith.addf %66, %67 : vector<8x8x128xf32>
    %cst_32 = arith.constant 2.000000e-01 : f32
    %69 = vector.broadcast %cst_32 : f32 to vector<8x8x128xf32>
    %70 = arith.mulf %69, %68 : vector<8x8x128xf32>
    %71 = arith.maximumf %68, %70 : vector<8x8x128xf32>
    %72 = arith.truncf %71 : vector<8x8x128xf32> to vector<8x8x128xbf16>
    %73 = vector.shape_cast %72 : vector<8x8x128xbf16> to vector<64x128xbf16>
    %cst_33 = arith.constant dense<0.000000e+00> : vector<64x128xf32>
    %74 = tpu.matmul %73, %56, %cst_33 {dimension_numbers = #tpu.dot_dimension_numbers<[1], [0], [0], [1], [0, 0, 1, 1], [], []>} : vector<64x128xbf16>, vector<128x128xbf16>, vector<64x128xf32> -> vector<64x128xf32>
    %75 = vector.shape_cast %74 : vector<64x128xf32> to vector<8x8x128xf32>
    %76 = vector.shape_cast %1 : vector<8x8xf32> to vector<8x8x1xf32>
    %77 = vector.broadcast %76 : vector<8x8x1xf32> to vector<8x8x128xf32>
    %78 = arith.addf %75, %77 : vector<8x8x128xf32>
    %cst_34 = arith.constant dense<0xFF800000> : vector<8x128xf32>
    %79 = vector.multi_reduction <maximumf>, %78, %cst_34 [1] : vector<8x8x128xf32> to vector<8x128xf32>
    %80 = vector.shape_cast %79 : vector<8x128xf32> to vector<8x1x128xf32>
    %81 = vector.broadcast %80 : vector<8x1x128xf32> to vector<8x8x128xf32>
    %82 = arith.subf %78, %81 : vector<8x8x128xf32>
    %83 = math.exp %82 : vector<8x8x128xf32>
    %cst_35 = arith.constant dense<0.000000e+00> : vector<8x128xf32>
    %84 = vector.multi_reduction <add>, %83, %cst_35 [1] : vector<8x8x128xf32> to vector<8x128xf32>
    %85 = vector.shape_cast %84 : vector<8x128xf32> to vector<8x1x128xf32>
    %86 = tpu.reciprocal %85 {approx = true} : vector<8x1x128xf32> -> vector<8x1x128xf32>
    %87 = vector.broadcast %86 : vector<8x1x128xf32> to vector<8x8x128xf32>
    %88 = arith.mulf %83, %87 : vector<8x8x128xf32>
    %89 = vector.shape_cast %62 : vector<8x128xf32> to vector<1x8x128xf32>
    %90 = vector.broadcast %89 : vector<1x8x128xf32> to vector<8x8x128xf32>
    %91 = arith.mulf %88, %90 : vector<8x8x128xf32>
    %cst_36 = arith.constant dense<0.000000e+00> : vector<8x128xf32>
    %92 = vector.multi_reduction <add>, %91, %cst_36 [1] : vector<8x8x128xf32> to vector<8x128xf32>
    %93 = vector.broadcast %57 : vector<1x128xf32> to vector<8x128xf32>
    %94 = arith.addf %92, %93 : vector<8x128xf32>
    %cst_37 = arith.constant 0.000000e+00 : f32
    %95 = vector.broadcast %cst_37 : f32 to vector<8x128xf32>
    %96 = arith.maximumf %94, %95 : vector<8x128xf32>
    %c0_38 = arith.constant 0 : index
    %c0_39 = arith.constant 0 : index
    %97 = vector.load %arg28[%c0_38, %c0_39] : memref<8x128xf32, #tpu.memory_space<vmem>>, vector<8x128xf32>
    tpu.vector_store %arg28[%c0_38, %c0_39], %96 {strides = array<i32>} : memref<8x128xf32, #tpu.memory_space<vmem>>, vector<8x128xf32>,
    %c0_40 = arith.constant 0 : index
    %c0_41 = arith.constant 0 : index
    %98 = vector.load %arg12[%c0_40, %c0_41] : memref<128x256xbf16, #tpu.memory_space<vmem>>, vector<128x256xbf16>
    %c0_42 = arith.constant 0 : index
    %c0_43 = arith.constant 0 : index
    %99 = vector.load %arg13[%c0_42, %c0_43] : memref<1x256xf32, #tpu.memory_space<vmem>>, vector<1x256xf32>
    %c0_44 = arith.constant 0 : index
    %c0_45 = arith.constant 0 : index
    %100 = vector.load %arg14[%c0_44, %c0_45] : memref<128x128xbf16, #tpu.memory_space<vmem>>, vector<128x128xbf16>
    %c0_46 = arith.constant 0 : index
    %c0_47 = arith.constant 0 : index
    %101 = vector.load %arg15[%c0_46, %c0_47] : memref<1x128xf32, #tpu.memory_space<vmem>>, vector<1x128xf32>
    %102 = arith.truncf %96 : vector<8x128xf32> to vector<8x128xbf16>
    %cst_48 = arith.constant dense<0.000000e+00> : vector<8x256xf32>
    %103 = tpu.matmul %102, %98, %cst_48 {dimension_numbers = #tpu.dot_dimension_numbers<[1], [0], [0], [1], [0, 0, 1, 1], [], []>} : vector<8x128xbf16>, vector<128x256xbf16>, vector<8x256xf32> -> vector<8x256xf32>
    %104 = vector.broadcast %99 : vector<1x256xf32> to vector<8x256xf32>
    %105 = arith.addf %103, %104 : vector<8x256xf32>
    %106 = vector.extract_strided_slice %105 {offsets = [0, 0], sizes = [8, 128], strides = [1, 1]} : vector<8x256xf32> to vector<8x128xf32>
    %107 = vector.extract_strided_slice %105 {offsets = [0, 128], sizes = [8, 128], strides = [1, 1]} : vector<8x256xf32> to vector<8x128xf32>
    %108 = vector.shape_cast %107 : vector<8x128xf32> to vector<8x1x128xf32>
    %109 = vector.shape_cast %106 : vector<8x128xf32> to vector<1x8x128xf32>
    %110 = vector.broadcast %108 : vector<8x1x128xf32> to vector<8x8x128xf32>
    %111 = vector.broadcast %109 : vector<1x8x128xf32> to vector<8x8x128xf32>
    %112 = arith.addf %110, %111 : vector<8x8x128xf32>
    %cst_49 = arith.constant 2.000000e-01 : f32
    %113 = vector.broadcast %cst_49 : f32 to vector<8x8x128xf32>
    %114 = arith.mulf %113, %112 : vector<8x8x128xf32>
    %115 = arith.maximumf %112, %114 : vector<8x8x128xf32>
    %116 = arith.truncf %115 : vector<8x8x128xf32> to vector<8x8x128xbf16>
    %117 = vector.shape_cast %116 : vector<8x8x128xbf16> to vector<64x128xbf16>
    %cst_50 = arith.constant dense<0.000000e+00> : vector<64x128xf32>
    %118 = tpu.matmul %117, %100, %cst_50 {dimension_numbers = #tpu.dot_dimension_numbers<[1], [0], [0], [1], [0, 0, 1, 1], [], []>} : vector<64x128xbf16>, vector<128x128xbf16>, vector<64x128xf32> -> vector<64x128xf32>
    %119 = vector.shape_cast %118 : vector<64x128xf32> to vector<8x8x128xf32>
    %120 = vector.shape_cast %1 : vector<8x8xf32> to vector<8x8x1xf32>
    %121 = vector.broadcast %120 : vector<8x8x1xf32> to vector<8x8x128xf32>
    %122 = arith.addf %119, %121 : vector<8x8x128xf32>
    %cst_51 = arith.constant dense<0xFF800000> : vector<8x128xf32>
    %123 = vector.multi_reduction <maximumf>, %122, %cst_51 [1] : vector<8x8x128xf32> to vector<8x128xf32>
    %124 = vector.shape_cast %123 : vector<8x128xf32> to vector<8x1x128xf32>
    %125 = vector.broadcast %124 : vector<8x1x128xf32> to vector<8x8x128xf32>
    %126 = arith.subf %122, %125 : vector<8x8x128xf32>
    %127 = math.exp %126 : vector<8x8x128xf32>
    %cst_52 = arith.constant dense<0.000000e+00> : vector<8x128xf32>
    %128 = vector.multi_reduction <add>, %127, %cst_52 [1] : vector<8x8x128xf32> to vector<8x128xf32>
    %129 = vector.shape_cast %128 : vector<8x128xf32> to vector<8x1x128xf32>
    %130 = tpu.reciprocal %129 {approx = true} : vector<8x1x128xf32> -> vector<8x1x128xf32>
    %131 = vector.broadcast %130 : vector<8x1x128xf32> to vector<8x8x128xf32>
    %132 = arith.mulf %127, %131 : vector<8x8x128xf32>
    %133 = vector.shape_cast %106 : vector<8x128xf32> to vector<1x8x128xf32>
    %134 = vector.broadcast %133 : vector<1x8x128xf32> to vector<8x8x128xf32>
    %135 = arith.mulf %132, %134 : vector<8x8x128xf32>
    %cst_53 = arith.constant dense<0.000000e+00> : vector<8x128xf32>
    %136 = vector.multi_reduction <add>, %135, %cst_53 [1] : vector<8x8x128xf32> to vector<8x128xf32>
    %137 = vector.broadcast %101 : vector<1x128xf32> to vector<8x128xf32>
    %138 = arith.addf %136, %137 : vector<8x128xf32>
    %cst_54 = arith.constant 0.000000e+00 : f32
    %139 = vector.broadcast %cst_54 : f32 to vector<8x128xf32>
    %140 = arith.maximumf %138, %139 : vector<8x128xf32>
    %c0_55 = arith.constant 0 : index
    %c0_56 = arith.constant 0 : index
    %141 = vector.load %arg29[%c0_55, %c0_56] : memref<8x128xf32, #tpu.memory_space<vmem>>, vector<8x128xf32>
    tpu.vector_store %arg29[%c0_55, %c0_56], %140 {strides = array<i32>} : memref<8x128xf32, #tpu.memory_space<vmem>>, vector<8x128xf32>,
    %c0_57 = arith.constant 0 : index
    %c0_58 = arith.constant 0 : index
    %142 = vector.load %arg17[%c0_57, %c0_58] : memref<16x16xbf16, #tpu.memory_space<vmem>>, vector<16x16xbf16>
    %143 = arith.extf %142 : vector<16x16xbf16> to vector<16x16xf32>
    %c0_59 = arith.constant 0 : index
    %c0_60 = arith.constant 0 : index
    %144 = vector.load %arg16[%c0_59, %c0_60] : memref<16x2xf32, #tpu.memory_space<vmem>>, vector<16x2xf32>
    %145 = arith.truncf %144 : vector<16x2xf32> to vector<16x2xbf16>
    %c0_61 = arith.constant 0 : index
    %c0_62 = arith.constant 0 : index
    %146 = vector.load %arg18[%c0_61, %c0_62] : memref<2x32xbf16, #tpu.memory_space<vmem>>, vector<2x32xbf16>
    %cst_63 = arith.constant dense<0.000000e+00> : vector<16x32xf32>
    %147 = tpu.matmul %145, %146, %cst_63 {dimension_numbers = #tpu.dot_dimension_numbers<[1], [0], [0], [1], [0, 0, 1, 1], [], []>} : vector<16x2xbf16>, vector<2x32xbf16>, vector<16x32xf32> -> vector<16x32xf32>
    %c0_64 = arith.constant 0 : index
    %c0_65 = arith.constant 0 : index
    %148 = vector.load %arg19[%c0_64, %c0_65] : memref<1x32xf32, #tpu.memory_space<vmem>>, vector<1x32xf32>
    %149 = vector.broadcast %148 : vector<1x32xf32> to vector<16x32xf32>
    %150 = arith.addf %147, %149 : vector<16x32xf32>
    %cst_66 = arith.constant 0.000000e+00 : f32
    %151 = vector.broadcast %cst_66 : f32 to vector<16x32xf32>
    %152 = arith.maximumf %150, %151 : vector<16x32xf32>
    %c0_67 = arith.constant 0 : index
    %c0_68 = arith.constant 0 : index
    %153 = vector.load %arg20[%c0_67, %c0_68] : memref<32x256xbf16, #tpu.memory_space<vmem>>, vector<32x256xbf16>
    %c0_69 = arith.constant 0 : index
    %c0_70 = arith.constant 0 : index
    %154 = vector.load %arg21[%c0_69, %c0_70] : memref<1x256xf32, #tpu.memory_space<vmem>>, vector<1x256xf32>
    %c0_71 = arith.constant 0 : index
    %c0_72 = arith.constant 0 : index
    %155 = vector.load %arg22[%c0_71, %c0_72] : memref<128x128xbf16, #tpu.memory_space<vmem>>, vector<128x128xbf16>
    %c0_73 = arith.constant 0 : index
    %c0_74 = arith.constant 0 : index
    %156 = vector.load %arg23[%c0_73, %c0_74] : memref<1x128xf32, #tpu.memory_space<vmem>>, vector<1x128xf32>
    %157 = arith.truncf %152 : vector<16x32xf32> to vector<16x32xbf16>
    %cst_75 = arith.constant dense<0.000000e+00> : vector<16x256xf32>
    %158 = tpu.matmul %157, %153, %cst_75 {dimension_numbers = #tpu.dot_dimension_numbers<[1], [0], [0], [1], [0, 0, 1, 1], [], []>} : vector<16x32xbf16>, vector<32x256xbf16>, vector<16x256xf32> -> vector<16x256xf32>
    %159 = vector.broadcast %154 : vector<1x256xf32> to vector<16x256xf32>
    %160 = arith.addf %158, %159 : vector<16x256xf32>
    %161 = vector.extract_strided_slice %160 {offsets = [0, 0], sizes = [16, 128], strides = [1, 1]} : vector<16x256xf32> to vector<16x128xf32>
    %162 = vector.extract_strided_slice %160 {offsets = [0, 128], sizes = [16, 128], strides = [1, 1]} : vector<16x256xf32> to vector<16x128xf32>
    %163 = vector.shape_cast %162 : vector<16x128xf32> to vector<16x1x128xf32>
    %164 = vector.shape_cast %161 : vector<16x128xf32> to vector<1x16x128xf32>
    %165 = vector.broadcast %163 : vector<16x1x128xf32> to vector<16x16x128xf32>
    %166 = vector.broadcast %164 : vector<1x16x128xf32> to vector<16x16x128xf32>
    %167 = arith.addf %165, %166 : vector<16x16x128xf32>
    %cst_76 = arith.constant 2.000000e-01 : f32
    %168 = vector.broadcast %cst_76 : f32 to vector<16x16x128xf32>
    %169 = arith.mulf %168, %167 : vector<16x16x128xf32>
    %170 = arith.maximumf %167, %169 : vector<16x16x128xf32>
    %171 = arith.truncf %170 : vector<16x16x128xf32> to vector<16x16x128xbf16>
    %172 = vector.shape_cast %171 : vector<16x16x128xbf16> to vector<256x128xbf16>
    %cst_77 = arith.constant dense<0.000000e+00> : vector<256x128xf32>
    %173 = tpu.matmul %172, %155, %cst_77 {dimension_numbers = #tpu.dot_dimension_numbers<[1], [0], [0], [1], [0, 0, 1, 1], [], []>} : vector<256x128xbf16>, vector<128x128xbf16>, vector<256x128xf32> -> vector<256x128xf32>
    %174 = vector.shape_cast %173 : vector<256x128xf32> to vector<16x16x128xf32>
    %175 = vector.shape_cast %143 : vector<16x16xf32> to vector<16x16x1xf32>
    %176 = vector.broadcast %175 : vector<16x16x1xf32> to vector<16x16x128xf32>
    %177 = arith.addf %174, %176 : vector<16x16x128xf32>
    %cst_78 = arith.constant dense<0xFF800000> : vector<16x128xf32>
    %178 = vector.multi_reduction <maximumf>, %177, %cst_78 [1] : vector<16x16x128xf32> to vector<16x128xf32>
    %179 = vector.shape_cast %178 : vector<16x128xf32> to vector<16x1x128xf32>
    %180 = vector.broadcast %179 : vector<16x1x128xf32> to vector<16x16x128xf32>
    %181 = arith.subf %177, %180 : vector<16x16x128xf32>
    %182 = math.exp %181 : vector<16x16x128xf32>
    %cst_79 = arith.constant dense<0.000000e+00> : vector<16x128xf32>
    %183 = vector.multi_reduction <add>, %182, %cst_79 [1] : vector<16x16x128xf32> to vector<16x128xf32>
    %184 = vector.shape_cast %183 : vector<16x128xf32> to vector<16x1x128xf32>
    %185 = tpu.reciprocal %184 {approx = true} : vector<16x1x128xf32> -> vector<16x1x128xf32>
    %186 = vector.broadcast %185 : vector<16x1x128xf32> to vector<16x16x128xf32>
    %187 = arith.mulf %182, %186 : vector<16x16x128xf32>
    %188 = vector.shape_cast %161 : vector<16x128xf32> to vector<1x16x128xf32>
    %189 = vector.broadcast %188 : vector<1x16x128xf32> to vector<16x16x128xf32>
    %190 = arith.mulf %187, %189 : vector<16x16x128xf32>
    %cst_80 = arith.constant dense<0.000000e+00> : vector<16x128xf32>
    %191 = vector.multi_reduction <add>, %190, %cst_80 [1] : vector<16x16x128xf32> to vector<16x128xf32>
    %192 = vector.broadcast %156 : vector<1x128xf32> to vector<16x128xf32>
    %193 = arith.addf %191, %192 : vector<16x128xf32>
    %cst_81 = arith.constant 0.000000e+00 : f32
    %194 = vector.broadcast %cst_81 : f32 to vector<16x128xf32>
    %195 = arith.maximumf %193, %194 : vector<16x128xf32>
    %c0_82 = arith.constant 0 : index
    %c0_83 = arith.constant 0 : index
    %196 = vector.load %arg24[%c0_82, %c0_83] : memref<128x256xbf16, #tpu.memory_space<vmem>>, vector<128x256xbf16>
    %c0_84 = arith.constant 0 : index
    %c0_85 = arith.constant 0 : index
    %197 = vector.load %arg25[%c0_84, %c0_85] : memref<1x256xf32, #tpu.memory_space<vmem>>, vector<1x256xf32>
    %c0_86 = arith.constant 0 : index
    %c0_87 = arith.constant 0 : index
    %198 = vector.load %arg26[%c0_86, %c0_87] : memref<128x128xbf16, #tpu.memory_space<vmem>>, vector<128x128xbf16>
    %c0_88 = arith.constant 0 : index
    %c0_89 = arith.constant 0 : index
    %199 = vector.load %arg27[%c0_88, %c0_89] : memref<1x128xf32, #tpu.memory_space<vmem>>, vector<1x128xf32>
    %200 = arith.truncf %195 : vector<16x128xf32> to vector<16x128xbf16>
    %cst_90 = arith.constant dense<0.000000e+00> : vector<16x256xf32>
    %201 = tpu.matmul %200, %196, %cst_90 {dimension_numbers = #tpu.dot_dimension_numbers<[1], [0], [0], [1], [0, 0, 1, 1], [], []>} : vector<16x128xbf16>, vector<128x256xbf16>, vector<16x256xf32> -> vector<16x256xf32>
    %202 = vector.broadcast %197 : vector<1x256xf32> to vector<16x256xf32>
    %203 = arith.addf %201, %202 : vector<16x256xf32>
    %204 = vector.extract_strided_slice %203 {offsets = [0, 0], sizes = [16, 128], strides = [1, 1]} : vector<16x256xf32> to vector<16x128xf32>
    %205 = vector.extract_strided_slice %203 {offsets = [0, 128], sizes = [16, 128], strides = [1, 1]} : vector<16x256xf32> to vector<16x128xf32>
    %206 = vector.shape_cast %205 : vector<16x128xf32> to vector<16x1x128xf32>
    %207 = vector.shape_cast %204 : vector<16x128xf32> to vector<1x16x128xf32>
    %208 = vector.broadcast %206 : vector<16x1x128xf32> to vector<16x16x128xf32>
    %209 = vector.broadcast %207 : vector<1x16x128xf32> to vector<16x16x128xf32>
    %210 = arith.addf %208, %209 : vector<16x16x128xf32>
    %cst_91 = arith.constant 2.000000e-01 : f32
    %211 = vector.broadcast %cst_91 : f32 to vector<16x16x128xf32>
    %212 = arith.mulf %211, %210 : vector<16x16x128xf32>
    %213 = arith.maximumf %210, %212 : vector<16x16x128xf32>
    %214 = arith.truncf %213 : vector<16x16x128xf32> to vector<16x16x128xbf16>
    %215 = vector.shape_cast %214 : vector<16x16x128xbf16> to vector<256x128xbf16>
    %cst_92 = arith.constant dense<0.000000e+00> : vector<256x128xf32>
    %216 = tpu.matmul %215, %198, %cst_92 {dimension_numbers = #tpu.dot_dimension_numbers<[1], [0], [0], [1], [0, 0, 1, 1], [], []>} : vector<256x128xbf16>, vector<128x128xbf16>, vector<256x128xf32> -> vector<256x128xf32>
    %217 = vector.shape_cast %216 : vector<256x128xf32> to vector<16x16x128xf32>
    %218 = vector.shape_cast %143 : vector<16x16xf32> to vector<16x16x1xf32>
    %219 = vector.broadcast %218 : vector<16x16x1xf32> to vector<16x16x128xf32>
    %220 = arith.addf %217, %219 : vector<16x16x128xf32>
    %cst_93 = arith.constant dense<0xFF800000> : vector<16x128xf32>
    %221 = vector.multi_reduction <maximumf>, %220, %cst_93 [1] : vector<16x16x128xf32> to vector<16x128xf32>
    %222 = vector.shape_cast %221 : vector<16x128xf32> to vector<16x1x128xf32>
    %223 = vector.broadcast %222 : vector<16x1x128xf32> to vector<16x16x128xf32>
    %224 = arith.subf %220, %223 : vector<16x16x128xf32>
    %225 = math.exp %224 : vector<16x16x128xf32>
    %cst_94 = arith.constant dense<0.000000e+00> : vector<16x128xf32>
    %226 = vector.multi_reduction <add>, %225, %cst_94 [1] : vector<16x16x128xf32> to vector<16x128xf32>
    %227 = vector.shape_cast %226 : vector<16x128xf32> to vector<16x1x128xf32>
    %228 = tpu.reciprocal %227 {approx = true} : vector<16x1x128xf32> -> vector<16x1x128xf32>
    %229 = vector.broadcast %228 : vector<16x1x128xf32> to vector<16x16x128xf32>
    %230 = arith.mulf %225, %229 : vector<16x16x128xf32>
    %231 = vector.shape_cast %204 : vector<16x128xf32> to vector<1x16x128xf32>
    %232 = vector.broadcast %231 : vector<1x16x128xf32> to vector<16x16x128xf32>
    %233 = arith.mulf %230, %232 : vector<16x16x128xf32>
    %cst_95 = arith.constant dense<0.000000e+00> : vector<16x128xf32>
    %234 = vector.multi_reduction <add>, %233, %cst_95 [1] : vector<16x16x128xf32> to vector<16x128xf32>
    %235 = vector.broadcast %199 : vector<1x128xf32> to vector<16x128xf32>
    %236 = arith.addf %234, %235 : vector<16x128xf32>
    %cst_96 = arith.constant 0.000000e+00 : f32
    %237 = vector.broadcast %cst_96 : f32 to vector<16x128xf32>
    %238 = arith.maximumf %236, %237 : vector<16x128xf32>
    %c0_97 = arith.constant 0 : index
    %c0_98 = arith.constant 0 : index
    %239 = vector.load %arg30[%c0_97, %c0_98] : memref<16x128xf32, #tpu.memory_space<vmem>>, vector<16x128xf32>
    tpu.vector_store %arg30[%c0_97, %c0_98], %238 {strides = array<i32>} : memref<16x128xf32, #tpu.memory_space<vmem>>, vector<16x128xf32>,
    return
  }
}

</mosaic_0001>

<llo_original>
// kernel: tpu_custom_call.1
$region0: #{tpu_custom_call.1}
  #allocation0 [shape = 'u32[]', space=smem, size = 0x4, offset = 0x4, fixed_abs, tag = 'smem constant byte address 0x4 - core index']
  #allocation1 [shape = 'u32[144,128]{1,0:T(1,128)}', space=vmem, size = 0x12000, scoped, tag = 'internal scratch']
  %s0 = inlined_call_operand.smem [shape: u32[31], index: -1, kind: input, shape index: {}]
  %s1 = sld [smem:[%s0]]
  %s2 = scalar_lea.smem %s0, 1
  %s3 = sld [smem:[%s2]]
  %s4 = scalar_lea.smem %s0, 2
  %s5 = sld [smem:[%s4]]
  %s6 = scalar_lea.smem %s0, 3
  %s7 = sld [smem:[%s6]]
  %s8 = scalar_lea.smem %s0, 4
  %s9 = sld [smem:[%s8]]
  %s10 = scalar_lea.smem %s0, 5
  %s11 = sld [smem:[%s10]]
  %s12 = scalar_lea.smem %s0, 6
  %s13 = sld [smem:[%s12]]
  %s14 = scalar_lea.smem %s0, 7
  %s15 = sld [smem:[%s14]]
  %s16 = scalar_lea.smem %s0, 8
  %s17 = sld [smem:[%s16]]
  %s18 = scalar_lea.smem %s0, 9
  %s19 = sld [smem:[%s18]]
  %s20 = scalar_lea.smem %s0, 10
  %s21 = sld [smem:[%s20]]
  %s22 = scalar_lea.smem %s0, 11
  %s23 = sld [smem:[%s22]]
  %s24 = scalar_lea.smem %s0, 12
  %s25 = sld [smem:[%s24]]
  %s26 = scalar_lea.smem %s0, 13
  %s27 = sld [smem:[%s26]]
  %s28 = scalar_lea.smem %s0, 14
  %s29 = sld [smem:[%s28]]
  %s30 = scalar_lea.smem %s0, 15
  %s31 = sld [smem:[%s30]]
  %s32 = scalar_lea.smem %s0, 16
  %s33 = sld [smem:[%s32]]
  %s34 = scalar_lea.smem %s0, 17
  %s35 = sld [smem:[%s34]]
  %s36 = scalar_lea.smem %s0, 18
  %s37 = sld [smem:[%s36]]
  %s38 = scalar_lea.smem %s0, 19
  %s39 = sld [smem:[%s38]]
  %s40 = scalar_lea.smem %s0, 20
  %s41 = sld [smem:[%s40]]
  %s42 = scalar_lea.smem %s0, 21
  %s43 = sld [smem:[%s42]]
  %s44 = scalar_lea.smem %s0, 22
  %s45 = sld [smem:[%s44]]
  %s46 = scalar_lea.smem %s0, 23
  %s47 = sld [smem:[%s46]]
  %s48 = scalar_lea.smem %s0, 24
  %s49 = sld [smem:[%s48]]
  %s50 = scalar_lea.smem %s0, 25
  %s51 = sld [smem:[%s50]]
  %s52 = scalar_lea.smem %s0, 26
  %s53 = sld [smem:[%s52]]
  %s54 = scalar_lea.smem %s0, 27
  %s55 = sld [smem:[%s54]]
  %s56 = scalar_lea.smem %s0, 28
  %s57 = sld [smem:[%s56]]
  %s58 = scalar_lea.smem %s0, 29
  %s59 = sld [smem:[%s58]]
  %s60 = scalar_lea.smem %s0, 30
  %s61 = sld [smem:[%s60]]
  %62 = xla_tuple %s57, %s59, %s61
  %s63 = sld [smem:[#allocation0]]
  $region210: #{tpu_custom_call.1} parent=0
    _
  %s65 = ssub.s32 1, %s63
  %s66 = scalar_select 0, %s65, %s63
  $region1: #{tpu_custom_call.1} parent=0
    #allocation2 [shape = 'u8[4096]{0}', space=vmem, size = 0x1000, scoped, tag = 'input window, operand 0, single buffered']
    #allocation3 [shape = 's32[1]{0}', space=sflag, size = 0x4, scoped, tag = 'scoped memory for tpu_custom_call.1']
    #allocation4 [shape = 's32[1]{0}', space=sflag, size = 0x4, scoped, tag = 'scoped memory for tpu_custom_call.1']
    #allocation5 [shape = 'u8[2048]{0}', space=vmem, size = 0x800, scoped, tag = 'input window, operand 1, single buffered']
    #allocation6 [shape = 's32[1]{0}', space=sflag, size = 0x4, scoped, tag = 'scoped memory for tpu_custom_call.1']
    #allocation7 [shape = 'u8[6144]{0}', space=vmem, size = 0x1800, scoped, tag = 'input window, operand 2, single buffered']
    #allocation8 [shape = 'u8[512]{0}', space=vmem, size = 0x400, scoped, tag = 'input window, operand 3, single buffered']
    #allocation9 [shape = 's32[1]{0}', space=sflag, size = 0x4, scoped, tag = 'scoped memory for tpu_custom_call.1']
    #allocation10 [shape = 'u8[16384]{0}', space=vmem, size = 0x4000, scoped, tag = 'input window, operand 4, single buffered']
    #allocation11 [shape = 'u8[32768]{0}', space=vmem, size = 0x8000, scoped, tag = 'input window, operand 6, single buffered']
    #allocation12 [shape = 's32[1]{0}', space=sflag, size = 0x4, scoped, tag = 'scoped memory for tpu_custom_call.1']
    #allocation13 [shape = 'u8[512]{0}', space=vmem, size = 0x400, scoped, tag = 'input window, operand 7, single buffered']
    #allocation14 [shape = 'u8[65536]{0}', space=vmem, size = 0x10000, scoped, tag = 'input window, operand 8, single buffered']
    #allocation15 [shape = 's32[1]{0}', space=sflag, size = 0x4, scoped, tag = 'scoped memory for tpu_custom_call.1']
    #allocation16 [shape = 'u8[1024]{0}', space=vmem, size = 0x400, scoped, tag = 'input window, operand 9, single buffered']
    #allocation17 [shape = 'u8[32768]{0}', space=vmem, size = 0x8000, scoped, tag = 'input window, operand 10, single buffered']
    #allocation18 [shape = 's32[1]{0}', space=sflag, size = 0x4, scoped, tag = 'scoped memory for tpu_custom_call.1']
    #allocation19 [shape = 'u8[512]{0}', space=vmem, size = 0x400, scoped, tag = 'input window, operand 11, single buffered']
    #allocation20 [shape = 'u8[65536]{0}', space=vmem, size = 0x10000, scoped, tag = 'input window, operand 12, single buffered']
    #allocation21 [shape = 's32[1]{0}', space=sflag, size = 0x4, scoped, tag = 'scoped memory for tpu_custom_call.1']
    #allocation22 [shape = 'u8[1024]{0}', space=vmem, size = 0x400, scoped, tag = 'input window, operand 13, single buffered']
    #allocation23 [shape = 'u8[512]{0}', space=vmem, size = 0x400, scoped, tag = 'input window, operand 15, single buffered']
    #allocation24 [shape = 's32[1]{0}', space=sflag, size = 0x4, scoped, tag = 'scoped memory for tpu_custom_call.1']
    #allocation25 [shape = 'u8[16384]{0}', space=vmem, size = 0x4000, scoped, tag = 'input window, operand 20, single buffered']
    #allocation26 [shape = 'u8[32768]{0}', space=vmem, size = 0x8000, scoped, tag = 'input window, operand 22, single buffered']
    #allocation27 [shape = 's32[1]{0}', space=sflag, size = 0x4, scoped, tag = 'scoped memory for tpu_custom_call.1']
    #allocation28 [shape = 'u8[65536]{0}', space=vmem, size = 0x10000, scoped, tag = 'input window, operand 24, single buffered']
    #allocation29 [shape = 'u8[32768]{0}', space=vmem, size = 0x8000, scoped, tag = 'input window, operand 26, single buffered']
    #allocation30 [shape = 's32[1]{0}', space=sflag, size = 0x4, scoped, tag = 'scoped memory for tpu_custom_call.1']
    #allocation31 [shape = 'u8[4096]{0}', space=vmem, size = 0x1000, scoped, tag = 'output window, operand 0, single buffered']
    #allocation32 [shape = 'u8[4096]{0}', space=vmem, size = 0x1000, scoped, tag = 'output window, operand 1, single buffered']
    #allocation33 [shape = 's32[1]{0}', space=sflag, size = 0x4, scoped, tag = 'scoped memory for tpu_custom_call.1']
    #allocation34 [shape = 'u8[8192]{0}', space=vmem, size = 0x2000, scoped, tag = 'output window, operand 2, single buffered']
    %67 = vsyncpa [#allocation3], 0
    %68 = vsyncpa [#allocation6], 0
    %69 = vsyncpa [#allocation9], 0
    %70 = vsyncpa [#allocation12], 0
    %71 = vsyncpa [#allocation15], 0
    %72 = vsyncpa [#allocation18], 0
    %73 = vsyncpa [#allocation21], 0
    %74 = vsyncpa [#allocation24], 0
    %75 = vsyncpa [#allocation27], 0
    %76 = vsyncpa [#allocation30], 0
    %77 = vsyncpa [#allocation4], 0
    %78 = vsyncpa [#allocation33], 0
    // Predicated region
    $region2: #{tpu_custom_call.1} parent=1 // pred_check
      _
    $region3: #{tpu_custom_call.1} parent=1 // pred_check_branch
      %80 = sbr.rel (0) target = $region5
    $region4: #{tpu_custom_call.1} parent=1 // pred_region
      %s82 = ssub.s32 128, 128
      %83 = vsyncadd [#allocation3], %s82
      %s85 = sshll.u32 [#allocation2], 4
      %s86 = int_to_ptr.vmem [resolvable:$true] %s85
      %88 = dma.hbm_to_vmem [thread:$0]  %s1, 128, %s86, [#allocation3]
    $region5: #{tpu_custom_call.1} parent=1 // pred_fallthru
      _
    // Predicated region
    $region6: #{tpu_custom_call.1} parent=1 // pred_check
      _
    $region7: #{tpu_custom_call.1} parent=1 // pred_check_branch
      %90 = sbr.rel (0) target = $region9
    $region8: #{tpu_custom_call.1} parent=1 // pred_region
      %s92 = ssub.s32 64, 64
      %93 = vsyncadd [#allocation6], %s92
      %s95 = sshll.u32 [#allocation5], 4
      %s96 = int_to_ptr.vmem [resolvable:$true] %s95
      %98 = dma.hbm_to_vmem [thread:$0]  %s3, 64, %s96, [#allocation6]
    $region9: #{tpu_custom_call.1} parent=1 // pred_fallthru
      _
    // Predicated region
    $region10: #{tpu_custom_call.1} parent=1 // pred_check
      _
    $region11: #{tpu_custom_call.1} parent=1 // pred_check_branch
      %100 = sbr.rel (0) target = $region13
    $region12: #{tpu_custom_call.1} parent=1 // pred_region
      %s102 = ssub.s32 192, 192
      %103 = vsyncadd [#allocation6], %s102
      %s104 = sshll.u32 [#allocation7], 4
      %s105 = int_to_ptr.vmem [resolvable:$true] %s104
      %110 = dma.hbm_to_vmem [thread:$0]  %s5, 192, %s105, [#allocation6], 64, 64, 4
    $region13: #{tpu_custom_call.1} parent=1 // pred_fallthru
      _
    // Predicated region
    $region14: #{tpu_custom_call.1} parent=1 // pred_check
      _
    $region15: #{tpu_custom_call.1} parent=1 // pred_check_branch
      %112 = sbr.rel (0) target = $region17
    $region16: #{tpu_custom_call.1} parent=1 // pred_region
      %s114 = ssub.s32 16, 16
      %115 = vsyncadd [#allocation9], %s114
      %s117 = sshll.u32 [#allocation8], 4
      %s118 = int_to_ptr.vmem [resolvable:$true] %s117
      %120 = dma.hbm_to_vmem [thread:$0]  %s7, 16, %s118, [#allocation9]
    $region17: #{tpu_custom_call.1} parent=1 // pred_fallthru
      _
    // Predicated region
    $region18: #{tpu_custom_call.1} parent=1 // pred_check
      _
    $region19: #{tpu_custom_call.1} parent=1 // pred_check_branch
      %122 = sbr.rel (0) target = $region21
    $region20: #{tpu_custom_call.1} parent=1 // pred_region
      %s124 = ssub.s32 512, 512
      %125 = vsyncadd [#allocation9], %s124
      %s126 = sshll.u32 [#allocation10], 4
      %s127 = int_to_ptr.vmem [resolvable:$true] %s126
      %132 = dma.hbm_to_vmem [thread:$0]  %s9, 512, %s127, [#allocation9], 128, 128, 8
    $region21: #{tpu_custom_call.1} parent=1 // pred_fallthru
      _
    // Predicated region
    $region22: #{tpu_custom_call.1} parent=1 // pred_check
      _
    $region23: #{tpu_custom_call.1} parent=1 // pred_check_branch
      %134 = sbr.rel (0) target = $region25
    $region24: #{tpu_custom_call.1} parent=1 // pred_region
      _
    $region25: #{tpu_custom_call.1} parent=1 // pred_fallthru
      _
    // Predicated region
    $region26: #{tpu_custom_call.1} parent=1 // pred_check
      _
    $region27: #{tpu_custom_call.1} parent=1 // pred_check_branch
      %136 = sbr.rel (0) target = $region29
    $region28: #{tpu_custom_call.1} parent=1 // pred_region
      %s138 = ssub.s32 1024, 1024
      %139 = vsyncadd [#allocation12], %s138
      %s140 = sshll.u32 [#allocation11], 4
      %s141 = int_to_ptr.vmem [resolvable:$true] %s140
      %146 = dma.hbm_to_vmem [thread:$0]  %s13, 1024, %s141, [#allocation12], 64, 64, 4
    $region29: #{tpu_custom_call.1} parent=1 // pred_fallthru
      _
    // Predicated region
    $region30: #{tpu_custom_call.1} parent=1 // pred_check
      _
    $region31: #{tpu_custom_call.1} parent=1 // pred_check_branch
      %148 = sbr.rel (0) target = $region33
    $region32: #{tpu_custom_call.1} parent=1 // pred_region
      %s150 = ssub.s32 16, 16
      %151 = vsyncadd [#allocation12], %s150
      %s153 = sshll.u32 [#allocation13], 4
      %s154 = int_to_ptr.vmem [resolvable:$true] %s153
      %156 = dma.hbm_to_vmem [thread:$0]  %s15, 16, %s154, [#allocation12]
    $region33: #{tpu_custom_call.1} parent=1 // pred_fallthru
      _
    // Predicated region
    $region34: #{tpu_custom_call.1} parent=1 // pred_check
      _
    $region35: #{tpu_custom_call.1} parent=1 // pred_check_branch
      %158 = sbr.rel (0) target = $region37
    $region36: #{tpu_custom_call.1} parent=1 // pred_region
      %s160 = ssub.s32 2048, 2048
      %161 = vsyncadd [#allocation15], %s160
      %s162 = sshll.u32 [#allocation14], 4
      %s163 = int_to_ptr.vmem [resolvable:$true] %s162
      %168 = dma.hbm_to_vmem [thread:$0]  %s17, 2048, %s163, [#allocation15], 128, 128, 8
    $region37: #{tpu_custom_call.1} parent=1 // pred_fallthru
      _
    // Predicated region
    $region38: #{tpu_custom_call.1} parent=1 // pred_check
      _
    $region39: #{tpu_custom_call.1} parent=1 // pred_check_branch
      %170 = sbr.rel (0) target = $region41
    $region40: #{tpu_custom_call.1} parent=1 // pred_region
      %s172 = ssub.s32 32, 32
      %173 = vsyncadd [#allocation15], %s172
      %s175 = sshll.u32 [#allocation16], 4
      %s176 = int_to_ptr.vmem [resolvable:$true] %s175
      %178 = dma.hbm_to_vmem [thread:$0]  %s19, 32, %s176, [#allocation15]
    $region41: #{tpu_custom_call.1} parent=1 // pred_fallthru
      _
    // Predicated region
    $region42: #{tpu_custom_call.1} parent=1 // pred_check
      _
    $region43: #{tpu_custom_call.1} parent=1 // pred_check_branch
      %180 = sbr.rel (0) target = $region45
    $region44: #{tpu_custom_call.1} parent=1 // pred_region
      %s182 = ssub.s32 1024, 1024
      %183 = vsyncadd [#allocation18], %s182
      %s184 = sshll.u32 [#allocation17], 4
      %s185 = int_to_ptr.vmem [resolvable:$true] %s184
      %190 = dma.hbm_to_vmem [thread:$0]  %s21, 1024, %s185, [#allocation18], 64, 64, 4
    $region45: #{tpu_custom_call.1} parent=1 // pred_fallthru
      _
    // Predicated region
    $region46: #{tpu_custom_call.1} parent=1 // pred_check
      _
    $region47: #{tpu_custom_call.1} parent=1 // pred_check_branch
      %192 = sbr.rel (0) target = $region49
    $region48: #{tpu_custom_call.1} parent=1 // pred_region
      %s194 = ssub.s32 16, 16
      %195 = vsyncadd [#allocation18], %s194
      %s197 = sshll.u32 [#allocation19], 4
      %s198 = int_to_ptr.vmem [resolvable:$true] %s197
      %200 = dma.hbm_to_vmem [thread:$0]  %s23, 16, %s198, [#allocation18]
    $region49: #{tpu_custom_call.1} parent=1 // pred_fallthru
      _
    // Predicated region
    $region50: #{tpu_custom_call.1} parent=1 // pred_check
      _
    $region51: #{tpu_custom_call.1} parent=1 // pred_check_branch
      %202 = sbr.rel (0) target = $region53
    $region52: #{tpu_custom_call.1} parent=1 // pred_region
      %s204 = ssub.s32 2048, 2048
      %205 = vsyncadd [#allocation21], %s204
      %s206 = sshll.u32 [#allocation20], 4
      %s207 = int_to_ptr.vmem [resolvable:$true] %s206
      %212 = dma.hbm_to_vmem [thread:$0]  %s25, 2048, %s207, [#allocation21], 128, 128, 8
    $region53: #{tpu_custom_call.1} parent=1 // pred_fallthru
      _
    // Predicated region
    $region54: #{tpu_custom_call.1} parent=1 // pred_check
      _
    $region55: #{tpu_custom_call.1} parent=1 // pred_check_branch
      %214 = sbr.rel (0) target = $region57
    $region56: #{tpu_custom_call.1} parent=1 // pred_region
      %s216 = ssub.s32 32, 32
      %217 = vsyncadd [#allocation21], %s216
      %s219 = sshll.u32 [#allocation22], 4
      %s220 = int_to_ptr.vmem [resolvable:$true] %s219
      %222 = dma.hbm_to_vmem [thread:$0]  %s27, 32, %s220, [#allocation21]
    $region57: #{tpu_custom_call.1} parent=1 // pred_fallthru
      _
    // Predicated region
    $region58: #{tpu_custom_call.1} parent=1 // pred_check
      _
    $region59: #{tpu_custom_call.1} parent=1 // pred_check_branch
      %224 = sbr.rel (0) target = $region61
    $region60: #{tpu_custom_call.1} parent=1 // pred_region
      _
    $region61: #{tpu_custom_call.1} parent=1 // pred_fallthru
      _
    // Predicated region
    $region62: #{tpu_custom_call.1} parent=1 // pred_check
      _
    $region63: #{tpu_custom_call.1} parent=1 // pred_check_branch
      %226 = sbr.rel (0) target = $region65
    $region64: #{tpu_custom_call.1} parent=1 // pred_region
      %s228 = ssub.s32 16, 16
      %229 = vsyncadd [#allocation24], %s228
      %s231 = sshll.u32 [#allocation23], 4
      %s232 = int_to_ptr.vmem [resolvable:$true] %s231
      %234 = dma.hbm_to_vmem [thread:$0]  %s31, 16, %s232, [#allocation24]
    $region65: #{tpu_custom_call.1} parent=1 // pred_fallthru
      _
    // Predicated region
    $region66: #{tpu_custom_call.1} parent=1 // pred_check
      _
    $region67: #{tpu_custom_call.1} parent=1 // pred_check_branch
      %236 = sbr.rel (0) target = $region69
    $region68: #{tpu_custom_call.1} parent=1 // pred_region
      _
    $region69: #{tpu_custom_call.1} parent=1 // pred_fallthru
      _
    // Predicated region
    $region70: #{tpu_custom_call.1} parent=1 // pred_check
      _
    $region71: #{tpu_custom_call.1} parent=1 // pred_check_branch
      %238 = sbr.rel (0) target = $region73
    $region72: #{tpu_custom_call.1} parent=1 // pred_region
      _
    $region73: #{tpu_custom_call.1} parent=1 // pred_fallthru
      _
    // Predicated region
    $region74: #{tpu_custom_call.1} parent=1 // pred_check
      _
    $region75: #{tpu_custom_call.1} parent=1 // pred_check_branch
      %240 = sbr.rel (0) target = $region77
    $region76: #{tpu_custom_call.1} parent=1 // pred_region
      _
    $region77: #{tpu_custom_call.1} parent=1 // pred_fallthru
      _
    // Predicated region
    $region78: #{tpu_custom_call.1} parent=1 // pred_check
      _
    $region79: #{tpu_custom_call.1} parent=1 // pred_check_branch
      %242 = sbr.rel (0) target = $region81
    $region80: #{tpu_custom_call.1} parent=1 // pred_region
      _
    $region81: #{tpu_custom_call.1} parent=1 // pred_fallthru
      _
    // Predicated region
    $region82: #{tpu_custom_call.1} parent=1 // pred_check
      _
    $region83: #{tpu_custom_call.1} parent=1 // pred_check_branch
      %244 = sbr.rel (0) target = $region85
    $region84: #{tpu_custom_call.1} parent=1 // pred_region
      %s246 = ssub.s32 512, 512
      %247 = vsyncadd [#allocation24], %s246
      %s248 = sshll.u32 [#allocation25], 4
      %s249 = int_to_ptr.vmem [resolvable:$true] %s248
      %254 = dma.hbm_to_vmem [thread:$0]  %s41, 512, %s249, [#allocation24], 128, 128, 8
    $region85: #{tpu_custom_call.1} parent=1 // pred_fallthru
      _
    // Predicated region
    $region86: #{tpu_custom_call.1} parent=1 // pred_check
      _
    $region87: #{tpu_custom_call.1} parent=1 // pred_check_branch
      %256 = sbr.rel (0) target = $region89
    $region88: #{tpu_custom_call.1} parent=1 // pred_region
      _
    $region89: #{tpu_custom_call.1} parent=1 // pred_fallthru
      _
    // Predicated region
    $region90: #{tpu_custom_call.1} parent=1 // pred_check
      _
    $region91: #{tpu_custom_call.1} parent=1 // pred_check_branch
      %258 = sbr.rel (0) target = $region93
    $region92: #{tpu_custom_call.1} parent=1 // pred_region
      %s260 = ssub.s32 1024, 1024
      %261 = vsyncadd [#allocation27], %s260
      %s262 = sshll.u32 [#allocation26], 4
      %s263 = int_to_ptr.vmem [resolvable:$true] %s262
      %268 = dma.hbm_to_vmem [thread:$0]  %s45, 1024, %s263, [#allocation27], 64, 64, 4
    $region93: #{tpu_custom_call.1} parent=1 // pred_fallthru
      _
    // Predicated region
    $region94: #{tpu_custom_call.1} parent=1 // pred_check
      _
    $region95: #{tpu_custom_call.1} parent=1 // pred_check_branch
      %270 = sbr.rel (0) target = $region97
    $region96: #{tpu_custom_call.1} parent=1 // pred_region
      _
    $region97: #{tpu_custom_call.1} parent=1 // pred_fallthru
      _
    // Predicated region
    $region98: #{tpu_custom_call.1} parent=1 // pred_check
      _
    $region99: #{tpu_custom_call.1} parent=1 // pred_check_branch
      %272 = sbr.rel (0) target = $region101
    $region100: #{tpu_custom_call.1} parent=1 // pred_region
      %s274 = ssub.s32 2048, 2048
      %275 = vsyncadd [#allocation27], %s274
      %s276 = sshll.u32 [#allocation28], 4
      %s277 = int_to_ptr.vmem [resolvable:$true] %s276
      %282 = dma.hbm_to_vmem [thread:$0]  %s49, 2048, %s277, [#allocation27], 128, 128, 8
    $region101: #{tpu_custom_call.1} parent=1 // pred_fallthru
      _
    // Predicated region
    $region102: #{tpu_custom_call.1} parent=1 // pred_check
      _
    $region103: #{tpu_custom_call.1} parent=1 // pred_check_branch
      %284 = sbr.rel (0) target = $region105
    $region104: #{tpu_custom_call.1} parent=1 // pred_region
      _
    $region105: #{tpu_custom_call.1} parent=1 // pred_fallthru
      _
    // Predicated region
    $region106: #{tpu_custom_call.1} parent=1 // pred_check
      _
    $region107: #{tpu_custom_call.1} parent=1 // pred_check_branch
      %286 = sbr.rel (0) target = $region109
    $region108: #{tpu_custom_call.1} parent=1 // pred_region
      %s288 = ssub.s32 1024, 1024
      %289 = vsyncadd [#allocation30], %s288
      %s290 = sshll.u32 [#allocation29], 4
      %s291 = int_to_ptr.vmem [resolvable:$true] %s290
      %296 = dma.hbm_to_vmem [thread:$0]  %s53, 1024, %s291, [#allocation30], 64, 64, 4
    $region109: #{tpu_custom_call.1} parent=1 // pred_fallthru
      _
    // Predicated region
    $region110: #{tpu_custom_call.1} parent=1 // pred_check
      _
    $region111: #{tpu_custom_call.1} parent=1 // pred_check_branch
      %298 = sbr.rel (0) target = $region113
    $region112: #{tpu_custom_call.1} parent=1 // pred_region
      _
    $region113: #{tpu_custom_call.1} parent=1 // pred_fallthru
      _
    // Predicated region
    $region114: #{tpu_custom_call.1} parent=1 // pred_check
      _
    $region115: #{tpu_custom_call.1} parent=1 // pred_check_branch
      %300 = sbr.rel (0) target = $region117
    $region116: #{tpu_custom_call.1} parent=1 // pred_region
      %301 = dma.done [#allocation3], 128
    $region117: #{tpu_custom_call.1} parent=1 // pred_fallthru
      _
    // Predicated region
    $region118: #{tpu_custom_call.1} parent=1 // pred_check
      _
    $region119: #{tpu_custom_call.1} parent=1 // pred_check_branch
      %303 = sbr.rel (0) target = $region121
    $region120: #{tpu_custom_call.1} parent=1 // pred_region
      %304 = dma.done [#allocation6], 64
    $region121: #{tpu_custom_call.1} parent=1 // pred_fallthru
      _
    // Predicated region
    $region122: #{tpu_custom_call.1} parent=1 // pred_check
      _
    $region123: #{tpu_custom_call.1} parent=1 // pred_check_branch
      %306 = sbr.rel (0) target = $region125
    $region124: #{tpu_custom_call.1} parent=1 // pred_region
      %307 = dma.done [#allocation6], 192
    $region125: #{tpu_custom_call.1} parent=1 // pred_fallthru
      _
    // Predicated region
    $region126: #{tpu_custom_call.1} parent=1 // pred_check
      _
    $region127: #{tpu_custom_call.1} parent=1 // pred_check_branch
      %309 = sbr.rel (0) target = $region129
    $region128: #{tpu_custom_call.1} parent=1 // pred_region
      %310 = dma.done [#allocation9], 16
    $region129: #{tpu_custom_call.1} parent=1 // pred_fallthru
      _
    // Predicated region
    $region130: #{tpu_custom_call.1} parent=1 // pred_check
      _
    $region131: #{tpu_custom_call.1} parent=1 // pred_check_branch
      %312 = sbr.rel (0) target = $region133
    $region132: #{tpu_custom_call.1} parent=1 // pred_region
      %313 = dma.done [#allocation9], 512
    $region133: #{tpu_custom_call.1} parent=1 // pred_fallthru
      _
    // Predicated region
    $region134: #{tpu_custom_call.1} parent=1 // pred_check
      _
    $region135: #{tpu_custom_call.1} parent=1 // pred_check_branch
      %315 = sbr.rel (0) target = $region137
    $region136: #{tpu_custom_call.1} parent=1 // pred_region
      %316 = dma.done [#allocation12], 1024
    $region137: #{tpu_custom_call.1} parent=1 // pred_fallthru
      _
    // Predicated region
    $region138: #{tpu_custom_call.1} parent=1 // pred_check
      _
    $region139: #{tpu_custom_call.1} parent=1 // pred_check_branch
      %318 = sbr.rel (0) target = $region141
    $region140: #{tpu_custom_call.1} parent=1 // pred_region
      %319 = dma.done [#allocation12], 16
    $region141: #{tpu_custom_call.1} parent=1 // pred_fallthru
      _
    // Predicated region
    $region142: #{tpu_custom_call.1} parent=1 // pred_check
      _
    $region143: #{tpu_custom_call.1} parent=1 // pred_check_branch
      %321 = sbr.rel (0) target = $region145
    $region144: #{tpu_custom_call.1} parent=1 // pred_region
      %322 = dma.done [#allocation15], 2048
    $region145: #{tpu_custom_call.1} parent=1 // pred_fallthru
      _
    // Predicated region
    $region146: #{tpu_custom_call.1} parent=1 // pred_check
      _
    $region147: #{tpu_custom_call.1} parent=1 // pred_check_branch
      %324 = sbr.rel (0) target = $region149
    $region148: #{tpu_custom_call.1} parent=1 // pred_region
      %325 = dma.done [#allocation15], 32
    $region149: #{tpu_custom_call.1} parent=1 // pred_fallthru
      _
    // Predicated region
    $region150: #{tpu_custom_call.1} parent=1 // pred_check
      _
    $region151: #{tpu_custom_call.1} parent=1 // pred_check_branch
      %327 = sbr.rel (0) target = $region153
    $region152: #{tpu_custom_call.1} parent=1 // pred_region
      %328 = dma.done [#allocation18], 1024
    $region153: #{tpu_custom_call.1} parent=1 // pred_fallthru
      _
    // Predicated region
    $region154: #{tpu_custom_call.1} parent=1 // pred_check
      _
    $region155: #{tpu_custom_call.1} parent=1 // pred_check_branch
      %330 = sbr.rel (0) target = $region157
    $region156: #{tpu_custom_call.1} parent=1 // pred_region
      %331 = dma.done [#allocation18], 16
    $region157: #{tpu_custom_call.1} parent=1 // pred_fallthru
      _
    // Predicated region
    $region158: #{tpu_custom_call.1} parent=1 // pred_check
      _
    $region159: #{tpu_custom_call.1} parent=1 // pred_check_branch
      %333 = sbr.rel (0) target = $region161
    $region160: #{tpu_custom_call.1} parent=1 // pred_region
      %334 = dma.done [#allocation21], 2048
    $region161: #{tpu_custom_call.1} parent=1 // pred_fallthru
      _
    // Predicated region
    $region162: #{tpu_custom_call.1} parent=1 // pred_check
      _
    $region163: #{tpu_custom_call.1} parent=1 // pred_check_branch
      %336 = sbr.rel (0) target = $region165
    $region164: #{tpu_custom_call.1} parent=1 // pred_region
      %337 = dma.done [#allocation21], 32
    $region165: #{tpu_custom_call.1} parent=1 // pred_fallthru
      _
    // Predicated region
    $region166: #{tpu_custom_call.1} parent=1 // pred_check
      _
    $region167: #{tpu_custom_call.1} parent=1 // pred_check_branch
      %339 = sbr.rel (0) target = $region169
    $region168: #{tpu_custom_call.1} parent=1 // pred_region
      %340 = dma.done [#allocation24], 16
    $region169: #{tpu_custom_call.1} parent=1 // pred_fallthru
      _
    // Predicated region
    $region170: #{tpu_custom_call.1} parent=1 // pred_check
      _
    $region171: #{tpu_custom_call.1} parent=1 // pred_check_branch
      %342 = sbr.rel (0) target = $region173
    $region172: #{tpu_custom_call.1} parent=1 // pred_region
      %343 = dma.done [#allocation24], 512
    $region173: #{tpu_custom_call.1} parent=1 // pred_fallthru
      _
    // Predicated region
    $region174: #{tpu_custom_call.1} parent=1 // pred_check
      _
    $region175: #{tpu_custom_call.1} parent=1 // pred_check_branch
      %345 = sbr.rel (0) target = $region177
    $region176: #{tpu_custom_call.1} parent=1 // pred_region
      %346 = dma.done [#allocation27], 1024
    $region177: #{tpu_custom_call.1} parent=1 // pred_fallthru
      _
    // Predicated region
    $region178: #{tpu_custom_call.1} parent=1 // pred_check
      _
    $region179: #{tpu_custom_call.1} parent=1 // pred_check_branch
      %348 = sbr.rel (0) target = $region181
    $region180: #{tpu_custom_call.1} parent=1 // pred_region
      %349 = dma.done [#allocation27], 2048
    $region181: #{tpu_custom_call.1} parent=1 // pred_fallthru
      _
    // Predicated region
    $region182: #{tpu_custom_call.1} parent=1 // pred_check
      _
    $region183: #{tpu_custom_call.1} parent=1 // pred_check_branch
      %351 = sbr.rel (0) target = $region185
    $region184: #{tpu_custom_call.1} parent=1 // pred_region
      %352 = dma.done [#allocation30], 1024
    $region185: #{tpu_custom_call.1} parent=1 // pred_fallthru
      _
    %v354 = vld [vmem:[#allocation5] sm:$0xf]
    %v355 = vunpack.c.l.bf16 %v354
    %v356 = vld [vmem:[#allocation2] sm:$0xff]
    %v357 = vpack.c.bf16 %v356, %v356
    %v358 = vld [vmem:[#allocation7] sm:$0xf]
    %v359 = vld [vmem:[#allocation7 + $0x4] sm:$0xf]
    %v360 = vld [vmem:[#allocation7 + $0x8] sm:$0x3]
    %v361 = vld [vmem:[#allocation8] sm:$0x1]
    %v363 = vlaneseq
    %v364 = vshrl.u32 %v363, 7
    %v365 = vsub.s32 0, %v364
    %v366 = vrot.slane %v361, %v365
    %v371 = vunpack.c.l.b16 %v358
    %v372 = vunpack.c.l.b16 %v359
    %v373 = vunpack.c.l.b16 %v360
    %v374 = vpack.c.b16 %v372, %v371
    %v375 = vpack.c.b16 %v373, %v373
    %vm377 = vcmask 162816
    %v379 = vsel %vm377, %v357, 0
    %vm381 = vcmask 1041408
    %v383 = vsel %vm381, %v375, 0
    %385 = vmatprep.subr.bf16.mxu0 0
    %386 = vmatpush1.bf16.msra.mxu0 %v374
    %387 = vmatprep.subr.bf16.mxu0 0
    %388 = vmatpush1.bf16.msra.mxu0 %v383
    %389 = vmatprep.subr.bf16.mxu0 0
    %390 = vmatpush1.bf16.msra.mxu0 0
    %391 = vmatprep.subr.bf16.mxu0 0
    %392 = vmatpush1.bf16.msra.mxu0 0
    %393 = vmatprep.subr.bf16.mxu0 0
    %394 = vmatpush1.bf16.msra.mxu0 0
    %395 = vmatprep.subr.bf16.mxu0 0
    %396 = vmatpush1.bf16.msra.mxu0 0
    %397 = vmatprep.subr.bf16.mxu0 0
    %398 = vmatpush1.bf16.msra.mxu0 0
    %399 = vmatprep.subr.bf16.mxu0 0
    %400 = vmatpush1.bf16.msra.mxu0 0
    %401 = vmatprep.subr.bf16.mxu0 0
    %402 = vmatpush1.bf16.msra.mxu0 0
    %403 = vmatprep.subr.bf16.mxu0 0
    %404 = vmatpush1.bf16.msra.mxu0 0
    %405 = vmatprep.subr.bf16.mxu0 0
    %406 = vmatpush1.bf16.msra.mxu0 0
    %407 = vmatprep.subr.bf16.mxu0 0
    %408 = vmatpush1.bf16.msra.mxu0 0
    %409 = vmatprep.subr.bf16.mxu0 0
    %410 = vmatpush1.bf16.msra.mxu0 0
    %411 = vmatprep.subr.bf16.mxu0 0
    %412 = vmatpush1.bf16.msra.mxu0 0
    %413 = vmatprep.subr.bf16.mxu0 0
    %414 = vmatpush1.bf16.msra.mxu0 0
    %415 = vmatprep.subr.bf16.mxu0 0
    %416 = vmatpush1.bf16.msra.mxu0 0
    %417 = vmatprep.mubr.bf16.mxu0 0
    %418 = vmatmul.mubr.bf16.gmra.mrb[0].mxu0 %v379
    %v419 = vpop.f32.mrb[0].mxu0
    %v420 = vadd.f32 %v366, %v419
    %v421 = vpop.f32.mrb[0].mxu0
    %v422 = vpop.f32.mrb[0].mxu0
    %v423 = vpop.f32.mrb[0].mxu0
    %424 = vdwg.mxu0
    %v425 = vmax.f32 %v420, 0.0
    %v426 = vld [vmem:[#allocation10] sm:$0xff]
    %v427 = vld [vmem:[#allocation10 + $0x8] sm:$0xff]
    %v428 = vld [vmem:[#allocation10 + $0x10] sm:$0xff]
    %v429 = vld [vmem:[#allocation10 + $0x18] sm:$0xff]
    %v430 = vld [vmem:[%s11] sm:$0x3]
    %v431 = vld [vmem:[#allocation11] sm:$0xf]
    %v432 = vld [vmem:[#allocation11 + $0x4] sm:$0xf]
    %v433 = vld [vmem:[#allocation11 + $0x8] sm:$0xf]
    %v434 = vld [vmem:[#allocation11 + $0xc] sm:$0xf]
    %v435 = vld [vmem:[#allocation11 + $0x10] sm:$0xf]
    %v436 = vld [vmem:[#allocation11 + $0x14] sm:$0xf]
    %v437 = vld [vmem:[#allocation11 + $0x18] sm:$0xf]
    %v438 = vld [vmem:[#allocation11 + $0x1c] sm:$0xf]
    %v439 = vld [vmem:[#allocation11 + $0x20] sm:$0xf]
    %v440 = vld [vmem:[#allocation11 + $0x24] sm:$0xf]
    %v441 = vld [vmem:[#allocation11 + $0x28] sm:$0xf]
    %v442 = vld [vmem:[#allocation11 + $0x2c] sm:$0xf]
    %v443 = vld [vmem:[#allocation11 + $0x30] sm:$0xf]
    %v444 = vld [vmem:[#allocation11 + $0x34] sm:$0xf]
    %v445 = vld [vmem:[#allocation11 + $0x38] sm:$0xf]
    %v446 = vld [vmem:[#allocation11 + $0x3c] sm:$0xf]
    %v447 = vld [vmem:[#allocation13] sm:$0x1]
    %v448 = vpack.c.bf16 %v425, %v425
    %v450 = vlaneseq
    %v451 = vshrl.u32 %v450, 7
    %v452 = vsub.s32 0, %v451
    %v453 = vrot.slane %v430, %v452
    %v454 = vlaneseq
    %v455 = vshrl.u32 %v454, 7
    %v456 = vsub.s32 1, %v455
    %v457 = vrot.slane %v430, %v456
    %v464 = vunpack.c.l.b16 %v426
    %v465 = vunpack.c.h.b16 %v426
    %v466 = vunpack.c.l.b16 %v427
    %v467 = vunpack.c.h.b16 %v427
    %v468 = vunpack.c.l.b16 %v428
    %v469 = vunpack.c.h.b16 %v428
    %v470 = vunpack.c.l.b16 %v429
    %v471 = vunpack.c.h.b16 %v429
    %v472 = vpack.c.b16 %v466, %v464
    %v473 = vpack.c.b16 %v467, %v465
    %v474 = vpack.c.b16 %v470, %v468
    %v475 = vpack.c.b16 %v471, %v469
    %vm480 = vcmask 261120
    %v482 = vsel %vm480, %v448, 0
    %484 = vmatprep.subr.bf16.mxu0 %v473
    %485 = vmatpush1.bf16.msra.mxu0 %v472
    %486 = vmatprep.subr.bf16.mxu0 %v475
    %487 = vmatpush1.bf16.msra.mxu0 %v474
    %488 = vmatprep.subr.bf16.mxu0 0
    %489 = vmatpush1.bf16.msra.mxu0 0
    %490 = vmatprep.subr.bf16.mxu0 0
    %491 = vmatpush1.bf16.msra.mxu0 0
    %492 = vmatprep.subr.bf16.mxu0 0
    %493 = vmatpush1.bf16.msra.mxu0 0
    %494 = vmatprep.subr.bf16.mxu0 0
    %495 = vmatpush1.bf16.msra.mxu0 0
    %496 = vmatprep.subr.bf16.mxu0 0
    %497 = vmatpush1.bf16.msra.mxu0 0
    %498 = vmatprep.subr.bf16.mxu0 0
    %499 = vmatpush1.bf16.msra.mxu0 0
    %500 = vmatprep.subr.bf16.mxu0 0
    %501 = vmatpush1.bf16.msra.mxu0 0
    %502 = vmatprep.subr.bf16.mxu0 0
    %503 = vmatpush1.bf16.msra.mxu0 0
    %504 = vmatprep.subr.bf16.mxu0 0
    %505 = vmatpush1.bf16.msra.mxu0 0
    %506 = vmatprep.subr.bf16.mxu0 0
    %507 = vmatpush1.bf16.msra.mxu0 0
    %508 = vmatprep.subr.bf16.mxu0 0
    %509 = vmatpush1.bf16.msra.mxu0 0
    %510 = vmatprep.subr.bf16.mxu0 0
    %511 = vmatpush1.bf16.msra.mxu0 0
    %512 = vmatprep.subr.bf16.mxu0 0
    %513 = vmatpush1.bf16.msra.mxu0 0
    %514 = vmatprep.subr.bf16.mxu0 0
    %515 = vmatpush1.bf16.msra.mxu0 0
    %516 = vmatprep.mubr.bf16.mxu0 0
    %517 = vmatmul.mubr.bf16.gmra.mrb[0].mxu0 %v482
    %v518 = vpop.f32.mrb[0].mxu0
    %v519 = vadd.f32 %v453, %v518
    %v520 = vpop.f32.mrb[0].mxu0
    %v521 = vadd.f32 %v457, %v520
    %v522 = vpop.f32.mrb[0].mxu0
    %v523 = vpop.f32.mrb[0].mxu0
    %524 = vdwg.mxu0
    %v526 = vcombine.high %v521, %v521
    %v528 = vunpack.c.l.s4 1966171168
    %v529 = vunpack.c.0.s8 %v528
    %v530 = vlaneseq
    %v531 = vshrl.u32 %v530, 7
    %v532 = vsub.s32 %v529, %v531
    %v533 = vrot.slane %v521, %v532
    %v535 = vunpack.c.l.s4 1966171168
    %v536 = vunpack.c.0.s8 %v535
    %v537 = vlaneseq
    %v538 = vshrl.u32 %v537, 7
    %v539 = vsub.s32 %v536, %v538
    %v540 = vrot.slane %v526, %v539
    %v541 = vcombine.high %v533, %v533
    %v542 = vcombine.high %v540, %v540
    %v544 = vunpack.c.l.s4 1966171168
    %v545 = vunpack.c.0.s8 %v544
    %v546 = vlaneseq
    %v547 = vshrl.u32 %v546, 7
    %v548 = vsub.s32 %v545, %v547
    %v549 = vrot.slane %v533, %v548
    %v551 = vunpack.c.l.s4 1966171168
    %v552 = vunpack.c.0.s8 %v551
    %v553 = vlaneseq
    %v554 = vshrl.u32 %v553, 7
    %v555 = vsub.s32 %v552, %v554
    %v556 = vrot.slane %v540, %v555
    %v558 = vunpack.c.l.s4 1966171168
    %v559 = vunpack.c.0.s8 %v558
    %v560 = vlaneseq
    %v561 = vshrl.u32 %v560, 7
    %v562 = vsub.s32 %v559, %v561
    %v563 = vrot.slane %v541, %v562
    %v565 = vunpack.c.l.s4 1966171168
    %v566 = vunpack.c.0.s8 %v565
    %v567 = vlaneseq
    %v568 = vshrl.u32 %v567, 7
    %v569 = vsub.s32 %v566, %v568
    %v570 = vrot.slane %v542, %v569
    %v571 = vcombine.high %v549, %v549
    %v572 = vcombine.high %v556, %v556
    %v573 = vcombine.high %v563, %v563
    %v574 = vcombine.high %v570, %v570
    %v575 = vlaneseq
    %v576 = vshrl.u32 %v575, 7
    %v577 = vsub.s32 0, %v576
    %v578 = vrot.slane %v549, %v577
    %v579 = vlaneseq
    %v580 = vshrl.u32 %v579, 7
    %v581 = vsub.s32 0, %v580
    %v582 = vrot.slane %v563, %v581
    %v583 = vlaneseq
    %v584 = vshrl.u32 %v583, 7
    %v585 = vsub.s32 0, %v584
    %v586 = vrot.slane %v571, %v585
    %v587 = vlaneseq
    %v588 = vshrl.u32 %v587, 7
    %v589 = vsub.s32 0, %v588
    %v590 = vrot.slane %v573, %v589
    %v591 = vlaneseq
    %v592 = vshrl.u32 %v591, 7
    %v593 = vsub.s32 0, %v592
    %v594 = vrot.slane %v556, %v593
    %v595 = vlaneseq
    %v596 = vshrl.u32 %v595, 7
    %v597 = vsub.s32 0, %v596
    %v598 = vrot.slane %v570, %v597
    %v599 = vlaneseq
    %v600 = vshrl.u32 %v599, 7
    %v601 = vsub.s32 0, %v600
    %v602 = vrot.slane %v572, %v601
    %v603 = vlaneseq
    %v604 = vshrl.u32 %v603, 7
    %v605 = vsub.s32 0, %v604
    %v606 = vrot.slane %v574, %v605
    %v615 = vadd.f32 %v578, %v519
    %v616 = vadd.f32 %v582, %v519
    %v617 = vadd.f32 %v586, %v519
    %v618 = vadd.f32 %v590, %v519
    %v619 = vadd.f32 %v594, %v519
    %v620 = vadd.f32 %v598, %v519
    %v621 = vadd.f32 %v602, %v519
    %v622 = vadd.f32 %v606, %v519
    %v623 = vmul.f32 %v615, 0.2
    %v624 = vmul.f32 %v616, 0.2
    %v625 = vmul.f32 %v617, 0.2
    %v626 = vmul.f32 %v618, 0.2
    %v627 = vmul.f32 %v619, 0.2
    %v628 = vmul.f32 %v620, 0.2
    %v629 = vmul.f32 %v621, 0.2
    %v630 = vmul.f32 %v622, 0.2
    %v631 = vmax.f32 %v615, %v623
    %v632 = vmax.f32 %v616, %v624
    %v633 = vmax.f32 %v617, %v625
    %v634 = vmax.f32 %v618, %v626
    %v635 = vmax.f32 %v619, %v627
    %v636 = vmax.f32 %v620, %v628
    %v637 = vmax.f32 %v621, %v629
    %v638 = vmax.f32 %v622, %v630
    %v639 = vpack.c.bf16 %v631, %v631
    %v640 = vpack.c.bf16 %v632, %v632
    %v641 = vpack.c.bf16 %v633, %v633
    %v642 = vpack.c.bf16 %v634, %v634
    %v643 = vpack.c.bf16 %v635, %v635
    %v644 = vpack.c.bf16 %v636, %v636
    %v645 = vpack.c.bf16 %v637, %v637
    %v646 = vpack.c.bf16 %v638, %v638
    %v655 = vunpack.c.l.b16 %v639
    %v656 = vunpack.c.l.b16 %v640
    %v657 = vunpack.c.l.b16 %v641
    %v658 = vunpack.c.l.b16 %v642
    %v659 = vunpack.c.l.b16 %v643
    %v660 = vunpack.c.l.b16 %v644
    %v661 = vunpack.c.l.b16 %v645
    %v662 = vunpack.c.l.b16 %v646
    %v663 = vpack.c.b16 %v656, %v655
    %v664 = vpack.c.b16 %v658, %v657
    %v665 = vpack.c.b16 %v660, %v659
    %v666 = vpack.c.b16 %v662, %v661
    %v687 = vunpack.c.l.b16 %v431
    %v688 = vunpack.c.l.b16 %v432
    %v689 = vunpack.c.l.b16 %v433
    %v690 = vunpack.c.l.b16 %v434
    %v691 = vunpack.c.l.b16 %v435
    %v692 = vunpack.c.l.b16 %v436
    %v693 = vunpack.c.l.b16 %v437
    %v694 = vunpack.c.l.b16 %v438
    %v695 = vunpack.c.l.b16 %v439
    %v696 = vunpack.c.l.b16 %v440
    %v697 = vunpack.c.l.b16 %v441
    %v698 = vunpack.c.l.b16 %v442
    %v699 = vunpack.c.l.b16 %v443
    %v700 = vunpack.c.l.b16 %v444
    %v701 = vunpack.c.l.b16 %v445
    %v702 = vunpack.c.l.b16 %v446
    %v703 = vpack.c.b16 %v688, %v687
    %v704 = vpack.c.b16 %v690, %v689
    %v705 = vpack.c.b16 %v692, %v691
    %v706 = vpack.c.b16 %v694, %v693
    %v707 = vpack.c.b16 %v696, %v695
    %v708 = vpack.c.b16 %v698, %v697
    %v709 = vpack.c.b16 %v700, %v699
    %v710 = vpack.c.b16 %v702, %v701
    %719 = vmatprep.subr.bf16.mxu0 0
    %720 = vmatpush1.bf16.msra.mxu0 %v703
    %721 = vmatprep.subr.bf16.mxu0 0
    %722 = vmatpush1.bf16.msra.mxu0 %v704
    %723 = vmatprep.subr.bf16.mxu0 0
    %724 = vmatpush1.bf16.msra.mxu0 %v705
    %725 = vmatprep.subr.bf16.mxu0 0
    %726 = vmatpush1.bf16.msra.mxu0 %v706
    %727 = vmatprep.subr.bf16.mxu0 0
    %728 = vmatpush1.bf16.msra.mxu0 %v707
    %729 = vmatprep.subr.bf16.mxu0 0
    %730 = vmatpush1.bf16.msra.mxu0 %v708
    %731 = vmatprep.subr.bf16.mxu0 0
    %732 = vmatpush1.bf16.msra.mxu0 %v709
    %733 = vmatprep.subr.bf16.mxu0 0
    %734 = vmatpush1.bf16.msra.mxu0 %v710
    %735 = vmatprep.subr.bf16.mxu0 0
    %736 = vmatpush1.bf16.msra.mxu0 0
    %737 = vmatprep.subr.bf16.mxu0 0
    %738 = vmatpush1.bf16.msra.mxu0 0
    %739 = vmatprep.subr.bf16.mxu0 0
    %740 = vmatpush1.bf16.msra.mxu0 0
    %741 = vmatprep.subr.bf16.mxu0 0
    %742 = vmatpush1.bf16.msra.mxu0 0
    %743 = vmatprep.subr.bf16.mxu0 0
    %744 = vmatpush1.bf16.msra.mxu0 0
    %745 = vmatprep.subr.bf16.mxu0 0
    %746 = vmatpush1.bf16.msra.mxu0 0
    %747 = vmatprep.subr.bf16.mxu0 0
    %748 = vmatpush1.bf16.msra.mxu0 0
    %749 = vmatprep.subr.bf16.mxu0 0
    %750 = vmatpush1.bf16.msra.mxu0 0
    %751 = vmatprep.mubr.bf16.mxu0 0
    %752 = vmatmul.mubr.bf16.gmra.mrb[0].mxu0 %v663
    %v753 = vpop.f32.mrb[0].mxu0
    %v754 = vadd.f32 0.0, %v753
    %v755 = vpop.f32.mrb[0].mxu0
    %v756 = vpop.f32.mrb[0].mxu0
    %v757 = vadd.f32 0.0, %v756
    %v758 = vpop.f32.mrb[0].mxu0
    %759 = vmatprep.mubr.bf16.mxu0 0
    %760 = vmatmul.mubr.bf16.gmra.mrb[0].mxu0 %v664
    %v761 = vpop.f32.mrb[0].mxu0
    %v762 = vadd.f32 0.0, %v761
    %v763 = vpop.f32.mrb[0].mxu0
    %v764 = vpop.f32.mrb[0].mxu0
    %v765 = vadd.f32 0.0, %v764
    %v766 = vpop.f32.mrb[0].mxu0
    %767 = vmatprep.mubr.bf16.mxu0 0
    %768 = vmatmul.mubr.bf16.gmra.mrb[0].mxu0 %v665
    %v769 = vpop.f32.mrb[0].mxu0
    %v770 = vadd.f32 0.0, %v769
    %v771 = vpop.f32.mrb[0].mxu0
    %v772 = vpop.f32.mrb[0].mxu0
    %v773 = vadd.f32 0.0, %v772
    %v774 = vpop.f32.mrb[0].mxu0
    %775 = vmatprep.mubr.bf16.mxu0 0
    %776 = vmatmul.mubr.bf16.gmra.mrb[0].mxu0 %v666
    %v777 = vpop.f32.mrb[0].mxu0
    %v778 = vadd.f32 0.0, %v777
    %v779 = vpop.f32.mrb[0].mxu0
    %v780 = vpop.f32.mrb[0].mxu0
    %v781 = vadd.f32 0.0, %v780
    %v782 = vpop.f32.mrb[0].mxu0
    %783 = vdwg.mxu0
    %v784 = vlaneseq
    %v785 = vshrl.u32 %v784, 7
    %v786 = vsub.s32 0, %v785
    %v787 = vrot.slane %v355, %v786
    %789 = vbcast.lane.b32.xlu0 %v787, 256
    %v790 = vpop.permute.xlu0 %789
    %v791 = vlaneseq
    %v792 = vshrl.u32 %v791, 7
    %v793 = vsub.s32 1, %v792
    %v794 = vrot.slane %v355, %v793
    %796 = vbcast.lane.b32.xlu0 %v794, 256
    %v797 = vpop.permute.xlu0 %796
    %v798 = vlaneseq
    %v799 = vshrl.u32 %v798, 7
    %v800 = vsub.s32 2, %v799
    %v801 = vrot.slane %v355, %v800
    %803 = vbcast.lane.b32.xlu0 %v801, 256
    %v804 = vpop.permute.xlu0 %803
    %v805 = vlaneseq
    %v806 = vshrl.u32 %v805, 7
    %v807 = vsub.s32 3, %v806
    %v808 = vrot.slane %v355, %v807
    %810 = vbcast.lane.b32.xlu0 %v808, 256
    %v811 = vpop.permute.xlu0 %810
    %v812 = vlaneseq
    %v813 = vshrl.u32 %v812, 7
    %v814 = vsub.s32 4, %v813
    %v815 = vrot.slane %v355, %v814
    %817 = vbcast.lane.b32.xlu0 %v815, 256
    %v818 = vpop.permute.xlu0 %817
    %v819 = vlaneseq
    %v820 = vshrl.u32 %v819, 7
    %v821 = vsub.s32 5, %v820
    %v822 = vrot.slane %v355, %v821
    %824 = vbcast.lane.b32.xlu0 %v822, 256
    %v825 = vpop.permute.xlu0 %824
    %v826 = vlaneseq
    %v827 = vshrl.u32 %v826, 7
    %v828 = vsub.s32 6, %v827
    %v829 = vrot.slane %v355, %v828
    %831 = vbcast.lane.b32.xlu0 %v829, 256
    %v832 = vpop.permute.xlu0 %831
    %v833 = vlaneseq
    %v834 = vshrl.u32 %v833, 7
    %v835 = vsub.s32 7, %v834
    %v836 = vrot.slane %v355, %v835
    %838 = vbcast.lane.b32.xlu0 %v836, 256
    %v839 = vpop.permute.xlu0 %838
    %v840 = vadd.f32 %v754, %v790
    %v841 = vadd.f32 %v757, %v797
    %v842 = vadd.f32 %v762, %v804
    %v843 = vadd.f32 %v765, %v811
    %v844 = vadd.f32 %v770, %v818
    %v845 = vadd.f32 %v773, %v825
    %v846 = vadd.f32 %v778, %v832
    %v847 = vadd.f32 %v781, %v839
    %v848 = vrot.slane %v840, 4
    %v849 = vmax.f32 %v840, %v848
    %v850 = vrot.slane %v849, 2
    %v851 = vmax.f32 %v849, %v850
    %v852 = vrot.slane %v851, 1
    %v853 = vmax.f32 %v851, %v852
    %v854 = vrot.slane %v841, 4
    %v855 = vmax.f32 %v841, %v854
    %v856 = vrot.slane %v855, 2
    %v857 = vmax.f32 %v855, %v856
    %v858 = vrot.slane %v857, 1
    %v859 = vmax.f32 %v857, %v858
    %v860 = vrot.slane %v842, 4
    %v861 = vmax.f32 %v842, %v860
    %v862 = vrot.slane %v861, 2
    %v863 = vmax.f32 %v861, %v862
    %v864 = vrot.slane %v863, 1
    %v865 = vmax.f32 %v863, %v864
    %v866 = vrot.slane %v843, 4
    %v867 = vmax.f32 %v843, %v866
    %v868 = vrot.slane %v867, 2
    %v869 = vmax.f32 %v867, %v868
    %v870 = vrot.slane %v869, 1
    %v871 = vmax.f32 %v869, %v870
    %v872 = vrot.slane %v844, 4
    %v873 = vmax.f32 %v844, %v872
    %v874 = vrot.slane %v873, 2
    %v875 = vmax.f32 %v873, %v874
    %v876 = vrot.slane %v875, 1
    %v877 = vmax.f32 %v875, %v876
    %v878 = vrot.slane %v845, 4
    %v879 = vmax.f32 %v845, %v878
    %v880 = vrot.slane %v879, 2
    %v881 = vmax.f32 %v879, %v880
    %v882 = vrot.slane %v881, 1
    %v883 = vmax.f32 %v881, %v882
    %v884 = vrot.slane %v846, 4
    %v885 = vmax.f32 %v846, %v884
    %v886 = vrot.slane %v885, 2
    %v887 = vmax.f32 %v885, %v886
    %v888 = vrot.slane %v887, 1
    %v889 = vmax.f32 %v887, %v888
    %v890 = vrot.slane %v847, 4
    %v891 = vmax.f32 %v847, %v890
    %v892 = vrot.slane %v891, 2
    %v893 = vmax.f32 %v891, %v892
    %v894 = vrot.slane %v893, 1
    %v895 = vmax.f32 %v893, %v894
    %v896 = vsub.f32 %v840, %v853
    %v897 = vsub.f32 %v841, %v859
    %v898 = vsub.f32 %v842, %v865
    %v899 = vsub.f32 %v843, %v871
    %v900 = vsub.f32 %v844, %v877
    %v901 = vsub.f32 %v845, %v883
    %v902 = vsub.f32 %v846, %v889
    %v903 = vsub.f32 %v847, %v895
    %v904 = vmul.f32 %v896, 1.442695
    %v905 = vpow.pop %v904
    %v906 = vmul.f32 %v897, 1.442695
    %v907 = vpow.pop %v906
    %v908 = vmul.f32 %v898, 1.442695
    %v909 = vpow.pop %v908
    %v910 = vmul.f32 %v899, 1.442695
    %v911 = vpow.pop %v910
    %v912 = vmul.f32 %v900, 1.442695
    %v913 = vpow.pop %v912
    %v914 = vmul.f32 %v901, 1.442695
    %v915 = vpow.pop %v914
    %v916 = vmul.f32 %v902, 1.442695
    %v917 = vpow.pop %v916
    %v918 = vmul.f32 %v903, 1.442695
    %v919 = vpow.pop %v918
    %v920 = vrot.slane %v905, 4
    %v921 = vadd.f32 %v905, %v920
    %v922 = vrot.slane %v921, 2
    %v923 = vadd.f32 %v921, %v922
    %v924 = vrot.slane %v923, 1
    %v925 = vadd.f32 %v923, %v924
    %v926 = vrot.slane %v907, 4
    %v927 = vadd.f32 %v907, %v926
    %v928 = vrot.slane %v927, 2
    %v929 = vadd.f32 %v927, %v928
    %v930 = vrot.slane %v929, 1
    %v931 = vadd.f32 %v929, %v930
    %v932 = vrot.slane %v909, 4
    %v933 = vadd.f32 %v909, %v932
    %v934 = vrot.slane %v933, 2
    %v935 = vadd.f32 %v933, %v934
    %v936 = vrot.slane %v935, 1
    %v937 = vadd.f32 %v935, %v936
    %v938 = vrot.slane %v911, 4
    %v939 = vadd.f32 %v911, %v938
    %v940 = vrot.slane %v939, 2
    %v941 = vadd.f32 %v939, %v940
    %v942 = vrot.slane %v941, 1
    %v943 = vadd.f32 %v941, %v942
    %v944 = vrot.slane %v913, 4
    %v945 = vadd.f32 %v913, %v944
    %v946 = vrot.slane %v945, 2
    %v947 = vadd.f32 %v945, %v946
    %v948 = vrot.slane %v947, 1
    %v949 = vadd.f32 %v947, %v948
    %v950 = vrot.slane %v915, 4
    %v951 = vadd.f32 %v915, %v950
    %v952 = vrot.slane %v951, 2
    %v953 = vadd.f32 %v951, %v952
    %v954 = vrot.slane %v953, 1
    %v955 = vadd.f32 %v953, %v954
    %v956 = vrot.slane %v917, 4
    %v957 = vadd.f32 %v917, %v956
    %v958 = vrot.slane %v957, 2
    %v959 = vadd.f32 %v957, %v958
    %v960 = vrot.slane %v959, 1
    %v961 = vadd.f32 %v959, %v960
    %v962 = vrot.slane %v919, 4
    %v963 = vadd.f32 %v919, %v962
    %v964 = vrot.slane %v963, 2
    %v965 = vadd.f32 %v963, %v964
    %v966 = vrot.slane %v965, 1
    %v967 = vadd.f32 %v965, %v966
    %v968 = vrcp.pop %v925
    %v969 = vrcp.pop %v931
    %v970 = vrcp.pop %v937
    %v971 = vrcp.pop %v943
    %v972 = vrcp.pop %v949
    %v973 = vrcp.pop %v955
    %v974 = vrcp.pop %v961
    %v975 = vrcp.pop %v967
    %v976 = vmul.f32 %v905, %v968
    %v977 = vmul.f32 %v907, %v969
    %v978 = vmul.f32 %v909, %v970
    %v979 = vmul.f32 %v911, %v971
    %v980 = vmul.f32 %v913, %v972
    %v981 = vmul.f32 %v915, %v973
    %v982 = vmul.f32 %v917, %v974
    %v983 = vmul.f32 %v919, %v975
    %v984 = vmul.f32 %v976, %v519
    %v985 = vmul.f32 %v977, %v519
    %v986 = vmul.f32 %v978, %v519
    %v987 = vmul.f32 %v979, %v519
    %v988 = vmul.f32 %v980, %v519
    %v989 = vmul.f32 %v981, %v519
    %v990 = vmul.f32 %v982, %v519
    %v991 = vmul.f32 %v983, %v519
    %v992 = vrot.slane %v984, 4
    %v993 = vadd.f32 %v984, %v992
    %v994 = vrot.slane %v993, 2
    %v995 = vadd.f32 %v993, %v994
    %v996 = vrot.slane %v995, 1
    %v997 = vadd.f32 %v995, %v996
    %v998 = vrot.slane %v985, 4
    %v999 = vadd.f32 %v985, %v998
    %v1000 = vrot.slane %v999, 2
    %v1001 = vadd.f32 %v999, %v1000
    %v1002 = vrot.slane %v1001, 1
    %v1003 = vadd.f32 %v1001, %v1002
    %v1004 = vrot.slane %v986, 4
    %v1005 = vadd.f32 %v986, %v1004
    %v1006 = vrot.slane %v1005, 2
    %v1007 = vadd.f32 %v1005, %v1006
    %v1008 = vrot.slane %v1007, 1
    %v1009 = vadd.f32 %v1007, %v1008
    %v1010 = vrot.slane %v987, 4
    %v1011 = vadd.f32 %v987, %v1010
    %v1012 = vrot.slane %v1011, 2
    %v1013 = vadd.f32 %v1011, %v1012
    %v1014 = vrot.slane %v1013, 1
    %v1015 = vadd.f32 %v1013, %v1014
    %v1016 = vrot.slane %v988, 4
    %v1017 = vadd.f32 %v988, %v1016
    %v1018 = vrot.slane %v1017, 2
    %v1019 = vadd.f32 %v1017, %v1018
    %v1020 = vrot.slane %v1019, 1
    %v1021 = vadd.f32 %v1019, %v1020
    %v1022 = vrot.slane %v989, 4
    %v1023 = vadd.f32 %v989, %v1022
    %v1024 = vrot.slane %v1023, 2
    %v1025 = vadd.f32 %v1023, %v1024
    %v1026 = vrot.slane %v1025, 1
    %v1027 = vadd.f32 %v1025, %v1026
    %v1028 = vrot.slane %v990, 4
    %v1029 = vadd.f32 %v990, %v1028
    %v1030 = vrot.slane %v1029, 2
    %v1031 = vadd.f32 %v1029, %v1030
    %v1032 = vrot.slane %v1031, 1
    %v1033 = vadd.f32 %v1031, %v1032
    %v1034 = vrot.slane %v991, 4
    %v1035 = vadd.f32 %v991, %v1034
    %v1036 = vrot.slane %v1035, 2
    %v1037 = vadd.f32 %v1035, %v1036
    %v1038 = vrot.slane %v1037, 1
    %v1039 = vadd.f32 %v1037, %v1038
    %v1041 = vlaneseq
    %v1042 = vshrl.u32 %v1041, 7
    %v1043 = vsub.s32 0, %v1042
    %v1044 = vrot.slane %v447, %v1043
    %v1046 = vadd.f32 %v997, %v1044
    %v1047 = vadd.f32 %v1003, %v1044
    %v1048 = vadd.f32 %v1009, %v1044
    %v1049 = vadd.f32 %v1015, %v1044
    %v1050 = vadd.f32 %v1021, %v1044
    %v1051 = vadd.f32 %v1027, %v1044
    %v1052 = vadd.f32 %v1033, %v1044
    %v1053 = vadd.f32 %v1039, %v1044
    %v1054 = vmax.f32 %v1046, 0.0
    %v1055 = vmax.f32 %v1047, 0.0
    %v1056 = vmax.f32 %v1048, 0.0
    %v1057 = vmax.f32 %v1049, 0.0
    %v1058 = vmax.f32 %v1050, 0.0
    %v1059 = vmax.f32 %v1051, 0.0
    %v1060 = vmax.f32 %v1052, 0.0
    %v1061 = vmax.f32 %v1053, 0.0
    %v1062 = vld [vmem:[#allocation14] sm:$0xff]
    %v1063 = vld [vmem:[#allocation14 + $0x8] sm:$0xff]
    %v1064 = vld [vmem:[#allocation14 + $0x10] sm:$0xff]
    %v1065 = vld [vmem:[#allocation14 + $0x18] sm:$0xff]
    %v1066 = vld [vmem:[#allocation14 + $0x20] sm:$0xff]
    %v1067 = vld [vmem:[#allocation14 + $0x28] sm:$0xff]
    %v1068 = vld [vmem:[#allocation14 + $0x30] sm:$0xff]
    %v1069 = vld [vmem:[#allocation14 + $0x38] sm:$0xff]
    %v1070 = vld [vmem:[#allocation14 + $0x40] sm:$0xff]
    %v1071 = vld [vmem:[#allocation14 + $0x48] sm:$0xff]
    %v1072 = vld [vmem:[#allocation14 + $0x50] sm:$0xff]
    %v1073 = vld [vmem:[#allocation14 + $0x58] sm:$0xff]
    %v1074 = vld [vmem:[#allocation14 + $0x60] sm:$0xff]
    %v1075 = vld [vmem:[#allocation14 + $0x68] sm:$0xff]
    %v1076 = vld [vmem:[#allocation14 + $0x70] sm:$0xff]
    %v1077 = vld [vmem:[#allocation14 + $0x78] sm:$0xff]
    %v1078 = vld [vmem:[#allocation16] sm:$0x3]
    %v1079 = vld [vmem:[#allocation17] sm:$0xf]
    %v1080 = vld [vmem:[#allocation17 + $0x4] sm:$0xf]
    %v1081 = vld [vmem:[#allocation17 + $0x8] sm:$0xf]
    %v1082 = vld [vmem:[#allocation17 + $0xc] sm:$0xf]
    %v1083 = vld [vmem:[#allocation17 + $0x10] sm:$0xf]
    %v1084 = vld [vmem:[#allocation17 + $0x14] sm:$0xf]
    %v1085 = vld [vmem:[#allocation17 + $0x18] sm:$0xf]
    %v1086 = vld [vmem:[#allocation17 + $0x1c] sm:$0xf]
    %v1087 = vld [vmem:[#allocation17 + $0x20] sm:$0xf]
    %v1088 = vld [vmem:[#allocation17 + $0x24] sm:$0xf]
    %v1089 = vld [vmem:[#allocation17 + $0x28] sm:$0xf]
    %v1090 = vld [vmem:[#allocation17 + $0x2c] sm:$0xf]
    %v1091 = vld [vmem:[#allocation17 + $0x30] sm:$0xf]
    %v1092 = vld [vmem:[#allocation17 + $0x34] sm:$0xf]
    %v1093 = vld [vmem:[#allocation17 + $0x38] sm:$0xf]
    %v1094 = vld [vmem:[#allocation17 + $0x3c] sm:$0xf]
    %v1095 = vld [vmem:[#allocation19] sm:$0x1]
    %v1096 = vpack.c.bf16 %v1054, %v1054
    %v1097 = vpack.c.bf16 %v1055, %v1055
    %v1098 = vpack.c.bf16 %v1056, %v1056
    %v1099 = vpack.c.bf16 %v1057, %v1057
    %v1100 = vpack.c.bf16 %v1058, %v1058
    %v1101 = vpack.c.bf16 %v1059, %v1059
    %v1102 = vpack.c.bf16 %v1060, %v1060
    %v1103 = vpack.c.bf16 %v1061, %v1061
    %v1105 = vlaneseq
    %v1106 = vshrl.u32 %v1105, 7
    %v1107 = vsub.s32 0, %v1106
    %v1108 = vrot.slane %v1078, %v1107
    %v1109 = vlaneseq
    %v1110 = vshrl.u32 %v1109, 7
    %v1111 = vsub.s32 1, %v1110
    %v1112 = vrot.slane %v1078, %v1111
    %v1123 = vunpack.c.l.b16 %v1096
    %v1124 = vunpack.c.l.b16 %v1097
    %v1125 = vunpack.c.l.b16 %v1098
    %v1126 = vunpack.c.l.b16 %v1099
    %v1127 = vunpack.c.l.b16 %v1100
    %v1128 = vunpack.c.l.b16 %v1101
    %v1129 = vunpack.c.l.b16 %v1102
    %v1130 = vunpack.c.l.b16 %v1103
    %v1131 = vrot.slane %v1124, 7
    %vm1132 = vcmask 1041409
    %v1133 = vsel %vm1132, %v1131, %v1123
    %v1134 = vrot.slane %v1125, 6
    %vm1135 = vcmask 1042434
    %v1136 = vsel %vm1135, %v1134, %v1133
    %v1137 = vrot.slane %v1126, 5
    %vm1138 = vcmask 1043459
    %v1139 = vsel %vm1138, %v1137, %v1136
    %v1140 = vrot.slane %v1127, 4
    %vm1141 = vcmask 1044484
    %v1142 = vsel %vm1141, %v1140, %v1139
    %v1143 = vrot.slane %v1128, 3
    %vm1144 = vcmask 1045509
    %v1145 = vsel %vm1144, %v1143, %v1142
    %v1146 = vrot.slane %v1129, 2
    %vm1147 = vcmask 1046534
    %v1148 = vsel %vm1147, %v1146, %v1145
    %v1149 = vrot.slane %v1130, 1
    %vm1150 = vcmask 1047559
    %v1151 = vsel %vm1150, %v1149, %v1148
    %v1152 = vpack.c.b16 %v1151, %v1151
    %v1170 = vunpack.c.l.b16 %v1062
    %v1171 = vunpack.c.h.b16 %v1062
    %v1172 = vunpack.c.l.b16 %v1063
    %v1173 = vunpack.c.h.b16 %v1063
    %v1174 = vunpack.c.l.b16 %v1064
    %v1175 = vunpack.c.h.b16 %v1064
    %v1176 = vunpack.c.l.b16 %v1065
    %v1177 = vunpack.c.h.b16 %v1065
    %v1178 = vunpack.c.l.b16 %v1066
    %v1179 = vunpack.c.h.b16 %v1066
    %v1180 = vunpack.c.l.b16 %v1067
    %v1181 = vunpack.c.h.b16 %v1067
    %v1182 = vunpack.c.l.b16 %v1068
    %v1183 = vunpack.c.h.b16 %v1068
    %v1184 = vunpack.c.l.b16 %v1069
    %v1185 = vunpack.c.h.b16 %v1069
    %v1186 = vunpack.c.l.b16 %v1070
    %v1187 = vunpack.c.h.b16 %v1070
    %v1188 = vunpack.c.l.b16 %v1071
    %v1189 = vunpack.c.h.b16 %v1071
    %v1190 = vunpack.c.l.b16 %v1072
    %v1191 = vunpack.c.h.b16 %v1072
    %v1192 = vunpack.c.l.b16 %v1073
    %v1193 = vunpack.c.h.b16 %v1073
    %v1194 = vunpack.c.l.b16 %v1074
    %v1195 = vunpack.c.h.b16 %v1074
    %v1196 = vunpack.c.l.b16 %v1075
    %v1197 = vunpack.c.h.b16 %v1075
    %v1198 = vunpack.c.l.b16 %v1076
    %v1199 = vunpack.c.h.b16 %v1076
    %v1200 = vunpack.c.l.b16 %v1077
    %v1201 = vunpack.c.h.b16 %v1077
    %v1202 = vpack.c.b16 %v1172, %v1170
    %v1203 = vpack.c.b16 %v1173, %v1171
    %v1204 = vpack.c.b16 %v1176, %v1174
    %v1205 = vpack.c.b16 %v1177, %v1175
    %v1206 = vpack.c.b16 %v1180, %v1178
    %v1207 = vpack.c.b16 %v1181, %v1179
    %v1208 = vpack.c.b16 %v1184, %v1182
    %v1209 = vpack.c.b16 %v1185, %v1183
    %v1210 = vpack.c.b16 %v1188, %v1186
    %v1211 = vpack.c.b16 %v1189, %v1187
    %v1212 = vpack.c.b16 %v1192, %v1190
    %v1213 = vpack.c.b16 %v1193, %v1191
    %v1214 = vpack.c.b16 %v1196, %v1194
    %v1215 = vpack.c.b16 %v1197, %v1195
    %v1216 = vpack.c.b16 %v1200, %v1198
    %v1217 = vpack.c.b16 %v1201, %v1199
    %1234 = vmatprep.subr.bf16.mxu0 %v1203
    %1235 = vmatpush1.bf16.msra.mxu0 %v1202
    %1236 = vmatprep.subr.bf16.mxu0 %v1205
    %1237 = vmatpush1.bf16.msra.mxu0 %v1204
    %1238 = vmatprep.subr.bf16.mxu0 %v1207
    %1239 = vmatpush1.bf16.msra.mxu0 %v1206
    %1240 = vmatprep.subr.bf16.mxu0 %v1209
    %1241 = vmatpush1.bf16.msra.mxu0 %v1208
    %1242 = vmatprep.subr.bf16.mxu0 %v1211
    %1243 = vmatpush1.bf16.msra.mxu0 %v1210
    %1244 = vmatprep.subr.bf16.mxu0 %v1213
    %1245 = vmatpush1.bf16.msra.mxu0 %v1212
    %1246 = vmatprep.subr.bf16.mxu0 %v1215
    %1247 = vmatpush1.bf16.msra.mxu0 %v1214
    %1248 = vmatprep.subr.bf16.mxu0 %v1217
    %1249 = vmatpush1.bf16.msra.mxu0 %v1216
    %1250 = vmatprep.subr.bf16.mxu0 0
    %1251 = vmatpush1.bf16.msra.mxu0 0
    %1252 = vmatprep.subr.bf16.mxu0 0
    %1253 = vmatpush1.bf16.msra.mxu0 0
    %1254 = vmatprep.subr.bf16.mxu0 0
    %1255 = vmatpush1.bf16.msra.mxu0 0
    %1256 = vmatprep.subr.bf16.mxu0 0
    %1257 = vmatpush1.bf16.msra.mxu0 0
    %1258 = vmatprep.subr.bf16.mxu0 0
    %1259 = vmatpush1.bf16.msra.mxu0 0
    %1260 = vmatprep.subr.bf16.mxu0 0
    %1261 = vmatpush1.bf16.msra.mxu0 0
    %1262 = vmatprep.subr.bf16.mxu0 0
    %1263 = vmatpush1.bf16.msra.mxu0 0
    %1264 = vmatprep.subr.bf16.mxu0 0
    %1265 = vmatpush1.bf16.msra.mxu0 0
    %1266 = vmatprep.mubr.bf16.mxu0 0
    %1267 = vmatmul.mubr.bf16.gmra.mrb[0].mxu0 %v1152
    %v1268 = vpop.f32.mrb[0].mxu0
    %v1269 = vadd.f32 %v1108, %v1268
    %v1270 = vpop.f32.mrb[0].mxu0
    %v1271 = vadd.f32 %v1112, %v1270
    %v1272 = vpop.f32.mrb[0].mxu0
    %v1273 = vpop.f32.mrb[0].mxu0
    %1274 = vdwg.mxu0
    %v1276 = vcombine.high %v1271, %v1271
    %v1278 = vunpack.c.l.s4 1966171168
    %v1279 = vunpack.c.0.s8 %v1278
    %v1280 = vlaneseq
    %v1281 = vshrl.u32 %v1280, 7
    %v1282 = vsub.s32 %v1279, %v1281
    %v1283 = vrot.slane %v1271, %v1282
    %v1285 = vunpack.c.l.s4 1966171168
    %v1286 = vunpack.c.0.s8 %v1285
    %v1287 = vlaneseq
    %v1288 = vshrl.u32 %v1287, 7
    %v1289 = vsub.s32 %v1286, %v1288
    %v1290 = vrot.slane %v1276, %v1289
    %v1291 = vcombine.high %v1283, %v1283
    %v1292 = vcombine.high %v1290, %v1290
    %v1294 = vunpack.c.l.s4 1966171168
    %v1295 = vunpack.c.0.s8 %v1294
    %v1296 = vlaneseq
    %v1297 = vshrl.u32 %v1296, 7
    %v1298 = vsub.s32 %v1295, %v1297
    %v1299 = vrot.slane %v1283, %v1298
    %v1301 = vunpack.c.l.s4 1966171168
    %v1302 = vunpack.c.0.s8 %v1301
    %v1303 = vlaneseq
    %v1304 = vshrl.u32 %v1303, 7
    %v1305 = vsub.s32 %v1302, %v1304
    %v1306 = vrot.slane %v1290, %v1305
    %v1308 = vunpack.c.l.s4 1966171168
    %v1309 = vunpack.c.0.s8 %v1308
    %v1310 = vlaneseq
    %v1311 = vshrl.u32 %v1310, 7
    %v1312 = vsub.s32 %v1309, %v1311
    %v1313 = vrot.slane %v1291, %v1312
    %v1315 = vunpack.c.l.s4 1966171168
    %v1316 = vunpack.c.0.s8 %v1315
    %v1317 = vlaneseq
    %v1318 = vshrl.u32 %v1317, 7
    %v1319 = vsub.s32 %v1316, %v1318
    %v1320 = vrot.slane %v1292, %v1319
    %v1321 = vcombine.high %v1299, %v1299
    %v1322 = vcombine.high %v1306, %v1306
    %v1323 = vcombine.high %v1313, %v1313
    %v1324 = vcombine.high %v1320, %v1320
    %v1325 = vlaneseq
    %v1326 = vshrl.u32 %v1325, 7
    %v1327 = vsub.s32 0, %v1326
    %v1328 = vrot.slane %v1299, %v1327
    %v1329 = vlaneseq
    %v1330 = vshrl.u32 %v1329, 7
    %v1331 = vsub.s32 0, %v1330
    %v1332 = vrot.slane %v1313, %v1331
    %v1333 = vlaneseq
    %v1334 = vshrl.u32 %v1333, 7
    %v1335 = vsub.s32 0, %v1334
    %v1336 = vrot.slane %v1321, %v1335
    %v1337 = vlaneseq
    %v1338 = vshrl.u32 %v1337, 7
    %v1339 = vsub.s32 0, %v1338
    %v1340 = vrot.slane %v1323, %v1339
    %v1341 = vlaneseq
    %v1342 = vshrl.u32 %v1341, 7
    %v1343 = vsub.s32 0, %v1342
    %v1344 = vrot.slane %v1306, %v1343
    %v1345 = vlaneseq
    %v1346 = vshrl.u32 %v1345, 7
    %v1347 = vsub.s32 0, %v1346
    %v1348 = vrot.slane %v1320, %v1347
    %v1349 = vlaneseq
    %v1350 = vshrl.u32 %v1349, 7
    %v1351 = vsub.s32 0, %v1350
    %v1352 = vrot.slane %v1322, %v1351
    %v1353 = vlaneseq
    %v1354 = vshrl.u32 %v1353, 7
    %v1355 = vsub.s32 0, %v1354
    %v1356 = vrot.slane %v1324, %v1355
    %v1365 = vadd.f32 %v1328, %v1269
    %v1366 = vadd.f32 %v1332, %v1269
    %v1367 = vadd.f32 %v1336, %v1269
    %v1368 = vadd.f32 %v1340, %v1269
    %v1369 = vadd.f32 %v1344, %v1269
    %v1370 = vadd.f32 %v1348, %v1269
    %v1371 = vadd.f32 %v1352, %v1269
    %v1372 = vadd.f32 %v1356, %v1269
    %v1373 = vmul.f32 %v1365, 0.2
    %v1374 = vmul.f32 %v1366, 0.2
    %v1375 = vmul.f32 %v1367, 0.2
    %v1376 = vmul.f32 %v1368, 0.2
    %v1377 = vmul.f32 %v1369, 0.2
    %v1378 = vmul.f32 %v1370, 0.2
    %v1379 = vmul.f32 %v1371, 0.2
    %v1380 = vmul.f32 %v1372, 0.2
    %v1381 = vmax.f32 %v1365, %v1373
    %v1382 = vmax.f32 %v1366, %v1374
    %v1383 = vmax.f32 %v1367, %v1375
    %v1384 = vmax.f32 %v1368, %v1376
    %v1385 = vmax.f32 %v1369, %v1377
    %v1386 = vmax.f32 %v1370, %v1378
    %v1387 = vmax.f32 %v1371, %v1379
    %v1388 = vmax.f32 %v1372, %v1380
    %v1389 = vpack.c.bf16 %v1381, %v1381
    %v1390 = vpack.c.bf16 %v1382, %v1382
    %v1391 = vpack.c.bf16 %v1383, %v1383
    %v1392 = vpack.c.bf16 %v1384, %v1384
    %v1393 = vpack.c.bf16 %v1385, %v1385
    %v1394 = vpack.c.bf16 %v1386, %v1386
    %v1395 = vpack.c.bf16 %v1387, %v1387
    %v1396 = vpack.c.bf16 %v1388, %v1388
    %v1405 = vunpack.c.l.b16 %v1389
    %v1406 = vunpack.c.l.b16 %v1390
    %v1407 = vunpack.c.l.b16 %v1391
    %v1408 = vunpack.c.l.b16 %v1392
    %v1409 = vunpack.c.l.b16 %v1393
    %v1410 = vunpack.c.l.b16 %v1394
    %v1411 = vunpack.c.l.b16 %v1395
    %v1412 = vunpack.c.l.b16 %v1396
    %v1413 = vpack.c.b16 %v1406, %v1405
    %v1414 = vpack.c.b16 %v1408, %v1407
    %v1415 = vpack.c.b16 %v1410, %v1409
    %v1416 = vpack.c.b16 %v1412, %v1411
    %v1437 = vunpack.c.l.b16 %v1079
    %v1438 = vunpack.c.l.b16 %v1080
    %v1439 = vunpack.c.l.b16 %v1081
    %v1440 = vunpack.c.l.b16 %v1082
    %v1441 = vunpack.c.l.b16 %v1083
    %v1442 = vunpack.c.l.b16 %v1084
    %v1443 = vunpack.c.l.b16 %v1085
    %v1444 = vunpack.c.l.b16 %v1086
    %v1445 = vunpack.c.l.b16 %v1087
    %v1446 = vunpack.c.l.b16 %v1088
    %v1447 = vunpack.c.l.b16 %v1089
    %v1448 = vunpack.c.l.b16 %v1090
    %v1449 = vunpack.c.l.b16 %v1091
    %v1450 = vunpack.c.l.b16 %v1092
    %v1451 = vunpack.c.l.b16 %v1093
    %v1452 = vunpack.c.l.b16 %v1094
    %v1453 = vpack.c.b16 %v1438, %v1437
    %v1454 = vpack.c.b16 %v1440, %v1439
    %v1455 = vpack.c.b16 %v1442, %v1441
    %v1456 = vpack.c.b16 %v1444, %v1443
    %v1457 = vpack.c.b16 %v1446, %v1445
    %v1458 = vpack.c.b16 %v1448, %v1447
    %v1459 = vpack.c.b16 %v1450, %v1449
    %v1460 = vpack.c.b16 %v1452, %v1451
    %1469 = vmatprep.subr.bf16.mxu0 0
    %1470 = vmatpush1.bf16.msra.mxu0 %v1453
    %1471 = vmatprep.subr.bf16.mxu0 0
    %1472 = vmatpush1.bf16.msra.mxu0 %v1454
    %1473 = vmatprep.subr.bf16.mxu0 0
    %1474 = vmatpush1.bf16.msra.mxu0 %v1455
    %1475 = vmatprep.subr.bf16.mxu0 0
    %1476 = vmatpush1.bf16.msra.mxu0 %v1456
    %1477 = vmatprep.subr.bf16.mxu0 0
    %1478 = vmatpush1.bf16.msra.mxu0 %v1457
    %1479 = vmatprep.subr.bf16.mxu0 0
    %1480 = vmatpush1.bf16.msra.mxu0 %v1458
    %1481 = vmatprep.subr.bf16.mxu0 0
    %1482 = vmatpush1.bf16.msra.mxu0 %v1459
    %1483 = vmatprep.subr.bf16.mxu0 0
    %1484 = vmatpush1.bf16.msra.mxu0 %v1460
    %1485 = vmatprep.subr.bf16.mxu0 0
    %1486 = vmatpush1.bf16.msra.mxu0 0
    %1487 = vmatprep.subr.bf16.mxu0 0
    %1488 = vmatpush1.bf16.msra.mxu0 0
    %1489 = vmatprep.subr.bf16.mxu0 0
    %1490 = vmatpush1.bf16.msra.mxu0 0
    %1491 = vmatprep.subr.bf16.mxu0 0
    %1492 = vmatpush1.bf16.msra.mxu0 0
    %1493 = vmatprep.subr.bf16.mxu0 0
    %1494 = vmatpush1.bf16.msra.mxu0 0
    %1495 = vmatprep.subr.bf16.mxu0 0
    %1496 = vmatpush1.bf16.msra.mxu0 0
    %1497 = vmatprep.subr.bf16.mxu0 0
    %1498 = vmatpush1.bf16.msra.mxu0 0
    %1499 = vmatprep.subr.bf16.mxu0 0
    %1500 = vmatpush1.bf16.msra.mxu0 0
    %1501 = vmatprep.mubr.bf16.mxu0 0
    %1502 = vmatmul.mubr.bf16.gmra.mrb[0].mxu0 %v1413
    %v1503 = vpop.f32.mrb[0].mxu0
    %v1504 = vadd.f32 0.0, %v1503
    %v1505 = vpop.f32.mrb[0].mxu0
    %v1506 = vpop.f32.mrb[0].mxu0
    %v1507 = vadd.f32 0.0, %v1506
    %v1508 = vpop.f32.mrb[0].mxu0
    %1509 = vmatprep.mubr.bf16.mxu0 0
    %1510 = vmatmul.mubr.bf16.gmra.mrb[0].mxu0 %v1414
    %v1511 = vpop.f32.mrb[0].mxu0
    %v1512 = vadd.f32 0.0, %v1511
    %v1513 = vpop.f32.mrb[0].mxu0
    %v1514 = vpop.f32.mrb[0].mxu0
    %v1515 = vadd.f32 0.0, %v1514
    %v1516 = vpop.f32.mrb[0].mxu0
    %1517 = vmatprep.mubr.bf16.mxu0 0
    %1518 = vmatmul.mubr.bf16.gmra.mrb[0].mxu0 %v1415
    %v1519 = vpop.f32.mrb[0].mxu0
    %v1520 = vadd.f32 0.0, %v1519
    %v1521 = vpop.f32.mrb[0].mxu0
    %v1522 = vpop.f32.mrb[0].mxu0
    %v1523 = vadd.f32 0.0, %v1522
    %v1524 = vpop.f32.mrb[0].mxu0
    %1525 = vmatprep.mubr.bf16.mxu0 0
    %1526 = vmatmul.mubr.bf16.gmra.mrb[0].mxu0 %v1416
    %v1527 = vpop.f32.mrb[0].mxu0
    %v1528 = vadd.f32 0.0, %v1527
    %v1529 = vpop.f32.mrb[0].mxu0
    %v1530 = vpop.f32.mrb[0].mxu0
    %v1531 = vadd.f32 0.0, %v1530
    %v1532 = vpop.f32.mrb[0].mxu0
    %1533 = vdwg.mxu0
    %v1534 = vadd.f32 %v1504, %v790
    %v1535 = vadd.f32 %v1507, %v797
    %v1536 = vadd.f32 %v1512, %v804
    %v1537 = vadd.f32 %v1515, %v811
    %v1538 = vadd.f32 %v1520, %v818
    %v1539 = vadd.f32 %v1523, %v825
    %v1540 = vadd.f32 %v1528, %v832
    %v1541 = vadd.f32 %v1531, %v839
    %v1542 = vrot.slane %v1534, 4
    %v1543 = vmax.f32 %v1534, %v1542
    %v1544 = vrot.slane %v1543, 2
    %v1545 = vmax.f32 %v1543, %v1544
    %v1546 = vrot.slane %v1545, 1
    %v1547 = vmax.f32 %v1545, %v1546
    %v1548 = vrot.slane %v1535, 4
    %v1549 = vmax.f32 %v1535, %v1548
    %v1550 = vrot.slane %v1549, 2
    %v1551 = vmax.f32 %v1549, %v1550
    %v1552 = vrot.slane %v1551, 1
    %v1553 = vmax.f32 %v1551, %v1552
    %v1554 = vrot.slane %v1536, 4
    %v1555 = vmax.f32 %v1536, %v1554
    %v1556 = vrot.slane %v1555, 2
    %v1557 = vmax.f32 %v1555, %v1556
    %v1558 = vrot.slane %v1557, 1
    %v1559 = vmax.f32 %v1557, %v1558
    %v1560 = vrot.slane %v1537, 4
    %v1561 = vmax.f32 %v1537, %v1560
    %v1562 = vrot.slane %v1561, 2
    %v1563 = vmax.f32 %v1561, %v1562
    %v1564 = vrot.slane %v1563, 1
    %v1565 = vmax.f32 %v1563, %v1564
    %v1566 = vrot.slane %v1538, 4
    %v1567 = vmax.f32 %v1538, %v1566
    %v1568 = vrot.slane %v1567, 2
    %v1569 = vmax.f32 %v1567, %v1568
    %v1570 = vrot.slane %v1569, 1
    %v1571 = vmax.f32 %v1569, %v1570
    %v1572 = vrot.slane %v1539, 4
    %v1573 = vmax.f32 %v1539, %v1572
    %v1574 = vrot.slane %v1573, 2
    %v1575 = vmax.f32 %v1573, %v1574
    %v1576 = vrot.slane %v1575, 1
    %v1577 = vmax.f32 %v1575, %v1576
    %v1578 = vrot.slane %v1540, 4
    %v1579 = vmax.f32 %v1540, %v1578
    %v1580 = vrot.slane %v1579, 2
    %v1581 = vmax.f32 %v1579, %v1580
    %v1582 = vrot.slane %v1581, 1
    %v1583 = vmax.f32 %v1581, %v1582
    %v1584 = vrot.slane %v1541, 4
    %v1585 = vmax.f32 %v1541, %v1584
    %v1586 = vrot.slane %v1585, 2
    %v1587 = vmax.f32 %v1585, %v1586
    %v1588 = vrot.slane %v1587, 1
    %v1589 = vmax.f32 %v1587, %v1588
    %v1590 = vsub.f32 %v1534, %v1547
    %v1591 = vsub.f32 %v1535, %v1553
    %v1592 = vsub.f32 %v1536, %v1559
    %v1593 = vsub.f32 %v1537, %v1565
    %v1594 = vsub.f32 %v1538, %v1571
    %v1595 = vsub.f32 %v1539, %v1577
    %v1596 = vsub.f32 %v1540, %v1583
    %v1597 = vsub.f32 %v1541, %v1589
    %v1598 = vmul.f32 %v1590, 1.442695
    %v1599 = vpow.pop %v1598
    %v1600 = vmul.f32 %v1591, 1.442695
    %v1601 = vpow.pop %v1600
    %v1602 = vmul.f32 %v1592, 1.442695
    %v1603 = vpow.pop %v1602
    %v1604 = vmul.f32 %v1593, 1.442695
    %v1605 = vpow.pop %v1604
    %v1606 = vmul.f32 %v1594, 1.442695
    %v1607 = vpow.pop %v1606
    %v1608 = vmul.f32 %v1595, 1.442695
    %v1609 = vpow.pop %v1608
    %v1610 = vmul.f32 %v1596, 1.442695
    %v1611 = vpow.pop %v1610
    %v1612 = vmul.f32 %v1597, 1.442695
    %v1613 = vpow.pop %v1612
    %v1614 = vrot.slane %v1599, 4
    %v1615 = vadd.f32 %v1599, %v1614
    %v1616 = vrot.slane %v1615, 2
    %v1617 = vadd.f32 %v1615, %v1616
    %v1618 = vrot.slane %v1617, 1
    %v1619 = vadd.f32 %v1617, %v1618
    %v1620 = vrot.slane %v1601, 4
    %v1621 = vadd.f32 %v1601, %v1620
    %v1622 = vrot.slane %v1621, 2
    %v1623 = vadd.f32 %v1621, %v1622
    %v1624 = vrot.slane %v1623, 1
    %v1625 = vadd.f32 %v1623, %v1624
    %v1626 = vrot.slane %v1603, 4
    %v1627 = vadd.f32 %v1603, %v1626
    %v1628 = vrot.slane %v1627, 2
    %v1629 = vadd.f32 %v1627, %v1628
    %v1630 = vrot.slane %v1629, 1
    %v1631 = vadd.f32 %v1629, %v1630
    %v1632 = vrot.slane %v1605, 4
    %v1633 = vadd.f32 %v1605, %v1632
    %v1634 = vrot.slane %v1633, 2
    %v1635 = vadd.f32 %v1633, %v1634
    %v1636 = vrot.slane %v1635, 1
    %v1637 = vadd.f32 %v1635, %v1636
    %v1638 = vrot.slane %v1607, 4
    %v1639 = vadd.f32 %v1607, %v1638
    %v1640 = vrot.slane %v1639, 2
    %v1641 = vadd.f32 %v1639, %v1640
    %v1642 = vrot.slane %v1641, 1
    %v1643 = vadd.f32 %v1641, %v1642
    %v1644 = vrot.slane %v1609, 4
    %v1645 = vadd.f32 %v1609, %v1644
    %v1646 = vrot.slane %v1645, 2
    %v1647 = vadd.f32 %v1645, %v1646
    %v1648 = vrot.slane %v1647, 1
    %v1649 = vadd.f32 %v1647, %v1648
    %v1650 = vrot.slane %v1611, 4
    %v1651 = vadd.f32 %v1611, %v1650
    %v1652 = vrot.slane %v1651, 2
    %v1653 = vadd.f32 %v1651, %v1652
    %v1654 = vrot.slane %v1653, 1
    %v1655 = vadd.f32 %v1653, %v1654
    %v1656 = vrot.slane %v1613, 4
    %v1657 = vadd.f32 %v1613, %v1656
    %v1658 = vrot.slane %v1657, 2
    %v1659 = vadd.f32 %v1657, %v1658
    %v1660 = vrot.slane %v1659, 1
    %v1661 = vadd.f32 %v1659, %v1660
    %v1662 = vrcp.pop %v1619
    %v1663 = vrcp.pop %v1625
    %v1664 = vrcp.pop %v1631
    %v1665 = vrcp.pop %v1637
    %v1666 = vrcp.pop %v1643
    %v1667 = vrcp.pop %v1649
    %v1668 = vrcp.pop %v1655
    %v1669 = vrcp.pop %v1661
    %v1670 = vmul.f32 %v1599, %v1662
    %v1671 = vmul.f32 %v1601, %v1663
    %v1672 = vmul.f32 %v1603, %v1664
    %v1673 = vmul.f32 %v1605, %v1665
    %v1674 = vmul.f32 %v1607, %v1666
    %v1675 = vmul.f32 %v1609, %v1667
    %v1676 = vmul.f32 %v1611, %v1668
    %v1677 = vmul.f32 %v1613, %v1669
    %v1678 = vmul.f32 %v1670, %v1269
    %v1679 = vmul.f32 %v1671, %v1269
    %v1680 = vmul.f32 %v1672, %v1269
    %v1681 = vmul.f32 %v1673, %v1269
    %v1682 = vmul.f32 %v1674, %v1269
    %v1683 = vmul.f32 %v1675, %v1269
    %v1684 = vmul.f32 %v1676, %v1269
    %v1685 = vmul.f32 %v1677, %v1269
    %v1686 = vrot.slane %v1678, 4
    %v1687 = vadd.f32 %v1678, %v1686
    %v1688 = vrot.slane %v1687, 2
    %v1689 = vadd.f32 %v1687, %v1688
    %v1690 = vrot.slane %v1689, 1
    %v1691 = vadd.f32 %v1689, %v1690
    %v1692 = vrot.slane %v1679, 4
    %v1693 = vadd.f32 %v1679, %v1692
    %v1694 = vrot.slane %v1693, 2
    %v1695 = vadd.f32 %v1693, %v1694
    %v1696 = vrot.slane %v1695, 1
    %v1697 = vadd.f32 %v1695, %v1696
    %v1698 = vrot.slane %v1680, 4
    %v1699 = vadd.f32 %v1680, %v1698
    %v1700 = vrot.slane %v1699, 2
    %v1701 = vadd.f32 %v1699, %v1700
    %v1702 = vrot.slane %v1701, 1
    %v1703 = vadd.f32 %v1701, %v1702
    %v1704 = vrot.slane %v1681, 4
    %v1705 = vadd.f32 %v1681, %v1704
    %v1706 = vrot.slane %v1705, 2
    %v1707 = vadd.f32 %v1705, %v1706
    %v1708 = vrot.slane %v1707, 1
    %v1709 = vadd.f32 %v1707, %v1708
    %v1710 = vrot.slane %v1682, 4
    %v1711 = vadd.f32 %v1682, %v1710
    %v1712 = vrot.slane %v1711, 2
    %v1713 = vadd.f32 %v1711, %v1712
    %v1714 = vrot.slane %v1713, 1
    %v1715 = vadd.f32 %v1713, %v1714
    %v1716 = vrot.slane %v1683, 4
    %v1717 = vadd.f32 %v1683, %v1716
    %v1718 = vrot.slane %v1717, 2
    %v1719 = vadd.f32 %v1717, %v1718
    %v1720 = vrot.slane %v1719, 1
    %v1721 = vadd.f32 %v1719, %v1720
    %v1722 = vrot.slane %v1684, 4
    %v1723 = vadd.f32 %v1684, %v1722
    %v1724 = vrot.slane %v1723, 2
    %v1725 = vadd.f32 %v1723, %v1724
    %v1726 = vrot.slane %v1725, 1
    %v1727 = vadd.f32 %v1725, %v1726
    %v1728 = vrot.slane %v1685, 4
    %v1729 = vadd.f32 %v1685, %v1728
    %v1730 = vrot.slane %v1729, 2
    %v1731 = vadd.f32 %v1729, %v1730
    %v1732 = vrot.slane %v1731, 1
    %v1733 = vadd.f32 %v1731, %v1732
    %v1735 = vlaneseq
    %v1736 = vshrl.u32 %v1735, 7
    %v1737 = vsub.s32 0, %v1736
    %v1738 = vrot.slane %v1095, %v1737
    %v1740 = vadd.f32 %v1691, %v1738
    %v1741 = vadd.f32 %v1697, %v1738
    %v1742 = vadd.f32 %v1703, %v1738
    %v1743 = vadd.f32 %v1709, %v1738
    %v1744 = vadd.f32 %v1715, %v1738
    %v1745 = vadd.f32 %v1721, %v1738
    %v1746 = vadd.f32 %v1727, %v1738
    %v1747 = vadd.f32 %v1733, %v1738
    %v1748 = vmax.f32 %v1740, 0.0
    %v1749 = vmax.f32 %v1741, 0.0
    %v1750 = vmax.f32 %v1742, 0.0
    %v1751 = vmax.f32 %v1743, 0.0
    %v1752 = vmax.f32 %v1744, 0.0
    %v1753 = vmax.f32 %v1745, 0.0
    %v1754 = vmax.f32 %v1746, 0.0
    %v1755 = vmax.f32 %v1747, 0.0
    %v1764 = vrot.slane %v1749, 7
    %v1765 = vsel %vm1132, %v1764, %v1748
    %v1766 = vrot.slane %v1750, 6
    %v1767 = vsel %vm1135, %v1766, %v1765
    %v1768 = vrot.slane %v1751, 5
    %v1769 = vsel %vm1138, %v1768, %v1767
    %v1770 = vrot.slane %v1752, 4
    %v1771 = vsel %vm1141, %v1770, %v1769
    %v1772 = vrot.slane %v1753, 3
    %v1773 = vsel %vm1144, %v1772, %v1771
    %v1774 = vrot.slane %v1754, 2
    %v1775 = vsel %vm1147, %v1774, %v1773
    %v1776 = vrot.slane %v1755, 1
    %v1777 = vsel %vm1150, %v1776, %v1775
    %1779 = vst [vmem:[#allocation31] sm:$0xff] %v1777
    %v1780 = vld [vmem:[#allocation20] sm:$0xff]
    %v1781 = vld [vmem:[#allocation20 + $0x8] sm:$0xff]
    %v1782 = vld [vmem:[#allocation20 + $0x10] sm:$0xff]
    %v1783 = vld [vmem:[#allocation20 + $0x18] sm:$0xff]
    %v1784 = vld [vmem:[#allocation20 + $0x20] sm:$0xff]
    %v1785 = vld [vmem:[#allocation20 + $0x28] sm:$0xff]
    %v1786 = vld [vmem:[#allocation20 + $0x30] sm:$0xff]
    %v1787 = vld [vmem:[#allocation20 + $0x38] sm:$0xff]
    %v1788 = vld [vmem:[#allocation20 + $0x40] sm:$0xff]
    %v1789 = vld [vmem:[#allocation20 + $0x48] sm:$0xff]
    %v1790 = vld [vmem:[#allocation20 + $0x50] sm:$0xff]
    %v1791 = vld [vmem:[#allocation20 + $0x58] sm:$0xff]
    %v1792 = vld [vmem:[#allocation20 + $0x60] sm:$0xff]
    %v1793 = vld [vmem:[#allocation20 + $0x68] sm:$0xff]
    %v1794 = vld [vmem:[#allocation20 + $0x70] sm:$0xff]
    %v1795 = vld [vmem:[#allocation20 + $0x78] sm:$0xff]
    %v1796 = vld [vmem:[#allocation22] sm:$0x3]
    %v1797 = vld [vmem:[%s29] sm:$0xf]
    %v1798 = vld [vmem:[%s29 + $0x4] sm:$0xf]
    %v1799 = vld [vmem:[%s29 + $0x8] sm:$0xf]
    %v1800 = vld [vmem:[%s29 + $0xc] sm:$0xf]
    %v1801 = vld [vmem:[%s29 + $0x10] sm:$0xf]
    %v1802 = vld [vmem:[%s29 + $0x14] sm:$0xf]
    %v1803 = vld [vmem:[%s29 + $0x18] sm:$0xf]
    %v1804 = vld [vmem:[%s29 + $0x1c] sm:$0xf]
    %v1805 = vld [vmem:[%s29 + $0x20] sm:$0xf]
    %v1806 = vld [vmem:[%s29 + $0x24] sm:$0xf]
    %v1807 = vld [vmem:[%s29 + $0x28] sm:$0xf]
    %v1808 = vld [vmem:[%s29 + $0x2c] sm:$0xf]
    %v1809 = vld [vmem:[%s29 + $0x30] sm:$0xf]
    %v1810 = vld [vmem:[%s29 + $0x34] sm:$0xf]
    %v1811 = vld [vmem:[%s29 + $0x38] sm:$0xf]
    %v1812 = vld [vmem:[%s29 + $0x3c] sm:$0xf]
    %v1813 = vld [vmem:[#allocation23] sm:$0x1]
    %v1814 = vpack.c.bf16 %v1748, %v1748
    %v1815 = vpack.c.bf16 %v1749, %v1749
    %v1816 = vpack.c.bf16 %v1750, %v1750
    %v1817 = vpack.c.bf16 %v1751, %v1751
    %v1818 = vpack.c.bf16 %v1752, %v1752
    %v1819 = vpack.c.bf16 %v1753, %v1753
    %v1820 = vpack.c.bf16 %v1754, %v1754
    %v1821 = vpack.c.bf16 %v1755, %v1755
    %v1823 = vlaneseq
    %v1824 = vshrl.u32 %v1823, 7
    %v1825 = vsub.s32 0, %v1824
    %v1826 = vrot.slane %v1796, %v1825
    %v1827 = vlaneseq
    %v1828 = vshrl.u32 %v1827, 7
    %v1829 = vsub.s32 1, %v1828
    %v1830 = vrot.slane %v1796, %v1829
    %v1841 = vunpack.c.l.b16 %v1814
    %v1842 = vunpack.c.l.b16 %v1815
    %v1843 = vunpack.c.l.b16 %v1816
    %v1844 = vunpack.c.l.b16 %v1817
    %v1845 = vunpack.c.l.b16 %v1818
    %v1846 = vunpack.c.l.b16 %v1819
    %v1847 = vunpack.c.l.b16 %v1820
    %v1848 = vunpack.c.l.b16 %v1821
    %v1849 = vrot.slane %v1842, 7
    %v1850 = vsel %vm1132, %v1849, %v1841
    %v1851 = vrot.slane %v1843, 6
    %v1852 = vsel %vm1135, %v1851, %v1850
    %v1853 = vrot.slane %v1844, 5
    %v1854 = vsel %vm1138, %v1853, %v1852
    %v1855 = vrot.slane %v1845, 4
    %v1856 = vsel %vm1141, %v1855, %v1854
    %v1857 = vrot.slane %v1846, 3
    %v1858 = vsel %vm1144, %v1857, %v1856
    %v1859 = vrot.slane %v1847, 2
    %v1860 = vsel %vm1147, %v1859, %v1858
    %v1861 = vrot.slane %v1848, 1
    %v1862 = vsel %vm1150, %v1861, %v1860
    %v1863 = vpack.c.b16 %v1862, %v1862
    %v1881 = vunpack.c.l.b16 %v1780
    %v1882 = vunpack.c.h.b16 %v1780
    %v1883 = vunpack.c.l.b16 %v1781
    %v1884 = vunpack.c.h.b16 %v1781
    %v1885 = vunpack.c.l.b16 %v1782
    %v1886 = vunpack.c.h.b16 %v1782
    %v1887 = vunpack.c.l.b16 %v1783
    %v1888 = vunpack.c.h.b16 %v1783
    %v1889 = vunpack.c.l.b16 %v1784
    %v1890 = vunpack.c.h.b16 %v1784
    %v1891 = vunpack.c.l.b16 %v1785
    %v1892 = vunpack.c.h.b16 %v1785
    %v1893 = vunpack.c.l.b16 %v1786
    %v1894 = vunpack.c.h.b16 %v1786
    %v1895 = vunpack.c.l.b16 %v1787
    %v1896 = vunpack.c.h.b16 %v1787
    %v1897 = vunpack.c.l.b16 %v1788
    %v1898 = vunpack.c.h.b16 %v1788
    %v1899 = vunpack.c.l.b16 %v1789
    %v1900 = vunpack.c.h.b16 %v1789
    %v1901 = vunpack.c.l.b16 %v1790
    %v1902 = vunpack.c.h.b16 %v1790
    %v1903 = vunpack.c.l.b16 %v1791
    %v1904 = vunpack.c.h.b16 %v1791
    %v1905 = vunpack.c.l.b16 %v1792
    %v1906 = vunpack.c.h.b16 %v1792
    %v1907 = vunpack.c.l.b16 %v1793
    %v1908 = vunpack.c.h.b16 %v1793
    %v1909 = vunpack.c.l.b16 %v1794
    %v1910 = vunpack.c.h.b16 %v1794
    %v1911 = vunpack.c.l.b16 %v1795
    %v1912 = vunpack.c.h.b16 %v1795
    %v1913 = vpack.c.b16 %v1883, %v1881
    %v1914 = vpack.c.b16 %v1884, %v1882
    %v1915 = vpack.c.b16 %v1887, %v1885
    %v1916 = vpack.c.b16 %v1888, %v1886
    %v1917 = vpack.c.b16 %v1891, %v1889
    %v1918 = vpack.c.b16 %v1892, %v1890
    %v1919 = vpack.c.b16 %v1895, %v1893
    %v1920 = vpack.c.b16 %v1896, %v1894
    %v1921 = vpack.c.b16 %v1899, %v1897
    %v1922 = vpack.c.b16 %v1900, %v1898
    %v1923 = vpack.c.b16 %v1903, %v1901
    %v1924 = vpack.c.b16 %v1904, %v1902
    %v1925 = vpack.c.b16 %v1907, %v1905
    %v1926 = vpack.c.b16 %v1908, %v1906
    %v1927 = vpack.c.b16 %v1911, %v1909
    %v1928 = vpack.c.b16 %v1912, %v1910
    %1945 = vmatprep.subr.bf16.mxu0 %v1914
    %1946 = vmatpush1.bf16.msra.mxu0 %v1913
    %1947 = vmatprep.subr.bf16.mxu0 %v1916
    %1948 = vmatpush1.bf16.msra.mxu0 %v1915
    %1949 = vmatprep.subr.bf16.mxu0 %v1918
    %1950 = vmatpush1.bf16.msra.mxu0 %v1917
    %1951 = vmatprep.subr.bf16.mxu0 %v1920
    %1952 = vmatpush1.bf16.msra.mxu0 %v1919
    %1953 = vmatprep.subr.bf16.mxu0 %v1922
    %1954 = vmatpush1.bf16.msra.mxu0 %v1921
    %1955 = vmatprep.subr.bf16.mxu0 %v1924
    %1956 = vmatpush1.bf16.msra.mxu0 %v1923
    %1957 = vmatprep.subr.bf16.mxu0 %v1926
    %1958 = vmatpush1.bf16.msra.mxu0 %v1925
    %1959 = vmatprep.subr.bf16.mxu0 %v1928
    %1960 = vmatpush1.bf16.msra.mxu0 %v1927
    %1961 = vmatprep.subr.bf16.mxu0 0
    %1962 = vmatpush1.bf16.msra.mxu0 0
    %1963 = vmatprep.subr.bf16.mxu0 0
    %1964 = vmatpush1.bf16.msra.mxu0 0
    %1965 = vmatprep.subr.bf16.mxu0 0
    %1966 = vmatpush1.bf16.msra.mxu0 0
    %1967 = vmatprep.subr.bf16.mxu0 0
    %1968 = vmatpush1.bf16.msra.mxu0 0
    %1969 = vmatprep.subr.bf16.mxu0 0
    %1970 = vmatpush1.bf16.msra.mxu0 0
    %1971 = vmatprep.subr.bf16.mxu0 0
    %1972 = vmatpush1.bf16.msra.mxu0 0
    %1973 = vmatprep.subr.bf16.mxu0 0
    %1974 = vmatpush1.bf16.msra.mxu0 0
    %1975 = vmatprep.subr.bf16.mxu0 0
    %1976 = vmatpush1.bf16.msra.mxu0 0
    %1977 = vmatprep.mubr.bf16.mxu0 0
    %1978 = vmatmul.mubr.bf16.gmra.mrb[0].mxu0 %v1863
    %v1979 = vpop.f32.mrb[0].mxu0
    %v1980 = vadd.f32 %v1826, %v1979
    %v1981 = vpop.f32.mrb[0].mxu0
    %v1982 = vadd.f32 %v1830, %v1981
    %v1983 = vpop.f32.mrb[0].mxu0
    %v1984 = vpop.f32.mrb[0].mxu0
    %1985 = vdwg.mxu0
    %v1987 = vcombine.high %v1982, %v1982
    %v1989 = vunpack.c.l.s4 1966171168
    %v1990 = vunpack.c.0.s8 %v1989
    %v1991 = vlaneseq
    %v1992 = vshrl.u32 %v1991, 7
    %v1993 = vsub.s32 %v1990, %v1992
    %v1994 = vrot.slane %v1982, %v1993
    %v1996 = vunpack.c.l.s4 1966171168
    %v1997 = vunpack.c.0.s8 %v1996
    %v1998 = vlaneseq
    %v1999 = vshrl.u32 %v1998, 7
    %v2000 = vsub.s32 %v1997, %v1999
    %v2001 = vrot.slane %v1987, %v2000
    %v2002 = vcombine.high %v1994, %v1994
    %v2003 = vcombine.high %v2001, %v2001
    %v2005 = vunpack.c.l.s4 1966171168
    %v2006 = vunpack.c.0.s8 %v2005
    %v2007 = vlaneseq
    %v2008 = vshrl.u32 %v2007, 7
    %v2009 = vsub.s32 %v2006, %v2008
    %v2010 = vrot.slane %v1994, %v2009
    %v2012 = vunpack.c.l.s4 1966171168
    %v2013 = vunpack.c.0.s8 %v2012
    %v2014 = vlaneseq
    %v2015 = vshrl.u32 %v2014, 7
    %v2016 = vsub.s32 %v2013, %v2015
    %v2017 = vrot.slane %v2001, %v2016
    %v2019 = vunpack.c.l.s4 1966171168
    %v2020 = vunpack.c.0.s8 %v2019
    %v2021 = vlaneseq
    %v2022 = vshrl.u32 %v2021, 7
    %v2023 = vsub.s32 %v2020, %v2022
    %v2024 = vrot.slane %v2002, %v2023
    %v2026 = vunpack.c.l.s4 1966171168
    %v2027 = vunpack.c.0.s8 %v2026
    %v2028 = vlaneseq
    %v2029 = vshrl.u32 %v2028, 7
    %v2030 = vsub.s32 %v2027, %v2029
    %v2031 = vrot.slane %v2003, %v2030
    %v2032 = vcombine.high %v2010, %v2010
    %v2033 = vcombine.high %v2017, %v2017
    %v2034 = vcombine.high %v2024, %v2024
    %v2035 = vcombine.high %v2031, %v2031
    %v2036 = vlaneseq
    %v2037 = vshrl.u32 %v2036, 7
    %v2038 = vsub.s32 0, %v2037
    %v2039 = vrot.slane %v2010, %v2038
    %v2040 = vlaneseq
    %v2041 = vshrl.u32 %v2040, 7
    %v2042 = vsub.s32 0, %v2041
    %v2043 = vrot.slane %v2024, %v2042
    %v2044 = vlaneseq
    %v2045 = vshrl.u32 %v2044, 7
    %v2046 = vsub.s32 0, %v2045
    %v2047 = vrot.slane %v2032, %v2046
    %v2048 = vlaneseq
    %v2049 = vshrl.u32 %v2048, 7
    %v2050 = vsub.s32 0, %v2049
    %v2051 = vrot.slane %v2034, %v2050
    %v2052 = vlaneseq
    %v2053 = vshrl.u32 %v2052, 7
    %v2054 = vsub.s32 0, %v2053
    %v2055 = vrot.slane %v2017, %v2054
    %v2056 = vlaneseq
    %v2057 = vshrl.u32 %v2056, 7
    %v2058 = vsub.s32 0, %v2057
    %v2059 = vrot.slane %v2031, %v2058
    %v2060 = vlaneseq
    %v2061 = vshrl.u32 %v2060, 7
    %v2062 = vsub.s32 0, %v2061
    %v2063 = vrot.slane %v2033, %v2062
    %v2064 = vlaneseq
    %v2065 = vshrl.u32 %v2064, 7
    %v2066 = vsub.s32 0, %v2065
    %v2067 = vrot.slane %v2035, %v2066
    %v2076 = vadd.f32 %v2039, %v1980
    %v2077 = vadd.f32 %v2043, %v1980
    %v2078 = vadd.f32 %v2047, %v1980
    %v2079 = vadd.f32 %v2051, %v1980
    %v2080 = vadd.f32 %v2055, %v1980
    %v2081 = vadd.f32 %v2059, %v1980
    %v2082 = vadd.f32 %v2063, %v1980
    %v2083 = vadd.f32 %v2067, %v1980
    %v2084 = vmul.f32 %v2076, 0.2
    %v2085 = vmul.f32 %v2077, 0.2
    %v2086 = vmul.f32 %v2078, 0.2
    %v2087 = vmul.f32 %v2079, 0.2
    %v2088 = vmul.f32 %v2080, 0.2
    %v2089 = vmul.f32 %v2081, 0.2
    %v2090 = vmul.f32 %v2082, 0.2
    %v2091 = vmul.f32 %v2083, 0.2
    %v2092 = vmax.f32 %v2076, %v2084
    %v2093 = vmax.f32 %v2077, %v2085
    %v2094 = vmax.f32 %v2078, %v2086
    %v2095 = vmax.f32 %v2079, %v2087
    %v2096 = vmax.f32 %v2080, %v2088
    %v2097 = vmax.f32 %v2081, %v2089
    %v2098 = vmax.f32 %v2082, %v2090
    %v2099 = vmax.f32 %v2083, %v2091
    %v2100 = vpack.c.bf16 %v2092, %v2092
    %v2101 = vpack.c.bf16 %v2093, %v2093
    %v2102 = vpack.c.bf16 %v2094, %v2094
    %v2103 = vpack.c.bf16 %v2095, %v2095
    %v2104 = vpack.c.bf16 %v2096, %v2096
    %v2105 = vpack.c.bf16 %v2097, %v2097
    %v2106 = vpack.c.bf16 %v2098, %v2098
    %v2107 = vpack.c.bf16 %v2099, %v2099
    %v2116 = vunpack.c.l.b16 %v2100
    %v2117 = vunpack.c.l.b16 %v2101
    %v2118 = vunpack.c.l.b16 %v2102
    %v2119 = vunpack.c.l.b16 %v2103
    %v2120 = vunpack.c.l.b16 %v2104
    %v2121 = vunpack.c.l.b16 %v2105
    %v2122 = vunpack.c.l.b16 %v2106
    %v2123 = vunpack.c.l.b16 %v2107
    %v2124 = vpack.c.b16 %v2117, %v2116
    %v2125 = vpack.c.b16 %v2119, %v2118
    %v2126 = vpack.c.b16 %v2121, %v2120
    %v2127 = vpack.c.b16 %v2123, %v2122
    %v2148 = vunpack.c.l.b16 %v1797
    %v2149 = vunpack.c.l.b16 %v1798
    %v2150 = vunpack.c.l.b16 %v1799
    %v2151 = vunpack.c.l.b16 %v1800
    %v2152 = vunpack.c.l.b16 %v1801
    %v2153 = vunpack.c.l.b16 %v1802
    %v2154 = vunpack.c.l.b16 %v1803
    %v2155 = vunpack.c.l.b16 %v1804
    %v2156 = vunpack.c.l.b16 %v1805
    %v2157 = vunpack.c.l.b16 %v1806
    %v2158 = vunpack.c.l.b16 %v1807
    %v2159 = vunpack.c.l.b16 %v1808
    %v2160 = vunpack.c.l.b16 %v1809
    %v2161 = vunpack.c.l.b16 %v1810
    %v2162 = vunpack.c.l.b16 %v1811
    %v2163 = vunpack.c.l.b16 %v1812
    %v2164 = vpack.c.b16 %v2149, %v2148
    %v2165 = vpack.c.b16 %v2151, %v2150
    %v2166 = vpack.c.b16 %v2153, %v2152
    %v2167 = vpack.c.b16 %v2155, %v2154
    %v2168 = vpack.c.b16 %v2157, %v2156
    %v2169 = vpack.c.b16 %v2159, %v2158
    %v2170 = vpack.c.b16 %v2161, %v2160
    %v2171 = vpack.c.b16 %v2163, %v2162
    %2180 = vmatprep.subr.bf16.mxu0 0
    %2181 = vmatpush1.bf16.msra.mxu0 %v2164
    %2182 = vmatprep.subr.bf16.mxu0 0
    %2183 = vmatpush1.bf16.msra.mxu0 %v2165
    %2184 = vmatprep.subr.bf16.mxu0 0
    %2185 = vmatpush1.bf16.msra.mxu0 %v2166
    %2186 = vmatprep.subr.bf16.mxu0 0
    %2187 = vmatpush1.bf16.msra.mxu0 %v2167
    %2188 = vmatprep.subr.bf16.mxu0 0
    %2189 = vmatpush1.bf16.msra.mxu0 %v2168
    %2190 = vmatprep.subr.bf16.mxu0 0
    %2191 = vmatpush1.bf16.msra.mxu0 %v2169
    %2192 = vmatprep.subr.bf16.mxu0 0
    %2193 = vmatpush1.bf16.msra.mxu0 %v2170
    %2194 = vmatprep.subr.bf16.mxu0 0
    %2195 = vmatpush1.bf16.msra.mxu0 %v2171
    %2196 = vmatprep.subr.bf16.mxu0 0
    %2197 = vmatpush1.bf16.msra.mxu0 0
    %2198 = vmatprep.subr.bf16.mxu0 0
    %2199 = vmatpush1.bf16.msra.mxu0 0
    %2200 = vmatprep.subr.bf16.mxu0 0
    %2201 = vmatpush1.bf16.msra.mxu0 0
    %2202 = vmatprep.subr.bf16.mxu0 0
    %2203 = vmatpush1.bf16.msra.mxu0 0
    %2204 = vmatprep.subr.bf16.mxu0 0
    %2205 = vmatpush1.bf16.msra.mxu0 0
    %2206 = vmatprep.subr.bf16.mxu0 0
    %2207 = vmatpush1.bf16.msra.mxu0 0
    %2208 = vmatprep.subr.bf16.mxu0 0
    %2209 = vmatpush1.bf16.msra.mxu0 0
    %2210 = vmatprep.subr.bf16.mxu0 0
    %2211 = vmatpush1.bf16.msra.mxu0 0
    %2212 = vmatprep.mubr.bf16.mxu0 0
    %2213 = vmatmul.mubr.bf16.gmra.mrb[0].mxu0 %v2124
    %v2214 = vpop.f32.mrb[0].mxu0
    %v2215 = vadd.f32 0.0, %v2214
    %v2216 = vpop.f32.mrb[0].mxu0
    %v2217 = vpop.f32.mrb[0].mxu0
    %v2218 = vadd.f32 0.0, %v2217
    %v2219 = vpop.f32.mrb[0].mxu0
    %2220 = vmatprep.mubr.bf16.mxu0 0
    %2221 = vmatmul.mubr.bf16.gmra.mrb[0].mxu0 %v2125
    %v2222 = vpop.f32.mrb[0].mxu0
    %v2223 = vadd.f32 0.0, %v2222
    %v2224 = vpop.f32.mrb[0].mxu0
    %v2225 = vpop.f32.mrb[0].mxu0
    %v2226 = vadd.f32 0.0, %v2225
    %v2227 = vpop.f32.mrb[0].mxu0
    %2228 = vmatprep.mubr.bf16.mxu0 0
    %2229 = vmatmul.mubr.bf16.gmra.mrb[0].mxu0 %v2126
    %v2230 = vpop.f32.mrb[0].mxu0
    %v2231 = vadd.f32 0.0, %v2230
    %v2232 = vpop.f32.mrb[0].mxu0
    %v2233 = vpop.f32.mrb[0].mxu0
    %v2234 = vadd.f32 0.0, %v2233
    %v2235 = vpop.f32.mrb[0].mxu0
    %2236 = vmatprep.mubr.bf16.mxu0 0
    %2237 = vmatmul.mubr.bf16.gmra.mrb[0].mxu0 %v2127
    %v2238 = vpop.f32.mrb[0].mxu0
    %v2239 = vadd.f32 0.0, %v2238
    %v2240 = vpop.f32.mrb[0].mxu0
    %v2241 = vpop.f32.mrb[0].mxu0
    %v2242 = vadd.f32 0.0, %v2241
    %v2243 = vpop.f32.mrb[0].mxu0
    %2244 = vdwg.mxu0
    %v2245 = vadd.f32 %v2215, %v790
    %v2246 = vadd.f32 %v2218, %v797
    %v2247 = vadd.f32 %v2223, %v804
    %v2248 = vadd.f32 %v2226, %v811
    %v2249 = vadd.f32 %v2231, %v818
    %v2250 = vadd.f32 %v2234, %v825
    %v2251 = vadd.f32 %v2239, %v832
    %v2252 = vadd.f32 %v2242, %v839
    %v2253 = vrot.slane %v2245, 4
    %v2254 = vmax.f32 %v2245, %v2253
    %v2255 = vrot.slane %v2254, 2
    %v2256 = vmax.f32 %v2254, %v2255
    %v2257 = vrot.slane %v2256, 1
    %v2258 = vmax.f32 %v2256, %v2257
    %v2259 = vrot.slane %v2246, 4
    %v2260 = vmax.f32 %v2246, %v2259
    %v2261 = vrot.slane %v2260, 2
    %v2262 = vmax.f32 %v2260, %v2261
    %v2263 = vrot.slane %v2262, 1
    %v2264 = vmax.f32 %v2262, %v2263
    %v2265 = vrot.slane %v2247, 4
    %v2266 = vmax.f32 %v2247, %v2265
    %v2267 = vrot.slane %v2266, 2
    %v2268 = vmax.f32 %v2266, %v2267
    %v2269 = vrot.slane %v2268, 1
    %v2270 = vmax.f32 %v2268, %v2269
    %v2271 = vrot.slane %v2248, 4
    %v2272 = vmax.f32 %v2248, %v2271
    %v2273 = vrot.slane %v2272, 2
    %v2274 = vmax.f32 %v2272, %v2273
    %v2275 = vrot.slane %v2274, 1
    %v2276 = vmax.f32 %v2274, %v2275
    %v2277 = vrot.slane %v2249, 4
    %v2278 = vmax.f32 %v2249, %v2277
    %v2279 = vrot.slane %v2278, 2
    %v2280 = vmax.f32 %v2278, %v2279
    %v2281 = vrot.slane %v2280, 1
    %v2282 = vmax.f32 %v2280, %v2281
    %v2283 = vrot.slane %v2250, 4
    %v2284 = vmax.f32 %v2250, %v2283
    %v2285 = vrot.slane %v2284, 2
    %v2286 = vmax.f32 %v2284, %v2285
    %v2287 = vrot.slane %v2286, 1
    %v2288 = vmax.f32 %v2286, %v2287
    %v2289 = vrot.slane %v2251, 4
    %v2290 = vmax.f32 %v2251, %v2289
    %v2291 = vrot.slane %v2290, 2
    %v2292 = vmax.f32 %v2290, %v2291
    %v2293 = vrot.slane %v2292, 1
    %v2294 = vmax.f32 %v2292, %v2293
    %v2295 = vrot.slane %v2252, 4
    %v2296 = vmax.f32 %v2252, %v2295
    %v2297 = vrot.slane %v2296, 2
    %v2298 = vmax.f32 %v2296, %v2297
    %v2299 = vrot.slane %v2298, 1
    %v2300 = vmax.f32 %v2298, %v2299
    %v2301 = vsub.f32 %v2245, %v2258
    %v2302 = vsub.f32 %v2246, %v2264
    %v2303 = vsub.f32 %v2247, %v2270
    %v2304 = vsub.f32 %v2248, %v2276
    %v2305 = vsub.f32 %v2249, %v2282
    %v2306 = vsub.f32 %v2250, %v2288
    %v2307 = vsub.f32 %v2251, %v2294
    %v2308 = vsub.f32 %v2252, %v2300
    %v2309 = vmul.f32 %v2301, 1.442695
    %v2310 = vpow.pop %v2309
    %v2311 = vmul.f32 %v2302, 1.442695
    %v2312 = vpow.pop %v2311
    %v2313 = vmul.f32 %v2303, 1.442695
    %v2314 = vpow.pop %v2313
    %v2315 = vmul.f32 %v2304, 1.442695
    %v2316 = vpow.pop %v2315
    %v2317 = vmul.f32 %v2305, 1.442695
    %v2318 = vpow.pop %v2317
    %v2319 = vmul.f32 %v2306, 1.442695
    %v2320 = vpow.pop %v2319
    %v2321 = vmul.f32 %v2307, 1.442695
    %v2322 = vpow.pop %v2321
    %v2323 = vmul.f32 %v2308, 1.442695
    %v2324 = vpow.pop %v2323
    %v2325 = vrot.slane %v2310, 4
    %v2326 = vadd.f32 %v2310, %v2325
    %v2327 = vrot.slane %v2326, 2
    %v2328 = vadd.f32 %v2326, %v2327
    %v2329 = vrot.slane %v2328, 1
    %v2330 = vadd.f32 %v2328, %v2329
    %v2331 = vrot.slane %v2312, 4
    %v2332 = vadd.f32 %v2312, %v2331
    %v2333 = vrot.slane %v2332, 2
    %v2334 = vadd.f32 %v2332, %v2333
    %v2335 = vrot.slane %v2334, 1
    %v2336 = vadd.f32 %v2334, %v2335
    %v2337 = vrot.slane %v2314, 4
    %v2338 = vadd.f32 %v2314, %v2337
    %v2339 = vrot.slane %v2338, 2
    %v2340 = vadd.f32 %v2338, %v2339
    %v2341 = vrot.slane %v2340, 1
    %v2342 = vadd.f32 %v2340, %v2341
    %v2343 = vrot.slane %v2316, 4
    %v2344 = vadd.f32 %v2316, %v2343
    %v2345 = vrot.slane %v2344, 2
    %v2346 = vadd.f32 %v2344, %v2345
    %v2347 = vrot.slane %v2346, 1
    %v2348 = vadd.f32 %v2346, %v2347
    %v2349 = vrot.slane %v2318, 4
    %v2350 = vadd.f32 %v2318, %v2349
    %v2351 = vrot.slane %v2350, 2
    %v2352 = vadd.f32 %v2350, %v2351
    %v2353 = vrot.slane %v2352, 1
    %v2354 = vadd.f32 %v2352, %v2353
    %v2355 = vrot.slane %v2320, 4
    %v2356 = vadd.f32 %v2320, %v2355
    %v2357 = vrot.slane %v2356, 2
    %v2358 = vadd.f32 %v2356, %v2357
    %v2359 = vrot.slane %v2358, 1
    %v2360 = vadd.f32 %v2358, %v2359
    %v2361 = vrot.slane %v2322, 4
    %v2362 = vadd.f32 %v2322, %v2361
    %v2363 = vrot.slane %v2362, 2
    %v2364 = vadd.f32 %v2362, %v2363
    %v2365 = vrot.slane %v2364, 1
    %v2366 = vadd.f32 %v2364, %v2365
    %v2367 = vrot.slane %v2324, 4
    %v2368 = vadd.f32 %v2324, %v2367
    %v2369 = vrot.slane %v2368, 2
    %v2370 = vadd.f32 %v2368, %v2369
    %v2371 = vrot.slane %v2370, 1
    %v2372 = vadd.f32 %v2370, %v2371
    %v2373 = vrcp.pop %v2330
    %v2374 = vrcp.pop %v2336
    %v2375 = vrcp.pop %v2342
    %v2376 = vrcp.pop %v2348
    %v2377 = vrcp.pop %v2354
    %v2378 = vrcp.pop %v2360
    %v2379 = vrcp.pop %v2366
    %v2380 = vrcp.pop %v2372
    %v2381 = vmul.f32 %v2310, %v2373
    %v2382 = vmul.f32 %v2312, %v2374
    %v2383 = vmul.f32 %v2314, %v2375
    %v2384 = vmul.f32 %v2316, %v2376
    %v2385 = vmul.f32 %v2318, %v2377
    %v2386 = vmul.f32 %v2320, %v2378
    %v2387 = vmul.f32 %v2322, %v2379
    %v2388 = vmul.f32 %v2324, %v2380
    %v2389 = vmul.f32 %v2381, %v1980
    %v2390 = vmul.f32 %v2382, %v1980
    %v2391 = vmul.f32 %v2383, %v1980
    %v2392 = vmul.f32 %v2384, %v1980
    %v2393 = vmul.f32 %v2385, %v1980
    %v2394 = vmul.f32 %v2386, %v1980
    %v2395 = vmul.f32 %v2387, %v1980
    %v2396 = vmul.f32 %v2388, %v1980
    %v2397 = vrot.slane %v2389, 4
    %v2398 = vadd.f32 %v2389, %v2397
    %v2399 = vrot.slane %v2398, 2
    %v2400 = vadd.f32 %v2398, %v2399
    %v2401 = vrot.slane %v2400, 1
    %v2402 = vadd.f32 %v2400, %v2401
    %v2403 = vrot.slane %v2390, 4
    %v2404 = vadd.f32 %v2390, %v2403
    %v2405 = vrot.slane %v2404, 2
    %v2406 = vadd.f32 %v2404, %v2405
    %v2407 = vrot.slane %v2406, 1
    %v2408 = vadd.f32 %v2406, %v2407
    %v2409 = vrot.slane %v2391, 4
    %v2410 = vadd.f32 %v2391, %v2409
    %v2411 = vrot.slane %v2410, 2
    %v2412 = vadd.f32 %v2410, %v2411
    %v2413 = vrot.slane %v2412, 1
    %v2414 = vadd.f32 %v2412, %v2413
    %v2415 = vrot.slane %v2392, 4
    %v2416 = vadd.f32 %v2392, %v2415
    %v2417 = vrot.slane %v2416, 2
    %v2418 = vadd.f32 %v2416, %v2417
    %v2419 = vrot.slane %v2418, 1
    %v2420 = vadd.f32 %v2418, %v2419
    %v2421 = vrot.slane %v2393, 4
    %v2422 = vadd.f32 %v2393, %v2421
    %v2423 = vrot.slane %v2422, 2
    %v2424 = vadd.f32 %v2422, %v2423
    %v2425 = vrot.slane %v2424, 1
    %v2426 = vadd.f32 %v2424, %v2425
    %v2427 = vrot.slane %v2394, 4
    %v2428 = vadd.f32 %v2394, %v2427
    %v2429 = vrot.slane %v2428, 2
    %v2430 = vadd.f32 %v2428, %v2429
    %v2431 = vrot.slane %v2430, 1
    %v2432 = vadd.f32 %v2430, %v2431
    %v2433 = vrot.slane %v2395, 4
    %v2434 = vadd.f32 %v2395, %v2433
    %v2435 = vrot.slane %v2434, 2
    %v2436 = vadd.f32 %v2434, %v2435
    %v2437 = vrot.slane %v2436, 1
    %v2438 = vadd.f32 %v2436, %v2437
    %v2439 = vrot.slane %v2396, 4
    %v2440 = vadd.f32 %v2396, %v2439
    %v2441 = vrot.slane %v2440, 2
    %v2442 = vadd.f32 %v2440, %v2441
    %v2443 = vrot.slane %v2442, 1
    %v2444 = vadd.f32 %v2442, %v2443
    %v2446 = vlaneseq
    %v2447 = vshrl.u32 %v2446, 7
    %v2448 = vsub.s32 0, %v2447
    %v2449 = vrot.slane %v1813, %v2448
    %v2451 = vadd.f32 %v2402, %v2449
    %v2452 = vadd.f32 %v2408, %v2449
    %v2453 = vadd.f32 %v2414, %v2449
    %v2454 = vadd.f32 %v2420, %v2449
    %v2455 = vadd.f32 %v2426, %v2449
    %v2456 = vadd.f32 %v2432, %v2449
    %v2457 = vadd.f32 %v2438, %v2449
    %v2458 = vadd.f32 %v2444, %v2449
    %v2459 = vmax.f32 %v2451, 0.0
    %v2460 = vmax.f32 %v2452, 0.0
    %v2461 = vmax.f32 %v2453, 0.0
    %v2462 = vmax.f32 %v2454, 0.0
    %v2463 = vmax.f32 %v2455, 0.0
    %v2464 = vmax.f32 %v2456, 0.0
    %v2465 = vmax.f32 %v2457, 0.0
    %v2466 = vmax.f32 %v2458, 0.0
    %v2475 = vrot.slane %v2460, 7
    %v2476 = vsel %vm1132, %v2475, %v2459
    %v2477 = vrot.slane %v2461, 6
    %v2478 = vsel %vm1135, %v2477, %v2476
    %v2479 = vrot.slane %v2462, 5
    %v2480 = vsel %vm1138, %v2479, %v2478
    %v2481 = vrot.slane %v2463, 4
    %v2482 = vsel %vm1141, %v2481, %v2480
    %v2483 = vrot.slane %v2464, 3
    %v2484 = vsel %vm1144, %v2483, %v2482
    %v2485 = vrot.slane %v2465, 2
    %v2486 = vsel %vm1147, %v2485, %v2484
    %v2487 = vrot.slane %v2466, 1
    %v2488 = vsel %vm1150, %v2487, %v2486
    %2490 = vst [vmem:[#allocation32] sm:$0xff] %v2488
    %v2491 = vld [vmem:[%s35] sm:$0xf]
    %v2492 = vld [vmem:[%s35 + $0x4] sm:$0xf]
    %v2493 = vunpack.c.l.bf16 %v2491
    %v2494 = vunpack.c.l.bf16 %v2492
    %v2495 = vld [vmem:[%s33] sm:$0xff]
    %v2496 = vld [vmem:[%s33 + $0x8] sm:$0xff]
    %v2497 = vpack.c.bf16 %v2496, %v2495
    %v2498 = vld [vmem:[%s37] sm:$0x1]
    %v2499 = vld [vmem:[%s39] sm:$0x1]
    %v2501 = vlaneseq
    %v2502 = vshrl.u32 %v2501, 7
    %v2503 = vsub.s32 0, %v2502
    %v2504 = vrot.slane %v2499, %v2503
    %vm2506 = vcmask 15360
    %v2508 = vsel %vm2506, %v2497, 0
    %vm2510 = vcmask 1040384
    %v2512 = vsel %vm2510, %v2498, 0
    %2514 = vmatprep.subr.bf16.mxu0 0
    %2515 = vmatpush1.bf16.msra.mxu0 %v2512
    %2516 = vmatprep.subr.bf16.mxu0 0
    %2517 = vmatpush1.bf16.msra.mxu0 0
    %2518 = vmatprep.subr.bf16.mxu0 0
    %2519 = vmatpush1.bf16.msra.mxu0 0
    %2520 = vmatprep.subr.bf16.mxu0 0
    %2521 = vmatpush1.bf16.msra.mxu0 0
    %2522 = vmatprep.subr.bf16.mxu0 0
    %2523 = vmatpush1.bf16.msra.mxu0 0
    %2524 = vmatprep.subr.bf16.mxu0 0
    %2525 = vmatpush1.bf16.msra.mxu0 0
    %2526 = vmatprep.subr.bf16.mxu0 0
    %2527 = vmatpush1.bf16.msra.mxu0 0
    %2528 = vmatprep.subr.bf16.mxu0 0
    %2529 = vmatpush1.bf16.msra.mxu0 0
    %2530 = vmatprep.subr.bf16.mxu0 0
    %2531 = vmatpush1.bf16.msra.mxu0 0
    %2532 = vmatprep.subr.bf16.mxu0 0
    %2533 = vmatpush1.bf16.msra.mxu0 0
    %2534 = vmatprep.subr.bf16.mxu0 0
    %2535 = vmatpush1.bf16.msra.mxu0 0
    %2536 = vmatprep.subr.bf16.mxu0 0
    %2537 = vmatpush1.bf16.msra.mxu0 0
    %2538 = vmatprep.subr.bf16.mxu0 0
    %2539 = vmatpush1.bf16.msra.mxu0 0
    %2540 = vmatprep.subr.bf16.mxu0 0
    %2541 = vmatpush1.bf16.msra.mxu0 0
    %2542 = vmatprep.subr.bf16.mxu0 0
    %2543 = vmatpush1.bf16.msra.mxu0 0
    %2544 = vmatprep.subr.bf16.mxu0 0
    %2545 = vmatpush1.bf16.msra.mxu0 0
    %2546 = vmatprep.mubr.bf16.mxu0 0
    %2547 = vmatmul.mubr.bf16.gmra.mrb[0].mxu0 %v2508
    %v2548 = vpop.f32.mrb[0].mxu0
    %v2549 = vadd.f32 %v2504, %v2548
    %v2550 = vpop.f32.mrb[0].mxu0
    %v2551 = vpop.f32.mrb[0].mxu0
    %v2552 = vadd.f32 %v2504, %v2551
    %v2553 = vpop.f32.mrb[0].mxu0
    %2554 = vdwg.mxu0
    %v2555 = vmax.f32 %v2549, 0.0
    %v2556 = vmax.f32 %v2552, 0.0
    %v2557 = vld [vmem:[#allocation25] sm:$0xff]
    %v2558 = vld [vmem:[#allocation25 + $0x8] sm:$0xff]
    %v2559 = vld [vmem:[#allocation25 + $0x10] sm:$0xff]
    %v2560 = vld [vmem:[#allocation25 + $0x18] sm:$0xff]
    %v2561 = vld [vmem:[%s43] sm:$0x3]
    %v2562 = vld [vmem:[#allocation26] sm:$0xf]
    %v2563 = vld [vmem:[#allocation26 + $0x4] sm:$0xf]
    %v2564 = vld [vmem:[#allocation26 + $0x8] sm:$0xf]
    %v2565 = vld [vmem:[#allocation26 + $0xc] sm:$0xf]
    %v2566 = vld [vmem:[#allocation26 + $0x10] sm:$0xf]
    %v2567 = vld [vmem:[#allocation26 + $0x14] sm:$0xf]
    %v2568 = vld [vmem:[#allocation26 + $0x18] sm:$0xf]
    %v2569 = vld [vmem:[#allocation26 + $0x1c] sm:$0xf]
    %v2570 = vld [vmem:[#allocation26 + $0x20] sm:$0xf]
    %v2571 = vld [vmem:[#allocation26 + $0x24] sm:$0xf]
    %v2572 = vld [vmem:[#allocation26 + $0x28] sm:$0xf]
    %v2573 = vld [vmem:[#allocation26 + $0x2c] sm:$0xf]
    %v2574 = vld [vmem:[#allocation26 + $0x30] sm:$0xf]
    %v2575 = vld [vmem:[#allocation26 + $0x34] sm:$0xf]
    %v2576 = vld [vmem:[#allocation26 + $0x38] sm:$0xf]
    %v2577 = vld [vmem:[#allocation26 + $0x3c] sm:$0xf]
    %v2578 = vld [vmem:[%s47] sm:$0x1]
    %v2579 = vpack.c.bf16 %v2556, %v2555
    %v2581 = vlaneseq
    %v2582 = vshrl.u32 %v2581, 7
    %v2583 = vsub.s32 0, %v2582
    %v2584 = vrot.slane %v2561, %v2583
    %v2585 = vlaneseq
    %v2586 = vshrl.u32 %v2585, 7
    %v2587 = vsub.s32 1, %v2586
    %v2588 = vrot.slane %v2561, %v2587
    %v2595 = vunpack.c.l.b16 %v2557
    %v2596 = vunpack.c.h.b16 %v2557
    %v2597 = vunpack.c.l.b16 %v2558
    %v2598 = vunpack.c.h.b16 %v2558
    %v2599 = vunpack.c.l.b16 %v2559
    %v2600 = vunpack.c.h.b16 %v2559
    %v2601 = vunpack.c.l.b16 %v2560
    %v2602 = vunpack.c.h.b16 %v2560
    %v2603 = vpack.c.b16 %v2597, %v2595
    %v2604 = vpack.c.b16 %v2598, %v2596
    %v2605 = vpack.c.b16 %v2601, %v2599
    %v2606 = vpack.c.b16 %v2602, %v2600
    %v2612 = vsel %vm480, %v2579, 0
    %2614 = vmatprep.subr.bf16.mxu0 %v2604
    %2615 = vmatpush1.bf16.msra.mxu0 %v2603
    %2616 = vmatprep.subr.bf16.mxu0 %v2606
    %2617 = vmatpush1.bf16.msra.mxu0 %v2605
    %2618 = vmatprep.subr.bf16.mxu0 0
    %2619 = vmatpush1.bf16.msra.mxu0 0
    %2620 = vmatprep.subr.bf16.mxu0 0
    %2621 = vmatpush1.bf16.msra.mxu0 0
    %2622 = vmatprep.subr.bf16.mxu0 0
    %2623 = vmatpush1.bf16.msra.mxu0 0
    %2624 = vmatprep.subr.bf16.mxu0 0
    %2625 = vmatpush1.bf16.msra.mxu0 0
    %2626 = vmatprep.subr.bf16.mxu0 0
    %2627 = vmatpush1.bf16.msra.mxu0 0
    %2628 = vmatprep.subr.bf16.mxu0 0
    %2629 = vmatpush1.bf16.msra.mxu0 0
    %2630 = vmatprep.subr.bf16.mxu0 0
    %2631 = vmatpush1.bf16.msra.mxu0 0
    %2632 = vmatprep.subr.bf16.mxu0 0
    %2633 = vmatpush1.bf16.msra.mxu0 0
    %2634 = vmatprep.subr.bf16.mxu0 0
    %2635 = vmatpush1.bf16.msra.mxu0 0
    %2636 = vmatprep.subr.bf16.mxu0 0
    %2637 = vmatpush1.bf16.msra.mxu0 0
    %2638 = vmatprep.subr.bf16.mxu0 0
    %2639 = vmatpush1.bf16.msra.mxu0 0
    %2640 = vmatprep.subr.bf16.mxu0 0
    %2641 = vmatpush1.bf16.msra.mxu0 0
    %2642 = vmatprep.subr.bf16.mxu0 0
    %2643 = vmatpush1.bf16.msra.mxu0 0
    %2644 = vmatprep.subr.bf16.mxu0 0
    %2645 = vmatpush1.bf16.msra.mxu0 0
    %2646 = vmatprep.mubr.bf16.mxu0 0
    %2647 = vmatmul.mubr.bf16.gmra.mrb[0].mxu0 %v2612
    %v2648 = vpop.f32.mrb[0].mxu0
    %v2649 = vadd.f32 %v2584, %v2648
    %v2650 = vpop.f32.mrb[0].mxu0
    %v2651 = vadd.f32 %v2588, %v2650
    %v2652 = vpop.f32.mrb[0].mxu0
    %v2653 = vadd.f32 %v2584, %v2652
    %v2654 = vpop.f32.mrb[0].mxu0
    %v2655 = vadd.f32 %v2588, %v2654
    %2656 = vdwg.mxu0
    %v2659 = vcombine.high %v2651, %v2651
    %v2661 = vunpack.c.l.s4 1966171168
    %v2662 = vunpack.c.0.s8 %v2661
    %v2663 = vlaneseq
    %v2664 = vshrl.u32 %v2663, 7
    %v2665 = vsub.s32 %v2662, %v2664
    %v2666 = vrot.slane %v2651, %v2665
    %v2668 = vunpack.c.l.s4 1966171168
    %v2669 = vunpack.c.0.s8 %v2668
    %v2670 = vlaneseq
    %v2671 = vshrl.u32 %v2670, 7
    %v2672 = vsub.s32 %v2669, %v2671
    %v2673 = vrot.slane %v2659, %v2672
    %v2674 = vcombine.high %v2666, %v2666
    %v2675 = vcombine.high %v2673, %v2673
    %v2677 = vunpack.c.l.s4 1966171168
    %v2678 = vunpack.c.0.s8 %v2677
    %v2679 = vlaneseq
    %v2680 = vshrl.u32 %v2679, 7
    %v2681 = vsub.s32 %v2678, %v2680
    %v2682 = vrot.slane %v2666, %v2681
    %v2684 = vunpack.c.l.s4 1966171168
    %v2685 = vunpack.c.0.s8 %v2684
    %v2686 = vlaneseq
    %v2687 = vshrl.u32 %v2686, 7
    %v2688 = vsub.s32 %v2685, %v2687
    %v2689 = vrot.slane %v2673, %v2688
    %v2691 = vunpack.c.l.s4 1966171168
    %v2692 = vunpack.c.0.s8 %v2691
    %v2693 = vlaneseq
    %v2694 = vshrl.u32 %v2693, 7
    %v2695 = vsub.s32 %v2692, %v2694
    %v2696 = vrot.slane %v2674, %v2695
    %v2698 = vunpack.c.l.s4 1966171168
    %v2699 = vunpack.c.0.s8 %v2698
    %v2700 = vlaneseq
    %v2701 = vshrl.u32 %v2700, 7
    %v2702 = vsub.s32 %v2699, %v2701
    %v2703 = vrot.slane %v2675, %v2702
    %v2704 = vcombine.high %v2682, %v2682
    %v2705 = vcombine.high %v2689, %v2689
    %v2706 = vcombine.high %v2696, %v2696
    %v2707 = vcombine.high %v2703, %v2703
    %v2708 = vcombine.high %v2655, %v2655
    %v2710 = vunpack.c.l.s4 1966171168
    %v2711 = vunpack.c.0.s8 %v2710
    %v2712 = vlaneseq
    %v2713 = vshrl.u32 %v2712, 7
    %v2714 = vsub.s32 %v2711, %v2713
    %v2715 = vrot.slane %v2655, %v2714
    %v2717 = vunpack.c.l.s4 1966171168
    %v2718 = vunpack.c.0.s8 %v2717
    %v2719 = vlaneseq
    %v2720 = vshrl.u32 %v2719, 7
    %v2721 = vsub.s32 %v2718, %v2720
    %v2722 = vrot.slane %v2708, %v2721
    %v2723 = vcombine.high %v2715, %v2715
    %v2724 = vcombine.high %v2722, %v2722
    %v2726 = vunpack.c.l.s4 1966171168
    %v2727 = vunpack.c.0.s8 %v2726
    %v2728 = vlaneseq
    %v2729 = vshrl.u32 %v2728, 7
    %v2730 = vsub.s32 %v2727, %v2729
    %v2731 = vrot.slane %v2715, %v2730
    %v2733 = vunpack.c.l.s4 1966171168
    %v2734 = vunpack.c.0.s8 %v2733
    %v2735 = vlaneseq
    %v2736 = vshrl.u32 %v2735, 7
    %v2737 = vsub.s32 %v2734, %v2736
    %v2738 = vrot.slane %v2722, %v2737
    %v2740 = vunpack.c.l.s4 1966171168
    %v2741 = vunpack.c.0.s8 %v2740
    %v2742 = vlaneseq
    %v2743 = vshrl.u32 %v2742, 7
    %v2744 = vsub.s32 %v2741, %v2743
    %v2745 = vrot.slane %v2723, %v2744
    %v2747 = vunpack.c.l.s4 1966171168
    %v2748 = vunpack.c.0.s8 %v2747
    %v2749 = vlaneseq
    %v2750 = vshrl.u32 %v2749, 7
    %v2751 = vsub.s32 %v2748, %v2750
    %v2752 = vrot.slane %v2724, %v2751
    %v2753 = vcombine.high %v2731, %v2731
    %v2754 = vcombine.high %v2738, %v2738
    %v2755 = vcombine.high %v2745, %v2745
    %v2756 = vcombine.high %v2752, %v2752
    %v2757 = vlaneseq
    %v2758 = vshrl.u32 %v2757, 7
    %v2759 = vsub.s32 0, %v2758
    %v2760 = vrot.slane %v2682, %v2759
    %v2761 = vlaneseq
    %v2762 = vshrl.u32 %v2761, 7
    %v2763 = vsub.s32 0, %v2762
    %v2764 = vrot.slane %v2696, %v2763
    %v2765 = vlaneseq
    %v2766 = vshrl.u32 %v2765, 7
    %v2767 = vsub.s32 0, %v2766
    %v2768 = vrot.slane %v2704, %v2767
    %v2769 = vlaneseq
    %v2770 = vshrl.u32 %v2769, 7
    %v2771 = vsub.s32 0, %v2770
    %v2772 = vrot.slane %v2706, %v2771
    %v2773 = vlaneseq
    %v2774 = vshrl.u32 %v2773, 7
    %v2775 = vsub.s32 0, %v2774
    %v2776 = vrot.slane %v2689, %v2775
    %v2777 = vlaneseq
    %v2778 = vshrl.u32 %v2777, 7
    %v2779 = vsub.s32 0, %v2778
    %v2780 = vrot.slane %v2703, %v2779
    %v2781 = vlaneseq
    %v2782 = vshrl.u32 %v2781, 7
    %v2783 = vsub.s32 0, %v2782
    %v2784 = vrot.slane %v2705, %v2783
    %v2785 = vlaneseq
    %v2786 = vshrl.u32 %v2785, 7
    %v2787 = vsub.s32 0, %v2786
    %v2788 = vrot.slane %v2707, %v2787
    %v2789 = vlaneseq
    %v2790 = vshrl.u32 %v2789, 7
    %v2791 = vsub.s32 0, %v2790
    %v2792 = vrot.slane %v2731, %v2791
    %v2793 = vlaneseq
    %v2794 = vshrl.u32 %v2793, 7
    %v2795 = vsub.s32 0, %v2794
    %v2796 = vrot.slane %v2745, %v2795
    %v2797 = vlaneseq
    %v2798 = vshrl.u32 %v2797, 7
    %v2799 = vsub.s32 0, %v2798
    %v2800 = vrot.slane %v2753, %v2799
    %v2801 = vlaneseq
    %v2802 = vshrl.u32 %v2801, 7
    %v2803 = vsub.s32 0, %v2802
    %v2804 = vrot.slane %v2755, %v2803
    %v2805 = vlaneseq
    %v2806 = vshrl.u32 %v2805, 7
    %v2807 = vsub.s32 0, %v2806
    %v2808 = vrot.slane %v2738, %v2807
    %v2809 = vlaneseq
    %v2810 = vshrl.u32 %v2809, 7
    %v2811 = vsub.s32 0, %v2810
    %v2812 = vrot.slane %v2752, %v2811
    %v2813 = vlaneseq
    %v2814 = vshrl.u32 %v2813, 7
    %v2815 = vsub.s32 0, %v2814
    %v2816 = vrot.slane %v2754, %v2815
    %v2817 = vlaneseq
    %v2818 = vshrl.u32 %v2817, 7
    %v2819 = vsub.s32 0, %v2818
    %v2820 = vrot.slane %v2756, %v2819
    %v2837 = vadd.f32 %v2760, %v2649
    %v2838 = vadd.f32 %v2760, %v2653
    %v2839 = vadd.f32 %v2764, %v2649
    %v2840 = vadd.f32 %v2764, %v2653
    %v2841 = vadd.f32 %v2768, %v2649
    %v2842 = vadd.f32 %v2768, %v2653
    %v2843 = vadd.f32 %v2772, %v2649
    %v2844 = vadd.f32 %v2772, %v2653
    %v2845 = vadd.f32 %v2776, %v2649
    %v2846 = vadd.f32 %v2776, %v2653
    %v2847 = vadd.f32 %v2780, %v2649
    %v2848 = vadd.f32 %v2780, %v2653
    %v2849 = vadd.f32 %v2784, %v2649
    %v2850 = vadd.f32 %v2784, %v2653
    %v2851 = vadd.f32 %v2788, %v2649
    %v2852 = vadd.f32 %v2788, %v2653
    %v2853 = vadd.f32 %v2792, %v2649
    %v2854 = vadd.f32 %v2792, %v2653
    %v2855 = vadd.f32 %v2796, %v2649
    %v2856 = vadd.f32 %v2796, %v2653
    %v2857 = vadd.f32 %v2800, %v2649
    %v2858 = vadd.f32 %v2800, %v2653
    %v2859 = vadd.f32 %v2804, %v2649
    %v2860 = vadd.f32 %v2804, %v2653
    %v2861 = vadd.f32 %v2808, %v2649
    %v2862 = vadd.f32 %v2808, %v2653
    %v2863 = vadd.f32 %v2812, %v2649
    %v2864 = vadd.f32 %v2812, %v2653
    %v2865 = vadd.f32 %v2816, %v2649
    %v2866 = vadd.f32 %v2816, %v2653
    %v2867 = vadd.f32 %v2820, %v2649
    %v2868 = vadd.f32 %v2820, %v2653
    %v2869 = vmul.f32 %v2837, 0.2
    %v2870 = vmul.f32 %v2838, 0.2
    %v2871 = vmul.f32 %v2839, 0.2
    %v2872 = vmul.f32 %v2840, 0.2
    %v2873 = vmul.f32 %v2841, 0.2
    %v2874 = vmul.f32 %v2842, 0.2
    %v2875 = vmul.f32 %v2843, 0.2
    %v2876 = vmul.f32 %v2844, 0.2
    %v2877 = vmul.f32 %v2845, 0.2
    %v2878 = vmul.f32 %v2846, 0.2
    %v2879 = vmul.f32 %v2847, 0.2
    %v2880 = vmul.f32 %v2848, 0.2
    %v2881 = vmul.f32 %v2849, 0.2
    %v2882 = vmul.f32 %v2850, 0.2
    %v2883 = vmul.f32 %v2851, 0.2
    %v2884 = vmul.f32 %v2852, 0.2
    %v2885 = vmul.f32 %v2853, 0.2
    %v2886 = vmul.f32 %v2854, 0.2
    %v2887 = vmul.f32 %v2855, 0.2
    %v2888 = vmul.f32 %v2856, 0.2
    %v2889 = vmul.f32 %v2857, 0.2
    %v2890 = vmul.f32 %v2858, 0.2
    %v2891 = vmul.f32 %v2859, 0.2
    %v2892 = vmul.f32 %v2860, 0.2
    %v2893 = vmul.f32 %v2861, 0.2
    %v2894 = vmul.f32 %v2862, 0.2
    %v2895 = vmul.f32 %v2863, 0.2
    %v2896 = vmul.f32 %v2864, 0.2
    %v2897 = vmul.f32 %v2865, 0.2
    %v2898 = vmul.f32 %v2866, 0.2
    %v2899 = vmul.f32 %v2867, 0.2
    %v2900 = vmul.f32 %v2868, 0.2
    %v2901 = vmax.f32 %v2837, %v2869
    %v2902 = vmax.f32 %v2838, %v2870
    %v2903 = vmax.f32 %v2839, %v2871
    %v2904 = vmax.f32 %v2840, %v2872
    %v2905 = vmax.f32 %v2841, %v2873
    %v2906 = vmax.f32 %v2842, %v2874
    %v2907 = vmax.f32 %v2843, %v2875
    %v2908 = vmax.f32 %v2844, %v2876
    %v2909 = vmax.f32 %v2845, %v2877
    %v2910 = vmax.f32 %v2846, %v2878
    %v2911 = vmax.f32 %v2847, %v2879
    %v2912 = vmax.f32 %v2848, %v2880
    %v2913 = vmax.f32 %v2849, %v2881
    %v2914 = vmax.f32 %v2850, %v2882
    %v2915 = vmax.f32 %v2851, %v2883
    %v2916 = vmax.f32 %v2852, %v2884
    %v2917 = vmax.f32 %v2853, %v2885
    %v2918 = vmax.f32 %v2854, %v2886
    %v2919 = vmax.f32 %v2855, %v2887
    %v2920 = vmax.f32 %v2856, %v2888
    %v2921 = vmax.f32 %v2857, %v2889
    %v2922 = vmax.f32 %v2858, %v2890
    %v2923 = vmax.f32 %v2859, %v2891
    %v2924 = vmax.f32 %v2860, %v2892
    %v2925 = vmax.f32 %v2861, %v2893
    %v2926 = vmax.f32 %v2862, %v2894
    %v2927 = vmax.f32 %v2863, %v2895
    %v2928 = vmax.f32 %v2864, %v2896
    %v2929 = vmax.f32 %v2865, %v2897
    %v2930 = vmax.f32 %v2866, %v2898
    %v2931 = vmax.f32 %v2867, %v2899
    %v2932 = vmax.f32 %v2868, %v2900
    %v2933 = vpack.c.bf16 %v2902, %v2901
    %v2934 = vpack.c.bf16 %v2904, %v2903
    %v2935 = vpack.c.bf16 %v2906, %v2905
    %v2936 = vpack.c.bf16 %v2908, %v2907
    %v2937 = vpack.c.bf16 %v2910, %v2909
    %v2938 = vpack.c.bf16 %v2912, %v2911
    %v2939 = vpack.c.bf16 %v2914, %v2913
    %v2940 = vpack.c.bf16 %v2916, %v2915
    %v2941 = vpack.c.bf16 %v2918, %v2917
    %v2942 = vpack.c.bf16 %v2920, %v2919
    %v2943 = vpack.c.bf16 %v2922, %v2921
    %v2944 = vpack.c.bf16 %v2924, %v2923
    %v2945 = vpack.c.bf16 %v2926, %v2925
    %v2946 = vpack.c.bf16 %v2928, %v2927
    %v2947 = vpack.c.bf16 %v2930, %v2929
    %v2948 = vpack.c.bf16 %v2932, %v2931
    %v2965 = vunpack.c.l.b16 %v2562
    %v2966 = vunpack.c.l.b16 %v2563
    %v2967 = vunpack.c.l.b16 %v2564
    %v2968 = vunpack.c.l.b16 %v2565
    %v2969 = vunpack.c.l.b16 %v2566
    %v2970 = vunpack.c.l.b16 %v2567
    %v2971 = vunpack.c.l.b16 %v2568
    %v2972 = vunpack.c.l.b16 %v2569
    %v2973 = vunpack.c.l.b16 %v2570
    %v2974 = vunpack.c.l.b16 %v2571
    %v2975 = vunpack.c.l.b16 %v2572
    %v2976 = vunpack.c.l.b16 %v2573
    %v2977 = vunpack.c.l.b16 %v2574
    %v2978 = vunpack.c.l.b16 %v2575
    %v2979 = vunpack.c.l.b16 %v2576
    %v2980 = vunpack.c.l.b16 %v2577
    %v2981 = vpack.c.b16 %v2966, %v2965
    %v2982 = vpack.c.b16 %v2968, %v2967
    %v2983 = vpack.c.b16 %v2970, %v2969
    %v2984 = vpack.c.b16 %v2972, %v2971
    %v2985 = vpack.c.b16 %v2974, %v2973
    %v2986 = vpack.c.b16 %v2976, %v2975
    %v2987 = vpack.c.b16 %v2978, %v2977
    %v2988 = vpack.c.b16 %v2980, %v2979
    %2997 = vmatprep.subr.bf16.mxu0 0
    %2998 = vmatpush1.bf16.msra.mxu0 %v2981
    %2999 = vmatprep.subr.bf16.mxu0 0
    %3000 = vmatpush1.bf16.msra.mxu0 %v2982
    %3001 = vmatprep.subr.bf16.mxu0 0
    %3002 = vmatpush1.bf16.msra.mxu0 %v2983
    %3003 = vmatprep.subr.bf16.mxu0 0
    %3004 = vmatpush1.bf16.msra.mxu0 %v2984
    %3005 = vmatprep.subr.bf16.mxu0 0
    %3006 = vmatpush1.bf16.msra.mxu0 %v2985
    %3007 = vmatprep.subr.bf16.mxu0 0
    %3008 = vmatpush1.bf16.msra.mxu0 %v2986
    %3009 = vmatprep.subr.bf16.mxu0 0
    %3010 = vmatpush1.bf16.msra.mxu0 %v2987
    %3011 = vmatprep.subr.bf16.mxu0 0
    %3012 = vmatpush1.bf16.msra.mxu0 %v2988
    %3013 = vmatprep.subr.bf16.mxu0 0
    %3014 = vmatpush1.bf16.msra.mxu0 0
    %3015 = vmatprep.subr.bf16.mxu0 0
    %3016 = vmatpush1.bf16.msra.mxu0 0
    %3017 = vmatprep.subr.bf16.mxu0 0
    %3018 = vmatpush1.bf16.msra.mxu0 0
    %3019 = vmatprep.subr.bf16.mxu0 0
    %3020 = vmatpush1.bf16.msra.mxu0 0
    %3021 = vmatprep.subr.bf16.mxu0 0
    %3022 = vmatpush1.bf16.msra.mxu0 0
    %3023 = vmatprep.subr.bf16.mxu0 0
    %3024 = vmatpush1.bf16.msra.mxu0 0
    %3025 = vmatprep.subr.bf16.mxu0 0
    %3026 = vmatpush1.bf16.msra.mxu0 0
    %3027 = vmatprep.subr.bf16.mxu0 0
    %3028 = vmatpush1.bf16.msra.mxu0 0
    %3029 = vmatprep.mubr.bf16.mxu0 0
    %3030 = vmatmul.mubr.bf16.gmra.mrb[0].mxu0 %v2933
    %v3031 = vpop.f32.mrb[0].mxu0
    %v3032 = vadd.f32 0.0, %v3031
    %v3033 = vpop.f32.mrb[0].mxu0
    %v3034 = vpop.f32.mrb[0].mxu0
    %v3035 = vadd.f32 0.0, %v3034
    %v3036 = vpop.f32.mrb[0].mxu0
    %3037 = vmatprep.mubr.bf16.mxu0 0
    %3038 = vmatmul.mubr.bf16.gmra.mrb[0].mxu0 %v2934
    %v3039 = vpop.f32.mrb[0].mxu0
    %v3040 = vadd.f32 0.0, %v3039
    %v3041 = vpop.f32.mrb[0].mxu0
    %v3042 = vpop.f32.mrb[0].mxu0
    %v3043 = vadd.f32 0.0, %v3042
    %v3044 = vpop.f32.mrb[0].mxu0
    %3045 = vmatprep.mubr.bf16.mxu0 0
    %3046 = vmatmul.mubr.bf16.gmra.mrb[0].mxu0 %v2935
    %v3047 = vpop.f32.mrb[0].mxu0
    %v3048 = vadd.f32 0.0, %v3047
    %v3049 = vpop.f32.mrb[0].mxu0
    %v3050 = vpop.f32.mrb[0].mxu0
    %v3051 = vadd.f32 0.0, %v3050
    %v3052 = vpop.f32.mrb[0].mxu0
    %3053 = vmatprep.mubr.bf16.mxu0 0
    %3054 = vmatmul.mubr.bf16.gmra.mrb[0].mxu0 %v2936
    %v3055 = vpop.f32.mrb[0].mxu0
    %v3056 = vadd.f32 0.0, %v3055
    %v3057 = vpop.f32.mrb[0].mxu0
    %v3058 = vpop.f32.mrb[0].mxu0
    %v3059 = vadd.f32 0.0, %v3058
    %v3060 = vpop.f32.mrb[0].mxu0
    %3061 = vmatprep.mubr.bf16.mxu0 0
    %3062 = vmatmul.mubr.bf16.gmra.mrb[0].mxu0 %v2937
    %v3063 = vpop.f32.mrb[0].mxu0
    %v3064 = vadd.f32 0.0, %v3063
    %v3065 = vpop.f32.mrb[0].mxu0
    %v3066 = vpop.f32.mrb[0].mxu0
    %v3067 = vadd.f32 0.0, %v3066
    %v3068 = vpop.f32.mrb[0].mxu0
    %3069 = vmatprep.mubr.bf16.mxu0 0
    %3070 = vmatmul.mubr.bf16.gmra.mrb[0].mxu0 %v2938
    %v3071 = vpop.f32.mrb[0].mxu0
    %v3072 = vadd.f32 0.0, %v3071
    %v3073 = vpop.f32.mrb[0].mxu0
    %v3074 = vpop.f32.mrb[0].mxu0
    %v3075 = vadd.f32 0.0, %v3074
    %v3076 = vpop.f32.mrb[0].mxu0
    %3077 = vmatprep.mubr.bf16.mxu0 0
    %3078 = vmatmul.mubr.bf16.gmra.mrb[0].mxu0 %v2939
    %v3079 = vpop.f32.mrb[0].mxu0
    %v3080 = vadd.f32 0.0, %v3079
    %v3081 = vpop.f32.mrb[0].mxu0
    %v3082 = vpop.f32.mrb[0].mxu0
    %v3083 = vadd.f32 0.0, %v3082
    %v3084 = vpop.f32.mrb[0].mxu0
    %3085 = vmatprep.mubr.bf16.mxu0 0
    %3086 = vmatmul.mubr.bf16.gmra.mrb[0].mxu0 %v2940
    %v3087 = vpop.f32.mrb[0].mxu0
    %v3088 = vadd.f32 0.0, %v3087
    %v3089 = vpop.f32.mrb[0].mxu0
    %v3090 = vpop.f32.mrb[0].mxu0
    %v3091 = vadd.f32 0.0, %v3090
    %v3092 = vpop.f32.mrb[0].mxu0
    %3093 = vmatprep.mubr.bf16.mxu0 0
    %3094 = vmatmul.mubr.bf16.gmra.mrb[0].mxu0 %v2941
    %v3095 = vpop.f32.mrb[0].mxu0
    %v3096 = vadd.f32 0.0, %v3095
    %v3097 = vpop.f32.mrb[0].mxu0
    %v3098 = vpop.f32.mrb[0].mxu0
    %v3099 = vadd.f32 0.0, %v3098
    %v3100 = vpop.f32.mrb[0].mxu0
    %3101 = vmatprep.mubr.bf16.mxu0 0
    %3102 = vmatmul.mubr.bf16.gmra.mrb[0].mxu0 %v2942
    %v3103 = vpop.f32.mrb[0].mxu0
    %v3104 = vadd.f32 0.0, %v3103
    %v3105 = vpop.f32.mrb[0].mxu0
    %v3106 = vpop.f32.mrb[0].mxu0
    %v3107 = vadd.f32 0.0, %v3106
    %v3108 = vpop.f32.mrb[0].mxu0
    %3109 = vmatprep.mubr.bf16.mxu0 0
    %3110 = vmatmul.mubr.bf16.gmra.mrb[0].mxu0 %v2943
    %v3111 = vpop.f32.mrb[0].mxu0
    %v3112 = vadd.f32 0.0, %v3111
    %v3113 = vpop.f32.mrb[0].mxu0
    %v3114 = vpop.f32.mrb[0].mxu0
    %v3115 = vadd.f32 0.0, %v3114
    %v3116 = vpop.f32.mrb[0].mxu0
    %3117 = vmatprep.mubr.bf16.mxu0 0
    %3118 = vmatmul.mubr.bf16.gmra.mrb[0].mxu0 %v2944
    %v3119 = vpop.f32.mrb[0].mxu0
    %v3120 = vadd.f32 0.0, %v3119
    %v3121 = vpop.f32.mrb[0].mxu0
    %v3122 = vpop.f32.mrb[0].mxu0
    %v3123 = vadd.f32 0.0, %v3122
    %v3124 = vpop.f32.mrb[0].mxu0
    %3125 = vmatprep.mubr.bf16.mxu0 0
    %3126 = vmatmul.mubr.bf16.gmra.mrb[0].mxu0 %v2945
    %v3127 = vpop.f32.mrb[0].mxu0
    %v3128 = vadd.f32 0.0, %v3127
    %v3129 = vpop.f32.mrb[0].mxu0
    %v3130 = vpop.f32.mrb[0].mxu0
    %v3131 = vadd.f32 0.0, %v3130
    %v3132 = vpop.f32.mrb[0].mxu0
    %3133 = vmatprep.mubr.bf16.mxu0 0
    %3134 = vmatmul.mubr.bf16.gmra.mrb[0].mxu0 %v2946
    %v3135 = vpop.f32.mrb[0].mxu0
    %v3136 = vadd.f32 0.0, %v3135
    %v3137 = vpop.f32.mrb[0].mxu0
    %v3138 = vpop.f32.mrb[0].mxu0
    %v3139 = vadd.f32 0.0, %v3138
    %v3140 = vpop.f32.mrb[0].mxu0
    %3141 = vmatprep.mubr.bf16.mxu0 0
    %3142 = vmatmul.mubr.bf16.gmra.mrb[0].mxu0 %v2947
    %v3143 = vpop.f32.mrb[0].mxu0
    %v3144 = vadd.f32 0.0, %v3143
    %v3145 = vpop.f32.mrb[0].mxu0
    %v3146 = vpop.f32.mrb[0].mxu0
    %v3147 = vadd.f32 0.0, %v3146
    %v3148 = vpop.f32.mrb[0].mxu0
    %3149 = vmatprep.mubr.bf16.mxu0 0
    %3150 = vmatmul.mubr.bf16.gmra.mrb[0].mxu0 %v2948
    %v3151 = vpop.f32.mrb[0].mxu0
    %v3152 = vadd.f32 0.0, %v3151
    %v3153 = vpop.f32.mrb[0].mxu0
    %v3154 = vpop.f32.mrb[0].mxu0
    %v3155 = vadd.f32 0.0, %v3154
    %v3156 = vpop.f32.mrb[0].mxu0
    %3157 = vdwg.mxu0
    %v3158 = vlaneseq
    %v3159 = vshrl.u32 %v3158, 7
    %v3160 = vsub.s32 0, %v3159
    %v3161 = vrot.slane %v2493, %v3160
    %3163 = vbcast.lane.b32.xlu0 %v3161, 256
    %v3164 = vpop.permute.xlu0 %3163
    %s3166 = sor.u32 256, 8
    %3167 = vbcast.lane.b32.xlu0 %v3161, %s3166
    %v3168 = vpop.permute.xlu0 %3167
    %v3169 = vlaneseq
    %v3170 = vshrl.u32 %v3169, 7
    %v3171 = vsub.s32 1, %v3170
    %v3172 = vrot.slane %v2493, %v3171
    %3174 = vbcast.lane.b32.xlu0 %v3172, 256
    %v3175 = vpop.permute.xlu0 %3174
    %s3177 = sor.u32 256, 8
    %3178 = vbcast.lane.b32.xlu0 %v3172, %s3177
    %v3179 = vpop.permute.xlu0 %3178
    %v3180 = vlaneseq
    %v3181 = vshrl.u32 %v3180, 7
    %v3182 = vsub.s32 2, %v3181
    %v3183 = vrot.slane %v2493, %v3182
    %3185 = vbcast.lane.b32.xlu0 %v3183, 256
    %v3186 = vpop.permute.xlu0 %3185
    %s3188 = sor.u32 256, 8
    %3189 = vbcast.lane.b32.xlu0 %v3183, %s3188
    %v3190 = vpop.permute.xlu0 %3189
    %v3191 = vlaneseq
    %v3192 = vshrl.u32 %v3191, 7
    %v3193 = vsub.s32 3, %v3192
    %v3194 = vrot.slane %v2493, %v3193
    %3196 = vbcast.lane.b32.xlu0 %v3194, 256
    %v3197 = vpop.permute.xlu0 %3196
    %s3199 = sor.u32 256, 8
    %3200 = vbcast.lane.b32.xlu0 %v3194, %s3199
    %v3201 = vpop.permute.xlu0 %3200
    %v3202 = vlaneseq
    %v3203 = vshrl.u32 %v3202, 7
    %v3204 = vsub.s32 4, %v3203
    %v3205 = vrot.slane %v2493, %v3204
    %3207 = vbcast.lane.b32.xlu0 %v3205, 256
    %v3208 = vpop.permute.xlu0 %3207
    %s3210 = sor.u32 256, 8
    %3211 = vbcast.lane.b32.xlu0 %v3205, %s3210
    %v3212 = vpop.permute.xlu0 %3211
    %v3213 = vlaneseq
    %v3214 = vshrl.u32 %v3213, 7
    %v3215 = vsub.s32 5, %v3214
    %v3216 = vrot.slane %v2493, %v3215
    %3218 = vbcast.lane.b32.xlu0 %v3216, 256
    %v3219 = vpop.permute.xlu0 %3218
    %s3221 = sor.u32 256, 8
    %3222 = vbcast.lane.b32.xlu0 %v3216, %s3221
    %v3223 = vpop.permute.xlu0 %3222
    %v3224 = vlaneseq
    %v3225 = vshrl.u32 %v3224, 7
    %v3226 = vsub.s32 6, %v3225
    %v3227 = vrot.slane %v2493, %v3226
    %3229 = vbcast.lane.b32.xlu0 %v3227, 256
    %v3230 = vpop.permute.xlu0 %3229
    %s3232 = sor.u32 256, 8
    %3233 = vbcast.lane.b32.xlu0 %v3227, %s3232
    %v3234 = vpop.permute.xlu0 %3233
    %v3235 = vlaneseq
    %v3236 = vshrl.u32 %v3235, 7
    %v3237 = vsub.s32 7, %v3236
    %v3238 = vrot.slane %v2493, %v3237
    %3240 = vbcast.lane.b32.xlu0 %v3238, 256
    %v3241 = vpop.permute.xlu0 %3240
    %s3243 = sor.u32 256, 8
    %3244 = vbcast.lane.b32.xlu0 %v3238, %s3243
    %v3245 = vpop.permute.xlu0 %3244
    %v3246 = vlaneseq
    %v3247 = vshrl.u32 %v3246, 7
    %v3248 = vsub.s32 0, %v3247
    %v3249 = vrot.slane %v2494, %v3248
    %3251 = vbcast.lane.b32.xlu0 %v3249, 256
    %v3252 = vpop.permute.xlu0 %3251
    %s3254 = sor.u32 256, 8
    %3255 = vbcast.lane.b32.xlu0 %v3249, %s3254
    %v3256 = vpop.permute.xlu0 %3255
    %v3257 = vlaneseq
    %v3258 = vshrl.u32 %v3257, 7
    %v3259 = vsub.s32 1, %v3258
    %v3260 = vrot.slane %v2494, %v3259
    %3262 = vbcast.lane.b32.xlu0 %v3260, 256
    %v3263 = vpop.permute.xlu0 %3262
    %s3265 = sor.u32 256, 8
    %3266 = vbcast.lane.b32.xlu0 %v3260, %s3265
    %v3267 = vpop.permute.xlu0 %3266
    %v3268 = vlaneseq
    %v3269 = vshrl.u32 %v3268, 7
    %v3270 = vsub.s32 2, %v3269
    %v3271 = vrot.slane %v2494, %v3270
    %3273 = vbcast.lane.b32.xlu0 %v3271, 256
    %v3274 = vpop.permute.xlu0 %3273
    %s3276 = sor.u32 256, 8
    %3277 = vbcast.lane.b32.xlu0 %v3271, %s3276
    %v3278 = vpop.permute.xlu0 %3277
    %v3279 = vlaneseq
    %v3280 = vshrl.u32 %v3279, 7
    %v3281 = vsub.s32 3, %v3280
    %v3282 = vrot.slane %v2494, %v3281
    %3284 = vbcast.lane.b32.xlu0 %v3282, 256
    %v3285 = vpop.permute.xlu0 %3284
    %s3287 = sor.u32 256, 8
    %3288 = vbcast.lane.b32.xlu0 %v3282, %s3287
    %v3289 = vpop.permute.xlu0 %3288
    %v3290 = vlaneseq
    %v3291 = vshrl.u32 %v3290, 7
    %v3292 = vsub.s32 4, %v3291
    %v3293 = vrot.slane %v2494, %v3292
    %3295 = vbcast.lane.b32.xlu0 %v3293, 256
    %v3296 = vpop.permute.xlu0 %3295
    %s3298 = sor.u32 256, 8
    %3299 = vbcast.lane.b32.xlu0 %v3293, %s3298
    %v3300 = vpop.permute.xlu0 %3299
    %v3301 = vlaneseq
    %v3302 = vshrl.u32 %v3301, 7
    %v3303 = vsub.s32 5, %v3302
    %v3304 = vrot.slane %v2494, %v3303
    %3306 = vbcast.lane.b32.xlu0 %v3304, 256
    %v3307 = vpop.permute.xlu0 %3306
    %s3309 = sor.u32 256, 8
    %3310 = vbcast.lane.b32.xlu0 %v3304, %s3309
    %v3311 = vpop.permute.xlu0 %3310
    %v3312 = vlaneseq
    %v3313 = vshrl.u32 %v3312, 7
    %v3314 = vsub.s32 6, %v3313
    %v3315 = vrot.slane %v2494, %v3314
    %3317 = vbcast.lane.b32.xlu0 %v3315, 256
    %v3318 = vpop.permute.xlu0 %3317
    %s3320 = sor.u32 256, 8
    %3321 = vbcast.lane.b32.xlu0 %v3315, %s3320
    %v3322 = vpop.permute.xlu0 %3321
    %v3323 = vlaneseq
    %v3324 = vshrl.u32 %v3323, 7
    %v3325 = vsub.s32 7, %v3324
    %v3326 = vrot.slane %v2494, %v3325
    %3328 = vbcast.lane.b32.xlu0 %v3326, 256
    %v3329 = vpop.permute.xlu0 %3328
    %s3331 = sor.u32 256, 8
    %3332 = vbcast.lane.b32.xlu0 %v3326, %s3331
    %v3333 = vpop.permute.xlu0 %3332
    %v3334 = vadd.f32 %v3032, %v3164
    %v3335 = vadd.f32 %v3035, %v3168
    %v3336 = vadd.f32 %v3040, %v3175
    %v3337 = vadd.f32 %v3043, %v3179
    %v3338 = vadd.f32 %v3048, %v3186
    %v3339 = vadd.f32 %v3051, %v3190
    %v3340 = vadd.f32 %v3056, %v3197
    %v3341 = vadd.f32 %v3059, %v3201
    %v3342 = vadd.f32 %v3064, %v3208
    %v3343 = vadd.f32 %v3067, %v3212
    %v3344 = vadd.f32 %v3072, %v3219
    %v3345 = vadd.f32 %v3075, %v3223
    %v3346 = vadd.f32 %v3080, %v3230
    %v3347 = vadd.f32 %v3083, %v3234
    %v3348 = vadd.f32 %v3088, %v3241
    %v3349 = vadd.f32 %v3091, %v3245
    %v3350 = vadd.f32 %v3096, %v3252
    %v3351 = vadd.f32 %v3099, %v3256
    %v3352 = vadd.f32 %v3104, %v3263
    %v3353 = vadd.f32 %v3107, %v3267
    %v3354 = vadd.f32 %v3112, %v3274
    %v3355 = vadd.f32 %v3115, %v3278
    %v3356 = vadd.f32 %v3120, %v3285
    %v3357 = vadd.f32 %v3123, %v3289
    %v3358 = vadd.f32 %v3128, %v3296
    %v3359 = vadd.f32 %v3131, %v3300
    %v3360 = vadd.f32 %v3136, %v3307
    %v3361 = vadd.f32 %v3139, %v3311
    %v3362 = vadd.f32 %v3144, %v3318
    %v3363 = vadd.f32 %v3147, %v3322
    %v3364 = vadd.f32 %v3152, %v3329
    %v3365 = vadd.f32 %v3155, %v3333
    %v3366 = vmax.f32 %v3334, %v3335
    %v3367 = vrot.slane %v3366, 4
    %v3368 = vmax.f32 %v3366, %v3367
    %v3369 = vrot.slane %v3368, 2
    %v3370 = vmax.f32 %v3368, %v3369
    %v3371 = vrot.slane %v3370, 1
    %v3372 = vmax.f32 %v3370, %v3371
    %v3373 = vmax.f32 %v3336, %v3337
    %v3374 = vrot.slane %v3373, 4
    %v3375 = vmax.f32 %v3373, %v3374
    %v3376 = vrot.slane %v3375, 2
    %v3377 = vmax.f32 %v3375, %v3376
    %v3378 = vrot.slane %v3377, 1
    %v3379 = vmax.f32 %v3377, %v3378
    %v3380 = vmax.f32 %v3338, %v3339
    %v3381 = vrot.slane %v3380, 4
    %v3382 = vmax.f32 %v3380, %v3381
    %v3383 = vrot.slane %v3382, 2
    %v3384 = vmax.f32 %v3382, %v3383
    %v3385 = vrot.slane %v3384, 1
    %v3386 = vmax.f32 %v3384, %v3385
    %v3387 = vmax.f32 %v3340, %v3341
    %v3388 = vrot.slane %v3387, 4
    %v3389 = vmax.f32 %v3387, %v3388
    %v3390 = vrot.slane %v3389, 2
    %v3391 = vmax.f32 %v3389, %v3390
    %v3392 = vrot.slane %v3391, 1
    %v3393 = vmax.f32 %v3391, %v3392
    %v3394 = vmax.f32 %v3342, %v3343
    %v3395 = vrot.slane %v3394, 4
    %v3396 = vmax.f32 %v3394, %v3395
    %v3397 = vrot.slane %v3396, 2
    %v3398 = vmax.f32 %v3396, %v3397
    %v3399 = vrot.slane %v3398, 1
    %v3400 = vmax.f32 %v3398, %v3399
    %v3401 = vmax.f32 %v3344, %v3345
    %v3402 = vrot.slane %v3401, 4
    %v3403 = vmax.f32 %v3401, %v3402
    %v3404 = vrot.slane %v3403, 2
    %v3405 = vmax.f32 %v3403, %v3404
    %v3406 = vrot.slane %v3405, 1
    %v3407 = vmax.f32 %v3405, %v3406
    %v3408 = vmax.f32 %v3346, %v3347
    %v3409 = vrot.slane %v3408, 4
    %v3410 = vmax.f32 %v3408, %v3409
    %v3411 = vrot.slane %v3410, 2
    %v3412 = vmax.f32 %v3410, %v3411
    %v3413 = vrot.slane %v3412, 1
    %v3414 = vmax.f32 %v3412, %v3413
    %v3415 = vmax.f32 %v3348, %v3349
    %v3416 = vrot.slane %v3415, 4
    %v3417 = vmax.f32 %v3415, %v3416
    %v3418 = vrot.slane %v3417, 2
    %v3419 = vmax.f32 %v3417, %v3418
    %v3420 = vrot.slane %v3419, 1
    %v3421 = vmax.f32 %v3419, %v3420
    %v3422 = vmax.f32 %v3350, %v3351
    %v3423 = vrot.slane %v3422, 4
    %v3424 = vmax.f32 %v3422, %v3423
    %v3425 = vrot.slane %v3424, 2
    %v3426 = vmax.f32 %v3424, %v3425
    %v3427 = vrot.slane %v3426, 1
    %v3428 = vmax.f32 %v3426, %v3427
    %v3429 = vmax.f32 %v3352, %v3353
    %v3430 = vrot.slane %v3429, 4
    %v3431 = vmax.f32 %v3429, %v3430
    %v3432 = vrot.slane %v3431, 2
    %v3433 = vmax.f32 %v3431, %v3432
    %v3434 = vrot.slane %v3433, 1
    %v3435 = vmax.f32 %v3433, %v3434
    %v3436 = vmax.f32 %v3354, %v3355
    %v3437 = vrot.slane %v3436, 4
    %v3438 = vmax.f32 %v3436, %v3437
    %v3439 = vrot.slane %v3438, 2
    %v3440 = vmax.f32 %v3438, %v3439
    %v3441 = vrot.slane %v3440, 1
    %v3442 = vmax.f32 %v3440, %v3441
    %v3443 = vmax.f32 %v3356, %v3357
    %v3444 = vrot.slane %v3443, 4
    %v3445 = vmax.f32 %v3443, %v3444
    %v3446 = vrot.slane %v3445, 2
    %v3447 = vmax.f32 %v3445, %v3446
    %v3448 = vrot.slane %v3447, 1
    %v3449 = vmax.f32 %v3447, %v3448
    %v3450 = vmax.f32 %v3358, %v3359
    %v3451 = vrot.slane %v3450, 4
    %v3452 = vmax.f32 %v3450, %v3451
    %v3453 = vrot.slane %v3452, 2
    %v3454 = vmax.f32 %v3452, %v3453
    %v3455 = vrot.slane %v3454, 1
    %v3456 = vmax.f32 %v3454, %v3455
    %v3457 = vmax.f32 %v3360, %v3361
    %v3458 = vrot.slane %v3457, 4
    %v3459 = vmax.f32 %v3457, %v3458
    %v3460 = vrot.slane %v3459, 2
    %v3461 = vmax.f32 %v3459, %v3460
    %v3462 = vrot.slane %v3461, 1
    %v3463 = vmax.f32 %v3461, %v3462
    %v3464 = vmax.f32 %v3362, %v3363
    %v3465 = vrot.slane %v3464, 4
    %v3466 = vmax.f32 %v3464, %v3465
    %v3467 = vrot.slane %v3466, 2
    %v3468 = vmax.f32 %v3466, %v3467
    %v3469 = vrot.slane %v3468, 1
    %v3470 = vmax.f32 %v3468, %v3469
    %v3471 = vmax.f32 %v3364, %v3365
    %v3472 = vrot.slane %v3471, 4
    %v3473 = vmax.f32 %v3471, %v3472
    %v3474 = vrot.slane %v3473, 2
    %v3475 = vmax.f32 %v3473, %v3474
    %v3476 = vrot.slane %v3475, 1
    %v3477 = vmax.f32 %v3475, %v3476
    %v3478 = vsub.f32 %v3334, %v3372
    %v3479 = vsub.f32 %v3335, %v3372
    %v3480 = vsub.f32 %v3336, %v3379
    %v3481 = vsub.f32 %v3337, %v3379
    %v3482 = vsub.f32 %v3338, %v3386
    %v3483 = vsub.f32 %v3339, %v3386
    %v3484 = vsub.f32 %v3340, %v3393
    %v3485 = vsub.f32 %v3341, %v3393
    %v3486 = vsub.f32 %v3342, %v3400
    %v3487 = vsub.f32 %v3343, %v3400
    %v3488 = vsub.f32 %v3344, %v3407
    %v3489 = vsub.f32 %v3345, %v3407
    %v3490 = vsub.f32 %v3346, %v3414
    %v3491 = vsub.f32 %v3347, %v3414
    %v3492 = vsub.f32 %v3348, %v3421
    %v3493 = vsub.f32 %v3349, %v3421
    %v3494 = vsub.f32 %v3350, %v3428
    %v3495 = vsub.f32 %v3351, %v3428
    %v3496 = vsub.f32 %v3352, %v3435
    %v3497 = vsub.f32 %v3353, %v3435
    %v3498 = vsub.f32 %v3354, %v3442
    %v3499 = vsub.f32 %v3355, %v3442
    %v3500 = vsub.f32 %v3356, %v3449
    %v3501 = vsub.f32 %v3357, %v3449
    %v3502 = vsub.f32 %v3358, %v3456
    %v3503 = vsub.f32 %v3359, %v3456
    %v3504 = vsub.f32 %v3360, %v3463
    %v3505 = vsub.f32 %v3361, %v3463
    %v3506 = vsub.f32 %v3362, %v3470
    %v3507 = vsub.f32 %v3363, %v3470
    %v3508 = vsub.f32 %v3364, %v3477
    %v3509 = vsub.f32 %v3365, %v3477
    %v3510 = vmul.f32 %v3478, 1.442695
    %v3511 = vpow.pop %v3510
    %v3512 = vmul.f32 %v3479, 1.442695
    %v3513 = vpow.pop %v3512
    %v3514 = vmul.f32 %v3480, 1.442695
    %v3515 = vpow.pop %v3514
    %v3516 = vmul.f32 %v3481, 1.442695
    %v3517 = vpow.pop %v3516
    %v3518 = vmul.f32 %v3482, 1.442695
    %v3519 = vpow.pop %v3518
    %v3520 = vmul.f32 %v3483, 1.442695
    %v3521 = vpow.pop %v3520
    %v3522 = vmul.f32 %v3484, 1.442695
    %v3523 = vpow.pop %v3522
    %v3524 = vmul.f32 %v3485, 1.442695
    %v3525 = vpow.pop %v3524
    %v3526 = vmul.f32 %v3486, 1.442695
    %v3527 = vpow.pop %v3526
    %v3528 = vmul.f32 %v3487, 1.442695
    %v3529 = vpow.pop %v3528
    %v3530 = vmul.f32 %v3488, 1.442695
    %v3531 = vpow.pop %v3530
    %v3532 = vmul.f32 %v3489, 1.442695
    %v3533 = vpow.pop %v3532
    %v3534 = vmul.f32 %v3490, 1.442695
    %v3535 = vpow.pop %v3534
    %v3536 = vmul.f32 %v3491, 1.442695
    %v3537 = vpow.pop %v3536
    %v3538 = vmul.f32 %v3492, 1.442695
    %v3539 = vpow.pop %v3538
    %v3540 = vmul.f32 %v3493, 1.442695
    %v3541 = vpow.pop %v3540
    %v3542 = vmul.f32 %v3494, 1.442695
    %v3543 = vpow.pop %v3542
    %v3544 = vmul.f32 %v3495, 1.442695
    %v3545 = vpow.pop %v3544
    %v3546 = vmul.f32 %v3496, 1.442695
    %v3547 = vpow.pop %v3546
    %v3548 = vmul.f32 %v3497, 1.442695
    %v3549 = vpow.pop %v3548
    %v3550 = vmul.f32 %v3498, 1.442695
    %v3551 = vpow.pop %v3550
    %v3552 = vmul.f32 %v3499, 1.442695
    %v3553 = vpow.pop %v3552
    %v3554 = vmul.f32 %v3500, 1.442695
    %v3555 = vpow.pop %v3554
    %v3556 = vmul.f32 %v3501, 1.442695
    %v3557 = vpow.pop %v3556
    %v3558 = vmul.f32 %v3502, 1.442695
    %v3559 = vpow.pop %v3558
    %v3560 = vmul.f32 %v3503, 1.442695
    %v3561 = vpow.pop %v3560
    %v3562 = vmul.f32 %v3504, 1.442695
    %v3563 = vpow.pop %v3562
    %v3564 = vmul.f32 %v3505, 1.442695
    %v3565 = vpow.pop %v3564
    %v3566 = vmul.f32 %v3506, 1.442695
    %v3567 = vpow.pop %v3566
    %v3568 = vmul.f32 %v3507, 1.442695
    %v3569 = vpow.pop %v3568
    %v3570 = vmul.f32 %v3508, 1.442695
    %v3571 = vpow.pop %v3570
    %v3572 = vmul.f32 %v3509, 1.442695
    %v3573 = vpow.pop %v3572
    %v3574 = vadd.f32 %v3511, %v3513
    %v3575 = vrot.slane %v3574, 4
    %v3576 = vadd.f32 %v3574, %v3575
    %v3577 = vrot.slane %v3576, 2
    %v3578 = vadd.f32 %v3576, %v3577
    %v3579 = vrot.slane %v3578, 1
    %v3580 = vadd.f32 %v3578, %v3579
    %v3581 = vadd.f32 %v3515, %v3517
    %v3582 = vrot.slane %v3581, 4
    %v3583 = vadd.f32 %v3581, %v3582
    %v3584 = vrot.slane %v3583, 2
    %v3585 = vadd.f32 %v3583, %v3584
    %v3586 = vrot.slane %v3585, 1
    %v3587 = vadd.f32 %v3585, %v3586
    %v3588 = vadd.f32 %v3519, %v3521
    %v3589 = vrot.slane %v3588, 4
    %v3590 = vadd.f32 %v3588, %v3589
    %v3591 = vrot.slane %v3590, 2
    %v3592 = vadd.f32 %v3590, %v3591
    %v3593 = vrot.slane %v3592, 1
    %v3594 = vadd.f32 %v3592, %v3593
    %v3595 = vadd.f32 %v3523, %v3525
    %v3596 = vrot.slane %v3595, 4
    %v3597 = vadd.f32 %v3595, %v3596
    %v3598 = vrot.slane %v3597, 2
    %v3599 = vadd.f32 %v3597, %v3598
    %v3600 = vrot.slane %v3599, 1
    %v3601 = vadd.f32 %v3599, %v3600
    %v3602 = vadd.f32 %v3527, %v3529
    %v3603 = vrot.slane %v3602, 4
    %v3604 = vadd.f32 %v3602, %v3603
    %v3605 = vrot.slane %v3604, 2
    %v3606 = vadd.f32 %v3604, %v3605
    %v3607 = vrot.slane %v3606, 1
    %v3608 = vadd.f32 %v3606, %v3607
    %v3609 = vadd.f32 %v3531, %v3533
    %v3610 = vrot.slane %v3609, 4
    %v3611 = vadd.f32 %v3609, %v3610
    %v3612 = vrot.slane %v3611, 2
    %v3613 = vadd.f32 %v3611, %v3612
    %v3614 = vrot.slane %v3613, 1
    %v3615 = vadd.f32 %v3613, %v3614
    %v3616 = vadd.f32 %v3535, %v3537
    %v3617 = vrot.slane %v3616, 4
    %v3618 = vadd.f32 %v3616, %v3617
    %v3619 = vrot.slane %v3618, 2
    %v3620 = vadd.f32 %v3618, %v3619
    %v3621 = vrot.slane %v3620, 1
    %v3622 = vadd.f32 %v3620, %v3621
    %v3623 = vadd.f32 %v3539, %v3541
    %v3624 = vrot.slane %v3623, 4
    %v3625 = vadd.f32 %v3623, %v3624
    %v3626 = vrot.slane %v3625, 2
    %v3627 = vadd.f32 %v3625, %v3626
    %v3628 = vrot.slane %v3627, 1
    %v3629 = vadd.f32 %v3627, %v3628
    %v3630 = vadd.f32 %v3543, %v3545
    %v3631 = vrot.slane %v3630, 4
    %v3632 = vadd.f32 %v3630, %v3631
    %v3633 = vrot.slane %v3632, 2
    %v3634 = vadd.f32 %v3632, %v3633
    %v3635 = vrot.slane %v3634, 1
    %v3636 = vadd.f32 %v3634, %v3635
    %v3637 = vadd.f32 %v3547, %v3549
    %v3638 = vrot.slane %v3637, 4
    %v3639 = vadd.f32 %v3637, %v3638
    %v3640 = vrot.slane %v3639, 2
    %v3641 = vadd.f32 %v3639, %v3640
    %v3642 = vrot.slane %v3641, 1
    %v3643 = vadd.f32 %v3641, %v3642
    %v3644 = vadd.f32 %v3551, %v3553
    %v3645 = vrot.slane %v3644, 4
    %v3646 = vadd.f32 %v3644, %v3645
    %v3647 = vrot.slane %v3646, 2
    %v3648 = vadd.f32 %v3646, %v3647
    %v3649 = vrot.slane %v3648, 1
    %v3650 = vadd.f32 %v3648, %v3649
    %v3651 = vadd.f32 %v3555, %v3557
    %v3652 = vrot.slane %v3651, 4
    %v3653 = vadd.f32 %v3651, %v3652
    %v3654 = vrot.slane %v3653, 2
    %v3655 = vadd.f32 %v3653, %v3654
    %v3656 = vrot.slane %v3655, 1
    %v3657 = vadd.f32 %v3655, %v3656
    %v3658 = vadd.f32 %v3559, %v3561
    %v3659 = vrot.slane %v3658, 4
    %v3660 = vadd.f32 %v3658, %v3659
    %v3661 = vrot.slane %v3660, 2
    %v3662 = vadd.f32 %v3660, %v3661
    %v3663 = vrot.slane %v3662, 1
    %v3664 = vadd.f32 %v3662, %v3663
    %v3665 = vadd.f32 %v3563, %v3565
    %v3666 = vrot.slane %v3665, 4
    %v3667 = vadd.f32 %v3665, %v3666
    %v3668 = vrot.slane %v3667, 2
    %v3669 = vadd.f32 %v3667, %v3668
    %v3670 = vrot.slane %v3669, 1
    %v3671 = vadd.f32 %v3669, %v3670
    %v3672 = vadd.f32 %v3567, %v3569
    %v3673 = vrot.slane %v3672, 4
    %v3674 = vadd.f32 %v3672, %v3673
    %v3675 = vrot.slane %v3674, 2
    %v3676 = vadd.f32 %v3674, %v3675
    %v3677 = vrot.slane %v3676, 1
    %v3678 = vadd.f32 %v3676, %v3677
    %v3679 = vadd.f32 %v3571, %v3573
    %v3680 = vrot.slane %v3679, 4
    %v3681 = vadd.f32 %v3679, %v3680
    %v3682 = vrot.slane %v3681, 2
    %v3683 = vadd.f32 %v3681, %v3682
    %v3684 = vrot.slane %v3683, 1
    %v3685 = vadd.f32 %v3683, %v3684
    %v3686 = vrcp.pop %v3580
    %v3687 = vrcp.pop %v3587
    %v3688 = vrcp.pop %v3594
    %v3689 = vrcp.pop %v3601
    %v3690 = vrcp.pop %v3608
    %v3691 = vrcp.pop %v3615
    %v3692 = vrcp.pop %v3622
    %v3693 = vrcp.pop %v3629
    %v3694 = vrcp.pop %v3636
    %v3695 = vrcp.pop %v3643
    %v3696 = vrcp.pop %v3650
    %v3697 = vrcp.pop %v3657
    %v3698 = vrcp.pop %v3664
    %v3699 = vrcp.pop %v3671
    %v3700 = vrcp.pop %v3678
    %v3701 = vrcp.pop %v3685
    %v3702 = vmul.f32 %v3511, %v3686
    %v3703 = vmul.f32 %v3513, %v3686
    %v3704 = vmul.f32 %v3515, %v3687
    %v3705 = vmul.f32 %v3517, %v3687
    %v3706 = vmul.f32 %v3519, %v3688
    %v3707 = vmul.f32 %v3521, %v3688
    %v3708 = vmul.f32 %v3523, %v3689
    %v3709 = vmul.f32 %v3525, %v3689
    %v3710 = vmul.f32 %v3527, %v3690
    %v3711 = vmul.f32 %v3529, %v3690
    %v3712 = vmul.f32 %v3531, %v3691
    %v3713 = vmul.f32 %v3533, %v3691
    %v3714 = vmul.f32 %v3535, %v3692
    %v3715 = vmul.f32 %v3537, %v3692
    %v3716 = vmul.f32 %v3539, %v3693
    %v3717 = vmul.f32 %v3541, %v3693
    %v3718 = vmul.f32 %v3543, %v3694
    %v3719 = vmul.f32 %v3545, %v3694
    %v3720 = vmul.f32 %v3547, %v3695
    %v3721 = vmul.f32 %v3549, %v3695
    %v3722 = vmul.f32 %v3551, %v3696
    %v3723 = vmul.f32 %v3553, %v3696
    %v3724 = vmul.f32 %v3555, %v3697
    %v3725 = vmul.f32 %v3557, %v3697
    %v3726 = vmul.f32 %v3559, %v3698
    %v3727 = vmul.f32 %v3561, %v3698
    %v3728 = vmul.f32 %v3563, %v3699
    %v3729 = vmul.f32 %v3565, %v3699
    %v3730 = vmul.f32 %v3567, %v3700
    %v3731 = vmul.f32 %v3569, %v3700
    %v3732 = vmul.f32 %v3571, %v3701
    %v3733 = vmul.f32 %v3573, %v3701
    %v3734 = vmul.f32 %v3702, %v2649
    %v3735 = vmul.f32 %v3703, %v2653
    %v3736 = vmul.f32 %v3704, %v2649
    %v3737 = vmul.f32 %v3705, %v2653
    %v3738 = vmul.f32 %v3706, %v2649
    %v3739 = vmul.f32 %v3707, %v2653
    %v3740 = vmul.f32 %v3708, %v2649
    %v3741 = vmul.f32 %v3709, %v2653
    %v3742 = vmul.f32 %v3710, %v2649
    %v3743 = vmul.f32 %v3711, %v2653
    %v3744 = vmul.f32 %v3712, %v2649
    %v3745 = vmul.f32 %v3713, %v2653
    %v3746 = vmul.f32 %v3714, %v2649
    %v3747 = vmul.f32 %v3715, %v2653
    %v3748 = vmul.f32 %v3716, %v2649
    %v3749 = vmul.f32 %v3717, %v2653
    %v3750 = vmul.f32 %v3718, %v2649
    %v3751 = vmul.f32 %v3719, %v2653
    %v3752 = vmul.f32 %v3720, %v2649
    %v3753 = vmul.f32 %v3721, %v2653
    %v3754 = vmul.f32 %v3722, %v2649
    %v3755 = vmul.f32 %v3723, %v2653
    %v3756 = vmul.f32 %v3724, %v2649
    %v3757 = vmul.f32 %v3725, %v2653
    %v3758 = vmul.f32 %v3726, %v2649
    %v3759 = vmul.f32 %v3727, %v2653
    %v3760 = vmul.f32 %v3728, %v2649
    %v3761 = vmul.f32 %v3729, %v2653
    %v3762 = vmul.f32 %v3730, %v2649
    %v3763 = vmul.f32 %v3731, %v2653
    %v3764 = vmul.f32 %v3732, %v2649
    %v3765 = vmul.f32 %v3733, %v2653
    %v3766 = vadd.f32 %v3734, %v3735
    %v3767 = vrot.slane %v3766, 4
    %v3768 = vadd.f32 %v3766, %v3767
    %v3769 = vrot.slane %v3768, 2
    %v3770 = vadd.f32 %v3768, %v3769
    %v3771 = vrot.slane %v3770, 1
    %v3772 = vadd.f32 %v3770, %v3771
    %v3773 = vadd.f32 %v3736, %v3737
    %v3774 = vrot.slane %v3773, 4
    %v3775 = vadd.f32 %v3773, %v3774
    %v3776 = vrot.slane %v3775, 2
    %v3777 = vadd.f32 %v3775, %v3776
    %v3778 = vrot.slane %v3777, 1
    %v3779 = vadd.f32 %v3777, %v3778
    %v3780 = vadd.f32 %v3738, %v3739
    %v3781 = vrot.slane %v3780, 4
    %v3782 = vadd.f32 %v3780, %v3781
    %v3783 = vrot.slane %v3782, 2
    %v3784 = vadd.f32 %v3782, %v3783
    %v3785 = vrot.slane %v3784, 1
    %v3786 = vadd.f32 %v3784, %v3785
    %v3787 = vadd.f32 %v3740, %v3741
    %v3788 = vrot.slane %v3787, 4
    %v3789 = vadd.f32 %v3787, %v3788
    %v3790 = vrot.slane %v3789, 2
    %v3791 = vadd.f32 %v3789, %v3790
    %v3792 = vrot.slane %v3791, 1
    %v3793 = vadd.f32 %v3791, %v3792
    %v3794 = vadd.f32 %v3742, %v3743
    %v3795 = vrot.slane %v3794, 4
    %v3796 = vadd.f32 %v3794, %v3795
    %v3797 = vrot.slane %v3796, 2
    %v3798 = vadd.f32 %v3796, %v3797
    %v3799 = vrot.slane %v3798, 1
    %v3800 = vadd.f32 %v3798, %v3799
    %v3801 = vadd.f32 %v3744, %v3745
    %v3802 = vrot.slane %v3801, 4
    %v3803 = vadd.f32 %v3801, %v3802
    %v3804 = vrot.slane %v3803, 2
    %v3805 = vadd.f32 %v3803, %v3804
    %v3806 = vrot.slane %v3805, 1
    %v3807 = vadd.f32 %v3805, %v3806
    %v3808 = vadd.f32 %v3746, %v3747
    %v3809 = vrot.slane %v3808, 4
    %v3810 = vadd.f32 %v3808, %v3809
    %v3811 = vrot.slane %v3810, 2
    %v3812 = vadd.f32 %v3810, %v3811
    %v3813 = vrot.slane %v3812, 1
    %v3814 = vadd.f32 %v3812, %v3813
    %v3815 = vadd.f32 %v3748, %v3749
    %v3816 = vrot.slane %v3815, 4
    %v3817 = vadd.f32 %v3815, %v3816
    %v3818 = vrot.slane %v3817, 2
    %v3819 = vadd.f32 %v3817, %v3818
    %v3820 = vrot.slane %v3819, 1
    %v3821 = vadd.f32 %v3819, %v3820
    %v3822 = vadd.f32 %v3750, %v3751
    %v3823 = vrot.slane %v3822, 4
    %v3824 = vadd.f32 %v3822, %v3823
    %v3825 = vrot.slane %v3824, 2
    %v3826 = vadd.f32 %v3824, %v3825
    %v3827 = vrot.slane %v3826, 1
    %v3828 = vadd.f32 %v3826, %v3827
    %v3829 = vadd.f32 %v3752, %v3753
    %v3830 = vrot.slane %v3829, 4
    %v3831 = vadd.f32 %v3829, %v3830
    %v3832 = vrot.slane %v3831, 2
    %v3833 = vadd.f32 %v3831, %v3832
    %v3834 = vrot.slane %v3833, 1
    %v3835 = vadd.f32 %v3833, %v3834
    %v3836 = vadd.f32 %v3754, %v3755
    %v3837 = vrot.slane %v3836, 4
    %v3838 = vadd.f32 %v3836, %v3837
    %v3839 = vrot.slane %v3838, 2
    %v3840 = vadd.f32 %v3838, %v3839
    %v3841 = vrot.slane %v3840, 1
    %v3842 = vadd.f32 %v3840, %v3841
    %v3843 = vadd.f32 %v3756, %v3757
    %v3844 = vrot.slane %v3843, 4
    %v3845 = vadd.f32 %v3843, %v3844
    %v3846 = vrot.slane %v3845, 2
    %v3847 = vadd.f32 %v3845, %v3846
    %v3848 = vrot.slane %v3847, 1
    %v3849 = vadd.f32 %v3847, %v3848
    %v3850 = vadd.f32 %v3758, %v3759
    %v3851 = vrot.slane %v3850, 4
    %v3852 = vadd.f32 %v3850, %v3851
    %v3853 = vrot.slane %v3852, 2
    %v3854 = vadd.f32 %v3852, %v3853
    %v3855 = vrot.slane %v3854, 1
    %v3856 = vadd.f32 %v3854, %v3855
    %v3857 = vadd.f32 %v3760, %v3761
    %v3858 = vrot.slane %v3857, 4
    %v3859 = vadd.f32 %v3857, %v3858
    %v3860 = vrot.slane %v3859, 2
    %v3861 = vadd.f32 %v3859, %v3860
    %v3862 = vrot.slane %v3861, 1
    %v3863 = vadd.f32 %v3861, %v3862
    %v3864 = vadd.f32 %v3762, %v3763
    %v3865 = vrot.slane %v3864, 4
    %v3866 = vadd.f32 %v3864, %v3865
    %v3867 = vrot.slane %v3866, 2
    %v3868 = vadd.f32 %v3866, %v3867
    %v3869 = vrot.slane %v3868, 1
    %v3870 = vadd.f32 %v3868, %v3869
    %v3871 = vadd.f32 %v3764, %v3765
    %v3872 = vrot.slane %v3871, 4
    %v3873 = vadd.f32 %v3871, %v3872
    %v3874 = vrot.slane %v3873, 2
    %v3875 = vadd.f32 %v3873, %v3874
    %v3876 = vrot.slane %v3875, 1
    %v3877 = vadd.f32 %v3875, %v3876
    %v3879 = vlaneseq
    %v3880 = vshrl.u32 %v3879, 7
    %v3881 = vsub.s32 0, %v3880
    %v3882 = vrot.slane %v2578, %v3881
    %v3884 = vadd.f32 %v3772, %v3882
    %v3885 = vadd.f32 %v3779, %v3882
    %v3886 = vadd.f32 %v3786, %v3882
    %v3887 = vadd.f32 %v3793, %v3882
    %v3888 = vadd.f32 %v3800, %v3882
    %v3889 = vadd.f32 %v3807, %v3882
    %v3890 = vadd.f32 %v3814, %v3882
    %v3891 = vadd.f32 %v3821, %v3882
    %v3892 = vadd.f32 %v3828, %v3882
    %v3893 = vadd.f32 %v3835, %v3882
    %v3894 = vadd.f32 %v3842, %v3882
    %v3895 = vadd.f32 %v3849, %v3882
    %v3896 = vadd.f32 %v3856, %v3882
    %v3897 = vadd.f32 %v3863, %v3882
    %v3898 = vadd.f32 %v3870, %v3882
    %v3899 = vadd.f32 %v3877, %v3882
    %v3900 = vmax.f32 %v3884, 0.0
    %v3901 = vmax.f32 %v3885, 0.0
    %v3902 = vmax.f32 %v3886, 0.0
    %v3903 = vmax.f32 %v3887, 0.0
    %v3904 = vmax.f32 %v3888, 0.0
    %v3905 = vmax.f32 %v3889, 0.0
    %v3906 = vmax.f32 %v3890, 0.0
    %v3907 = vmax.f32 %v3891, 0.0
    %v3908 = vmax.f32 %v3892, 0.0
    %v3909 = vmax.f32 %v3893, 0.0
    %v3910 = vmax.f32 %v3894, 0.0
    %v3911 = vmax.f32 %v3895, 0.0
    %v3912 = vmax.f32 %v3896, 0.0
    %v3913 = vmax.f32 %v3897, 0.0
    %v3914 = vmax.f32 %v3898, 0.0
    %v3915 = vmax.f32 %v3899, 0.0
    %v3916 = vld [vmem:[#allocation28] sm:$0xff]
    %v3917 = vld [vmem:[#allocation28 + $0x8] sm:$0xff]
    %v3918 = vld [vmem:[#allocation28 + $0x10] sm:$0xff]
    %v3919 = vld [vmem:[#allocation28 + $0x18] sm:$0xff]
    %v3920 = vld [vmem:[#allocation28 + $0x20] sm:$0xff]
    %v3921 = vld [vmem:[#allocation28 + $0x28] sm:$0xff]
    %v3922 = vld [vmem:[#allocation28 + $0x30] sm:$0xff]
    %v3923 = vld [vmem:[#allocation28 + $0x38] sm:$0xff]
    %v3924 = vld [vmem:[#allocation28 + $0x40] sm:$0xff]
    %v3925 = vld [vmem:[#allocation28 + $0x48] sm:$0xff]
    %v3926 = vld [vmem:[#allocation28 + $0x50] sm:$0xff]
    %v3927 = vld [vmem:[#allocation28 + $0x58] sm:$0xff]
    %v3928 = vld [vmem:[#allocation28 + $0x60] sm:$0xff]
    %v3929 = vld [vmem:[#allocation28 + $0x68] sm:$0xff]
    %v3930 = vld [vmem:[#allocation28 + $0x70] sm:$0xff]
    %v3931 = vld [vmem:[#allocation28 + $0x78] sm:$0xff]
    %v3932 = vld [vmem:[%s51] sm:$0x3]
    %v3933 = vld [vmem:[#allocation29] sm:$0xf]
    %v3934 = vld [vmem:[#allocation29 + $0x4] sm:$0xf]
    %v3935 = vld [vmem:[#allocation29 + $0x8] sm:$0xf]
    %v3936 = vld [vmem:[#allocation29 + $0xc] sm:$0xf]
    %v3937 = vld [vmem:[#allocation29 + $0x10] sm:$0xf]
    %v3938 = vld [vmem:[#allocation29 + $0x14] sm:$0xf]
    %v3939 = vld [vmem:[#allocation29 + $0x18] sm:$0xf]
    %v3940 = vld [vmem:[#allocation29 + $0x1c] sm:$0xf]
    %v3941 = vld [vmem:[#allocation29 + $0x20] sm:$0xf]
    %v3942 = vld [vmem:[#allocation29 + $0x24] sm:$0xf]
    %v3943 = vld [vmem:[#allocation29 + $0x28] sm:$0xf]
    %v3944 = vld [vmem:[#allocation29 + $0x2c] sm:$0xf]
    %v3945 = vld [vmem:[#allocation29 + $0x30] sm:$0xf]
    %v3946 = vld [vmem:[#allocation29 + $0x34] sm:$0xf]
    %v3947 = vld [vmem:[#allocation29 + $0x38] sm:$0xf]
    %v3948 = vld [vmem:[#allocation29 + $0x3c] sm:$0xf]
    %v3949 = vld [vmem:[%s55] sm:$0x1]
    %v3950 = vpack.c.bf16 %v3900, %v3900
    %v3951 = vpack.c.bf16 %v3901, %v3901
    %v3952 = vpack.c.bf16 %v3902, %v3902
    %v3953 = vpack.c.bf16 %v3903, %v3903
    %v3954 = vpack.c.bf16 %v3904, %v3904
    %v3955 = vpack.c.bf16 %v3905, %v3905
    %v3956 = vpack.c.bf16 %v3906, %v3906
    %v3957 = vpack.c.bf16 %v3907, %v3907
    %v3958 = vpack.c.bf16 %v3908, %v3908
    %v3959 = vpack.c.bf16 %v3909, %v3909
    %v3960 = vpack.c.bf16 %v3910, %v3910
    %v3961 = vpack.c.bf16 %v3911, %v3911
    %v3962 = vpack.c.bf16 %v3912, %v3912
    %v3963 = vpack.c.bf16 %v3913, %v3913
    %v3964 = vpack.c.bf16 %v3914, %v3914
    %v3965 = vpack.c.bf16 %v3915, %v3915
    %v3967 = vlaneseq
    %v3968 = vshrl.u32 %v3967, 7
    %v3969 = vsub.s32 0, %v3968
    %v3970 = vrot.slane %v3932, %v3969
    %v3971 = vlaneseq
    %v3972 = vshrl.u32 %v3971, 7
    %v3973 = vsub.s32 1, %v3972
    %v3974 = vrot.slane %v3932, %v3973
    %v3993 = vunpack.c.l.b16 %v3950
    %v3994 = vunpack.c.l.b16 %v3951
    %v3995 = vunpack.c.l.b16 %v3952
    %v3996 = vunpack.c.l.b16 %v3953
    %v3997 = vunpack.c.l.b16 %v3954
    %v3998 = vunpack.c.l.b16 %v3955
    %v3999 = vunpack.c.l.b16 %v3956
    %v4000 = vunpack.c.l.b16 %v3957
    %v4001 = vunpack.c.l.b16 %v3958
    %v4002 = vunpack.c.l.b16 %v3959
    %v4003 = vunpack.c.l.b16 %v3960
    %v4004 = vunpack.c.l.b16 %v3961
    %v4005 = vunpack.c.l.b16 %v3962
    %v4006 = vunpack.c.l.b16 %v3963
    %v4007 = vunpack.c.l.b16 %v3964
    %v4008 = vunpack.c.l.b16 %v3965
    %v4009 = vrot.slane %v3994, 7
    %v4010 = vsel %vm1132, %v4009, %v3993
    %v4011 = vrot.slane %v3995, 6
    %v4012 = vsel %vm1135, %v4011, %v4010
    %v4013 = vrot.slane %v3996, 5
    %v4014 = vsel %vm1138, %v4013, %v4012
    %v4015 = vrot.slane %v3997, 4
    %v4016 = vsel %vm1141, %v4015, %v4014
    %v4017 = vrot.slane %v3998, 3
    %v4018 = vsel %vm1144, %v4017, %v4016
    %v4019 = vrot.slane %v3999, 2
    %v4020 = vsel %vm1147, %v4019, %v4018
    %v4021 = vrot.slane %v4000, 1
    %v4022 = vsel %vm1150, %v4021, %v4020
    %v4023 = vrot.slane %v4002, 7
    %v4024 = vsel %vm1132, %v4023, %v4001
    %v4025 = vrot.slane %v4003, 6
    %v4026 = vsel %vm1135, %v4025, %v4024
    %v4027 = vrot.slane %v4004, 5
    %v4028 = vsel %vm1138, %v4027, %v4026
    %v4029 = vrot.slane %v4005, 4
    %v4030 = vsel %vm1141, %v4029, %v4028
    %v4031 = vrot.slane %v4006, 3
    %v4032 = vsel %vm1144, %v4031, %v4030
    %v4033 = vrot.slane %v4007, 2
    %v4034 = vsel %vm1147, %v4033, %v4032
    %v4035 = vrot.slane %v4008, 1
    %v4036 = vsel %vm1150, %v4035, %v4034
    %v4037 = vpack.c.b16 %v4036, %v4022
    %v4055 = vunpack.c.l.b16 %v3916
    %v4056 = vunpack.c.h.b16 %v3916
    %v4057 = vunpack.c.l.b16 %v3917
    %v4058 = vunpack.c.h.b16 %v3917
    %v4059 = vunpack.c.l.b16 %v3918
    %v4060 = vunpack.c.h.b16 %v3918
    %v4061 = vunpack.c.l.b16 %v3919
    %v4062 = vunpack.c.h.b16 %v3919
    %v4063 = vunpack.c.l.b16 %v3920
    %v4064 = vunpack.c.h.b16 %v3920
    %v4065 = vunpack.c.l.b16 %v3921
    %v4066 = vunpack.c.h.b16 %v3921
    %v4067 = vunpack.c.l.b16 %v3922
    %v4068 = vunpack.c.h.b16 %v3922
    %v4069 = vunpack.c.l.b16 %v3923
    %v4070 = vunpack.c.h.b16 %v3923
    %v4071 = vunpack.c.l.b16 %v3924
    %v4072 = vunpack.c.h.b16 %v3924
    %v4073 = vunpack.c.l.b16 %v3925
    %v4074 = vunpack.c.h.b16 %v3925
    %v4075 = vunpack.c.l.b16 %v3926
    %v4076 = vunpack.c.h.b16 %v3926
    %v4077 = vunpack.c.l.b16 %v3927
    %v4078 = vunpack.c.h.b16 %v3927
    %v4079 = vunpack.c.l.b16 %v3928
    %v4080 = vunpack.c.h.b16 %v3928
    %v4081 = vunpack.c.l.b16 %v3929
    %v4082 = vunpack.c.h.b16 %v3929
    %v4083 = vunpack.c.l.b16 %v3930
    %v4084 = vunpack.c.h.b16 %v3930
    %v4085 = vunpack.c.l.b16 %v3931
    %v4086 = vunpack.c.h.b16 %v3931
    %v4087 = vpack.c.b16 %v4057, %v4055
    %v4088 = vpack.c.b16 %v4058, %v4056
    %v4089 = vpack.c.b16 %v4061, %v4059
    %v4090 = vpack.c.b16 %v4062, %v4060
    %v4091 = vpack.c.b16 %v4065, %v4063
    %v4092 = vpack.c.b16 %v4066, %v4064
    %v4093 = vpack.c.b16 %v4069, %v4067
    %v4094 = vpack.c.b16 %v4070, %v4068
    %v4095 = vpack.c.b16 %v4073, %v4071
    %v4096 = vpack.c.b16 %v4074, %v4072
    %v4097 = vpack.c.b16 %v4077, %v4075
    %v4098 = vpack.c.b16 %v4078, %v4076
    %v4099 = vpack.c.b16 %v4081, %v4079
    %v4100 = vpack.c.b16 %v4082, %v4080
    %v4101 = vpack.c.b16 %v4085, %v4083
    %v4102 = vpack.c.b16 %v4086, %v4084
    %4119 = vmatprep.subr.bf16.mxu0 %v4088
    %4120 = vmatpush1.bf16.msra.mxu0 %v4087
    %4121 = vmatprep.subr.bf16.mxu0 %v4090
    %4122 = vmatpush1.bf16.msra.mxu0 %v4089
    %4123 = vmatprep.subr.bf16.mxu0 %v4092
    %4124 = vmatpush1.bf16.msra.mxu0 %v4091
    %4125 = vmatprep.subr.bf16.mxu0 %v4094
    %4126 = vmatpush1.bf16.msra.mxu0 %v4093
    %4127 = vmatprep.subr.bf16.mxu0 %v4096
    %4128 = vmatpush1.bf16.msra.mxu0 %v4095
    %4129 = vmatprep.subr.bf16.mxu0 %v4098
    %4130 = vmatpush1.bf16.msra.mxu0 %v4097
    %4131 = vmatprep.subr.bf16.mxu0 %v4100
    %4132 = vmatpush1.bf16.msra.mxu0 %v4099
    %4133 = vmatprep.subr.bf16.mxu0 %v4102
    %4134 = vmatpush1.bf16.msra.mxu0 %v4101
    %4135 = vmatprep.subr.bf16.mxu0 0
    %4136 = vmatpush1.bf16.msra.mxu0 0
    %4137 = vmatprep.subr.bf16.mxu0 0
    %4138 = vmatpush1.bf16.msra.mxu0 0
    %4139 = vmatprep.subr.bf16.mxu0 0
    %4140 = vmatpush1.bf16.msra.mxu0 0
    %4141 = vmatprep.subr.bf16.mxu0 0
    %4142 = vmatpush1.bf16.msra.mxu0 0
    %4143 = vmatprep.subr.bf16.mxu0 0
    %4144 = vmatpush1.bf16.msra.mxu0 0
    %4145 = vmatprep.subr.bf16.mxu0 0
    %4146 = vmatpush1.bf16.msra.mxu0 0
    %4147 = vmatprep.subr.bf16.mxu0 0
    %4148 = vmatpush1.bf16.msra.mxu0 0
    %4149 = vmatprep.subr.bf16.mxu0 0
    %4150 = vmatpush1.bf16.msra.mxu0 0
    %4151 = vmatprep.mubr.bf16.mxu0 0
    %4152 = vmatmul.mubr.bf16.gmra.mrb[0].mxu0 %v4037
    %v4153 = vpop.f32.mrb[0].mxu0
    %v4154 = vadd.f32 %v3970, %v4153
    %v4155 = vpop.f32.mrb[0].mxu0
    %v4156 = vadd.f32 %v3974, %v4155
    %v4157 = vpop.f32.mrb[0].mxu0
    %v4158 = vadd.f32 %v3970, %v4157
    %v4159 = vpop.f32.mrb[0].mxu0
    %v4160 = vadd.f32 %v3974, %v4159
    %4161 = vdwg.mxu0
    %v4164 = vcombine.high %v4156, %v4156
    %v4166 = vunpack.c.l.s4 1966171168
    %v4167 = vunpack.c.0.s8 %v4166
    %v4168 = vlaneseq
    %v4169 = vshrl.u32 %v4168, 7
    %v4170 = vsub.s32 %v4167, %v4169
    %v4171 = vrot.slane %v4156, %v4170
    %v4173 = vunpack.c.l.s4 1966171168
    %v4174 = vunpack.c.0.s8 %v4173
    %v4175 = vlaneseq
    %v4176 = vshrl.u32 %v4175, 7
    %v4177 = vsub.s32 %v4174, %v4176
    %v4178 = vrot.slane %v4164, %v4177
    %v4179 = vcombine.high %v4171, %v4171
    %v4180 = vcombine.high %v4178, %v4178
    %v4182 = vunpack.c.l.s4 1966171168
    %v4183 = vunpack.c.0.s8 %v4182
    %v4184 = vlaneseq
    %v4185 = vshrl.u32 %v4184, 7
    %v4186 = vsub.s32 %v4183, %v4185
    %v4187 = vrot.slane %v4171, %v4186
    %v4189 = vunpack.c.l.s4 1966171168
    %v4190 = vunpack.c.0.s8 %v4189
    %v4191 = vlaneseq
    %v4192 = vshrl.u32 %v4191, 7
    %v4193 = vsub.s32 %v4190, %v4192
    %v4194 = vrot.slane %v4178, %v4193
    %v4196 = vunpack.c.l.s4 1966171168
    %v4197 = vunpack.c.0.s8 %v4196
    %v4198 = vlaneseq
    %v4199 = vshrl.u32 %v4198, 7
    %v4200 = vsub.s32 %v4197, %v4199
    %v4201 = vrot.slane %v4179, %v4200
    %v4203 = vunpack.c.l.s4 1966171168
    %v4204 = vunpack.c.0.s8 %v4203
    %v4205 = vlaneseq
    %v4206 = vshrl.u32 %v4205, 7
    %v4207 = vsub.s32 %v4204, %v4206
    %v4208 = vrot.slane %v4180, %v4207
    %v4209 = vcombine.high %v4187, %v4187
    %v4210 = vcombine.high %v4194, %v4194
    %v4211 = vcombine.high %v4201, %v4201
    %v4212 = vcombine.high %v4208, %v4208
    %v4213 = vcombine.high %v4160, %v4160
    %v4215 = vunpack.c.l.s4 1966171168
    %v4216 = vunpack.c.0.s8 %v4215
    %v4217 = vlaneseq
    %v4218 = vshrl.u32 %v4217, 7
    %v4219 = vsub.s32 %v4216, %v4218
    %v4220 = vrot.slane %v4160, %v4219
    %v4222 = vunpack.c.l.s4 1966171168
    %v4223 = vunpack.c.0.s8 %v4222
    %v4224 = vlaneseq
    %v4225 = vshrl.u32 %v4224, 7
    %v4226 = vsub.s32 %v4223, %v4225
    %v4227 = vrot.slane %v4213, %v4226
    %v4228 = vcombine.high %v4220, %v4220
    %v4229 = vcombine.high %v4227, %v4227
    %v4231 = vunpack.c.l.s4 1966171168
    %v4232 = vunpack.c.0.s8 %v4231
    %v4233 = vlaneseq
    %v4234 = vshrl.u32 %v4233, 7
    %v4235 = vsub.s32 %v4232, %v4234
    %v4236 = vrot.slane %v4220, %v4235
    %v4238 = vunpack.c.l.s4 1966171168
    %v4239 = vunpack.c.0.s8 %v4238
    %v4240 = vlaneseq
    %v4241 = vshrl.u32 %v4240, 7
    %v4242 = vsub.s32 %v4239, %v4241
    %v4243 = vrot.slane %v4227, %v4242
    %v4245 = vunpack.c.l.s4 1966171168
    %v4246 = vunpack.c.0.s8 %v4245
    %v4247 = vlaneseq
    %v4248 = vshrl.u32 %v4247, 7
    %v4249 = vsub.s32 %v4246, %v4248
    %v4250 = vrot.slane %v4228, %v4249
    %v4252 = vunpack.c.l.s4 1966171168
    %v4253 = vunpack.c.0.s8 %v4252
    %v4254 = vlaneseq
    %v4255 = vshrl.u32 %v4254, 7
    %v4256 = vsub.s32 %v4253, %v4255
    %v4257 = vrot.slane %v4229, %v4256
    %v4258 = vcombine.high %v4236, %v4236
    %v4259 = vcombine.high %v4243, %v4243
    %v4260 = vcombine.high %v4250, %v4250
    %v4261 = vcombine.high %v4257, %v4257
    %v4262 = vlaneseq
    %v4263 = vshrl.u32 %v4262, 7
    %v4264 = vsub.s32 0, %v4263
    %v4265 = vrot.slane %v4187, %v4264
    %v4266 = vlaneseq
    %v4267 = vshrl.u32 %v4266, 7
    %v4268 = vsub.s32 0, %v4267
    %v4269 = vrot.slane %v4201, %v4268
    %v4270 = vlaneseq
    %v4271 = vshrl.u32 %v4270, 7
    %v4272 = vsub.s32 0, %v4271
    %v4273 = vrot.slane %v4209, %v4272
    %v4274 = vlaneseq
    %v4275 = vshrl.u32 %v4274, 7
    %v4276 = vsub.s32 0, %v4275
    %v4277 = vrot.slane %v4211, %v4276
    %v4278 = vlaneseq
    %v4279 = vshrl.u32 %v4278, 7
    %v4280 = vsub.s32 0, %v4279
    %v4281 = vrot.slane %v4194, %v4280
    %v4282 = vlaneseq
    %v4283 = vshrl.u32 %v4282, 7
    %v4284 = vsub.s32 0, %v4283
    %v4285 = vrot.slane %v4208, %v4284
    %v4286 = vlaneseq
    %v4287 = vshrl.u32 %v4286, 7
    %v4288 = vsub.s32 0, %v4287
    %v4289 = vrot.slane %v4210, %v4288
    %v4290 = vlaneseq
    %v4291 = vshrl.u32 %v4290, 7
    %v4292 = vsub.s32 0, %v4291
    %v4293 = vrot.slane %v4212, %v4292
    %v4294 = vlaneseq
    %v4295 = vshrl.u32 %v4294, 7
    %v4296 = vsub.s32 0, %v4295
    %v4297 = vrot.slane %v4236, %v4296
    %v4298 = vlaneseq
    %v4299 = vshrl.u32 %v4298, 7
    %v4300 = vsub.s32 0, %v4299
    %v4301 = vrot.slane %v4250, %v4300
    %v4302 = vlaneseq
    %v4303 = vshrl.u32 %v4302, 7
    %v4304 = vsub.s32 0, %v4303
    %v4305 = vrot.slane %v4258, %v4304
    %v4306 = vlaneseq
    %v4307 = vshrl.u32 %v4306, 7
    %v4308 = vsub.s32 0, %v4307
    %v4309 = vrot.slane %v4260, %v4308
    %v4310 = vlaneseq
    %v4311 = vshrl.u32 %v4310, 7
    %v4312 = vsub.s32 0, %v4311
    %v4313 = vrot.slane %v4243, %v4312
    %v4314 = vlaneseq
    %v4315 = vshrl.u32 %v4314, 7
    %v4316 = vsub.s32 0, %v4315
    %v4317 = vrot.slane %v4257, %v4316
    %v4318 = vlaneseq
    %v4319 = vshrl.u32 %v4318, 7
    %v4320 = vsub.s32 0, %v4319
    %v4321 = vrot.slane %v4259, %v4320
    %v4322 = vlaneseq
    %v4323 = vshrl.u32 %v4322, 7
    %v4324 = vsub.s32 0, %v4323
    %v4325 = vrot.slane %v4261, %v4324
    %v4342 = vadd.f32 %v4265, %v4154
    %v4343 = vadd.f32 %v4265, %v4158
    %v4344 = vadd.f32 %v4269, %v4154
    %v4345 = vadd.f32 %v4269, %v4158
    %v4346 = vadd.f32 %v4273, %v4154
    %v4347 = vadd.f32 %v4273, %v4158
    %v4348 = vadd.f32 %v4277, %v4154
    %v4349 = vadd.f32 %v4277, %v4158
    %v4350 = vadd.f32 %v4281, %v4154
    %v4351 = vadd.f32 %v4281, %v4158
    %v4352 = vadd.f32 %v4285, %v4154
    %v4353 = vadd.f32 %v4285, %v4158
    %v4354 = vadd.f32 %v4289, %v4154
    %v4355 = vadd.f32 %v4289, %v4158
    %v4356 = vadd.f32 %v4293, %v4154
    %v4357 = vadd.f32 %v4293, %v4158
    %v4358 = vadd.f32 %v4297, %v4154
    %v4359 = vadd.f32 %v4297, %v4158
    %v4360 = vadd.f32 %v4301, %v4154
    %v4361 = vadd.f32 %v4301, %v4158
    %v4362 = vadd.f32 %v4305, %v4154
    %v4363 = vadd.f32 %v4305, %v4158
    %v4364 = vadd.f32 %v4309, %v4154
    %v4365 = vadd.f32 %v4309, %v4158
    %v4366 = vadd.f32 %v4313, %v4154
    %v4367 = vadd.f32 %v4313, %v4158
    %v4368 = vadd.f32 %v4317, %v4154
    %v4369 = vadd.f32 %v4317, %v4158
    %v4370 = vadd.f32 %v4321, %v4154
    %v4371 = vadd.f32 %v4321, %v4158
    %v4372 = vadd.f32 %v4325, %v4154
    %v4373 = vadd.f32 %v4325, %v4158
    %v4374 = vmul.f32 %v4342, 0.2
    %v4375 = vmul.f32 %v4343, 0.2
    %v4376 = vmul.f32 %v4344, 0.2
    %v4377 = vmul.f32 %v4345, 0.2
    %v4378 = vmul.f32 %v4346, 0.2
    %v4379 = vmul.f32 %v4347, 0.2
    %v4380 = vmul.f32 %v4348, 0.2
    %v4381 = vmul.f32 %v4349, 0.2
    %v4382 = vmul.f32 %v4350, 0.2
    %v4383 = vmul.f32 %v4351, 0.2
    %v4384 = vmul.f32 %v4352, 0.2
    %v4385 = vmul.f32 %v4353, 0.2
    %v4386 = vmul.f32 %v4354, 0.2
    %v4387 = vmul.f32 %v4355, 0.2
    %v4388 = vmul.f32 %v4356, 0.2
    %v4389 = vmul.f32 %v4357, 0.2
    %v4390 = vmul.f32 %v4358, 0.2
    %v4391 = vmul.f32 %v4359, 0.2
    %v4392 = vmul.f32 %v4360, 0.2
    %v4393 = vmul.f32 %v4361, 0.2
    %v4394 = vmul.f32 %v4362, 0.2
    %v4395 = vmul.f32 %v4363, 0.2
    %v4396 = vmul.f32 %v4364, 0.2
    %v4397 = vmul.f32 %v4365, 0.2
    %v4398 = vmul.f32 %v4366, 0.2
    %v4399 = vmul.f32 %v4367, 0.2
    %v4400 = vmul.f32 %v4368, 0.2
    %v4401 = vmul.f32 %v4369, 0.2
    %v4402 = vmul.f32 %v4370, 0.2
    %v4403 = vmul.f32 %v4371, 0.2
    %v4404 = vmul.f32 %v4372, 0.2
    %v4405 = vmul.f32 %v4373, 0.2
    %v4406 = vmax.f32 %v4342, %v4374
    %v4407 = vmax.f32 %v4343, %v4375
    %v4408 = vmax.f32 %v4344, %v4376
    %v4409 = vmax.f32 %v4345, %v4377
    %v4410 = vmax.f32 %v4346, %v4378
    %v4411 = vmax.f32 %v4347, %v4379
    %v4412 = vmax.f32 %v4348, %v4380
    %v4413 = vmax.f32 %v4349, %v4381
    %v4414 = vmax.f32 %v4350, %v4382
    %v4415 = vmax.f32 %v4351, %v4383
    %v4416 = vmax.f32 %v4352, %v4384
    %v4417 = vmax.f32 %v4353, %v4385
    %v4418 = vmax.f32 %v4354, %v4386
    %v4419 = vmax.f32 %v4355, %v4387
    %v4420 = vmax.f32 %v4356, %v4388
    %v4421 = vmax.f32 %v4357, %v4389
    %v4422 = vmax.f32 %v4358, %v4390
    %v4423 = vmax.f32 %v4359, %v4391
    %v4424 = vmax.f32 %v4360, %v4392
    %v4425 = vmax.f32 %v4361, %v4393
    %v4426 = vmax.f32 %v4362, %v4394
    %v4427 = vmax.f32 %v4363, %v4395
    %v4428 = vmax.f32 %v4364, %v4396
    %v4429 = vmax.f32 %v4365, %v4397
    %v4430 = vmax.f32 %v4366, %v4398
    %v4431 = vmax.f32 %v4367, %v4399
    %v4432 = vmax.f32 %v4368, %v4400
    %v4433 = vmax.f32 %v4369, %v4401
    %v4434 = vmax.f32 %v4370, %v4402
    %v4435 = vmax.f32 %v4371, %v4403
    %v4436 = vmax.f32 %v4372, %v4404
    %v4437 = vmax.f32 %v4373, %v4405
    %v4438 = vpack.c.bf16 %v4407, %v4406
    %v4439 = vpack.c.bf16 %v4409, %v4408
    %v4440 = vpack.c.bf16 %v4411, %v4410
    %v4441 = vpack.c.bf16 %v4413, %v4412
    %v4442 = vpack.c.bf16 %v4415, %v4414
    %v4443 = vpack.c.bf16 %v4417, %v4416
    %v4444 = vpack.c.bf16 %v4419, %v4418
    %v4445 = vpack.c.bf16 %v4421, %v4420
    %v4446 = vpack.c.bf16 %v4423, %v4422
    %v4447 = vpack.c.bf16 %v4425, %v4424
    %v4448 = vpack.c.bf16 %v4427, %v4426
    %v4449 = vpack.c.bf16 %v4429, %v4428
    %v4450 = vpack.c.bf16 %v4431, %v4430
    %v4451 = vpack.c.bf16 %v4433, %v4432
    %v4452 = vpack.c.bf16 %v4435, %v4434
    %v4453 = vpack.c.bf16 %v4437, %v4436
    %v4470 = vunpack.c.l.b16 %v3933
    %v4471 = vunpack.c.l.b16 %v3934
    %v4472 = vunpack.c.l.b16 %v3935
    %v4473 = vunpack.c.l.b16 %v3936
    %v4474 = vunpack.c.l.b16 %v3937
    %v4475 = vunpack.c.l.b16 %v3938
    %v4476 = vunpack.c.l.b16 %v3939
    %v4477 = vunpack.c.l.b16 %v3940
    %v4478 = vunpack.c.l.b16 %v3941
    %v4479 = vunpack.c.l.b16 %v3942
    %v4480 = vunpack.c.l.b16 %v3943
    %v4481 = vunpack.c.l.b16 %v3944
    %v4482 = vunpack.c.l.b16 %v3945
    %v4483 = vunpack.c.l.b16 %v3946
    %v4484 = vunpack.c.l.b16 %v3947
    %v4485 = vunpack.c.l.b16 %v3948
    %v4486 = vpack.c.b16 %v4471, %v4470
    %v4487 = vpack.c.b16 %v4473, %v4472
    %v4488 = vpack.c.b16 %v4475, %v4474
    %v4489 = vpack.c.b16 %v4477, %v4476
    %v4490 = vpack.c.b16 %v4479, %v4478
    %v4491 = vpack.c.b16 %v4481, %v4480
    %v4492 = vpack.c.b16 %v4483, %v4482
    %v4493 = vpack.c.b16 %v4485, %v4484
    %4502 = vmatprep.subr.bf16.mxu0 0
    %4503 = vmatpush1.bf16.msra.mxu0 %v4486
    %4504 = vmatprep.subr.bf16.mxu0 0
    %4505 = vmatpush1.bf16.msra.mxu0 %v4487
    %4506 = vmatprep.subr.bf16.mxu0 0
    %4507 = vmatpush1.bf16.msra.mxu0 %v4488
    %4508 = vmatprep.subr.bf16.mxu0 0
    %4509 = vmatpush1.bf16.msra.mxu0 %v4489
    %4510 = vmatprep.subr.bf16.mxu0 0
    %4511 = vmatpush1.bf16.msra.mxu0 %v4490
    %4512 = vmatprep.subr.bf16.mxu0 0
    %4513 = vmatpush1.bf16.msra.mxu0 %v4491
    %4514 = vmatprep.subr.bf16.mxu0 0
    %4515 = vmatpush1.bf16.msra.mxu0 %v4492
    %4516 = vmatprep.subr.bf16.mxu0 0
    %4517 = vmatpush1.bf16.msra.mxu0 %v4493
    %4518 = vmatprep.subr.bf16.mxu0 0
    %4519 = vmatpush1.bf16.msra.mxu0 0
    %4520 = vmatprep.subr.bf16.mxu0 0
    %4521 = vmatpush1.bf16.msra.mxu0 0
    %4522 = vmatprep.subr.bf16.mxu0 0
    %4523 = vmatpush1.bf16.msra.mxu0 0
    %4524 = vmatprep.subr.bf16.mxu0 0
    %4525 = vmatpush1.bf16.msra.mxu0 0
    %4526 = vmatprep.subr.bf16.mxu0 0
    %4527 = vmatpush1.bf16.msra.mxu0 0
    %4528 = vmatprep.subr.bf16.mxu0 0
    %4529 = vmatpush1.bf16.msra.mxu0 0
    %4530 = vmatprep.subr.bf16.mxu0 0
    %4531 = vmatpush1.bf16.msra.mxu0 0
    %4532 = vmatprep.subr.bf16.mxu0 0
    %4533 = vmatpush1.bf16.msra.mxu0 0
    %4534 = vmatprep.mubr.bf16.mxu0 0
    %4535 = vmatmul.mubr.bf16.gmra.mrb[0].mxu0 %v4438
    %v4536 = vpop.f32.mrb[0].mxu0
    %v4537 = vadd.f32 0.0, %v4536
    %v4538 = vpop.f32.mrb[0].mxu0
    %v4539 = vpop.f32.mrb[0].mxu0
    %v4540 = vadd.f32 0.0, %v4539
    %v4541 = vpop.f32.mrb[0].mxu0
    %4542 = vmatprep.mubr.bf16.mxu0 0
    %4543 = vmatmul.mubr.bf16.gmra.mrb[0].mxu0 %v4439
    %v4544 = vpop.f32.mrb[0].mxu0
    %v4545 = vadd.f32 0.0, %v4544
    %v4546 = vpop.f32.mrb[0].mxu0
    %v4547 = vpop.f32.mrb[0].mxu0
    %v4548 = vadd.f32 0.0, %v4547
    %v4549 = vpop.f32.mrb[0].mxu0
    %4550 = vmatprep.mubr.bf16.mxu0 0
    %4551 = vmatmul.mubr.bf16.gmra.mrb[0].mxu0 %v4440
    %v4552 = vpop.f32.mrb[0].mxu0
    %v4553 = vadd.f32 0.0, %v4552
    %v4554 = vpop.f32.mrb[0].mxu0
    %v4555 = vpop.f32.mrb[0].mxu0
    %v4556 = vadd.f32 0.0, %v4555
    %v4557 = vpop.f32.mrb[0].mxu0
    %4558 = vmatprep.mubr.bf16.mxu0 0
    %4559 = vmatmul.mubr.bf16.gmra.mrb[0].mxu0 %v4441
    %v4560 = vpop.f32.mrb[0].mxu0
    %v4561 = vadd.f32 0.0, %v4560
    %v4562 = vpop.f32.mrb[0].mxu0
    %v4563 = vpop.f32.mrb[0].mxu0
    %v4564 = vadd.f32 0.0, %v4563
    %v4565 = vpop.f32.mrb[0].mxu0
    %4566 = vmatprep.mubr.bf16.mxu0 0
    %4567 = vmatmul.mubr.bf16.gmra.mrb[0].mxu0 %v4442
    %v4568 = vpop.f32.mrb[0].mxu0
    %v4569 = vadd.f32 0.0, %v4568
    %v4570 = vpop.f32.mrb[0].mxu0
    %v4571 = vpop.f32.mrb[0].mxu0
    %v4572 = vadd.f32 0.0, %v4571
    %v4573 = vpop.f32.mrb[0].mxu0
    %4574 = vmatprep.mubr.bf16.mxu0 0
    %4575 = vmatmul.mubr.bf16.gmra.mrb[0].mxu0 %v4443
    %v4576 = vpop.f32.mrb[0].mxu0
    %v4577 = vadd.f32 0.0, %v4576
    %v4578 = vpop.f32.mrb[0].mxu0
    %v4579 = vpop.f32.mrb[0].mxu0
    %v4580 = vadd.f32 0.0, %v4579
    %v4581 = vpop.f32.mrb[0].mxu0
    %4582 = vmatprep.mubr.bf16.mxu0 0
    %4583 = vmatmul.mubr.bf16.gmra.mrb[0].mxu0 %v4444
    %v4584 = vpop.f32.mrb[0].mxu0
    %v4585 = vadd.f32 0.0, %v4584
    %v4586 = vpop.f32.mrb[0].mxu0
    %v4587 = vpop.f32.mrb[0].mxu0
    %v4588 = vadd.f32 0.0, %v4587
    %v4589 = vpop.f32.mrb[0].mxu0
    %4590 = vmatprep.mubr.bf16.mxu0 0
    %4591 = vmatmul.mubr.bf16.gmra.mrb[0].mxu0 %v4445
    %v4592 = vpop.f32.mrb[0].mxu0
    %v4593 = vadd.f32 0.0, %v4592
    %v4594 = vpop.f32.mrb[0].mxu0
    %v4595 = vpop.f32.mrb[0].mxu0
    %v4596 = vadd.f32 0.0, %v4595
    %v4597 = vpop.f32.mrb[0].mxu0
    %4598 = vmatprep.mubr.bf16.mxu0 0
    %4599 = vmatmul.mubr.bf16.gmra.mrb[0].mxu0 %v4446
    %v4600 = vpop.f32.mrb[0].mxu0
    %v4601 = vadd.f32 0.0, %v4600
    %v4602 = vpop.f32.mrb[0].mxu0
    %v4603 = vpop.f32.mrb[0].mxu0
    %v4604 = vadd.f32 0.0, %v4603
    %v4605 = vpop.f32.mrb[0].mxu0
    %4606 = vmatprep.mubr.bf16.mxu0 0
    %4607 = vmatmul.mubr.bf16.gmra.mrb[0].mxu0 %v4447
    %v4608 = vpop.f32.mrb[0].mxu0
    %v4609 = vadd.f32 0.0, %v4608
    %v4610 = vpop.f32.mrb[0].mxu0
    %v4611 = vpop.f32.mrb[0].mxu0
    %v4612 = vadd.f32 0.0, %v4611
    %v4613 = vpop.f32.mrb[0].mxu0
    %4614 = vmatprep.mubr.bf16.mxu0 0
    %4615 = vmatmul.mubr.bf16.gmra.mrb[0].mxu0 %v4448
    %v4616 = vpop.f32.mrb[0].mxu0
    %v4617 = vadd.f32 0.0, %v4616
    %v4618 = vpop.f32.mrb[0].mxu0
    %v4619 = vpop.f32.mrb[0].mxu0
    %v4620 = vadd.f32 0.0, %v4619
    %v4621 = vpop.f32.mrb[0].mxu0
    %4622 = vmatprep.mubr.bf16.mxu0 0
    %4623 = vmatmul.mubr.bf16.gmra.mrb[0].mxu0 %v4449
    %v4624 = vpop.f32.mrb[0].mxu0
    %v4625 = vadd.f32 0.0, %v4624
    %v4626 = vpop.f32.mrb[0].mxu0
    %v4627 = vpop.f32.mrb[0].mxu0
    %v4628 = vadd.f32 0.0, %v4627
    %v4629 = vpop.f32.mrb[0].mxu0
    %4630 = vmatprep.mubr.bf16.mxu0 0
    %4631 = vmatmul.mubr.bf16.gmra.mrb[0].mxu0 %v4450
    %v4632 = vpop.f32.mrb[0].mxu0
    %v4633 = vadd.f32 0.0, %v4632
    %v4634 = vpop.f32.mrb[0].mxu0
    %v4635 = vpop.f32.mrb[0].mxu0
    %v4636 = vadd.f32 0.0, %v4635
    %v4637 = vpop.f32.mrb[0].mxu0
    %4638 = vmatprep.mubr.bf16.mxu0 0
    %4639 = vmatmul.mubr.bf16.gmra.mrb[0].mxu0 %v4451
    %v4640 = vpop.f32.mrb[0].mxu0
    %v4641 = vadd.f32 0.0, %v4640
    %v4642 = vpop.f32.mrb[0].mxu0
    %v4643 = vpop.f32.mrb[0].mxu0
    %v4644 = vadd.f32 0.0, %v4643
    %v4645 = vpop.f32.mrb[0].mxu0
    %4646 = vmatprep.mubr.bf16.mxu0 0
    %4647 = vmatmul.mubr.bf16.gmra.mrb[0].mxu0 %v4452
    %v4648 = vpop.f32.mrb[0].mxu0
    %v4649 = vadd.f32 0.0, %v4648
    %v4650 = vpop.f32.mrb[0].mxu0
    %v4651 = vpop.f32.mrb[0].mxu0
    %v4652 = vadd.f32 0.0, %v4651
    %v4653 = vpop.f32.mrb[0].mxu0
    %4654 = vmatprep.mubr.bf16.mxu0 0
    %4655 = vmatmul.mubr.bf16.gmra.mrb[0].mxu0 %v4453
    %v4656 = vpop.f32.mrb[0].mxu0
    %v4657 = vadd.f32 0.0, %v4656
    %v4658 = vpop.f32.mrb[0].mxu0
    %v4659 = vpop.f32.mrb[0].mxu0
    %v4660 = vadd.f32 0.0, %v4659
    %v4661 = vpop.f32.mrb[0].mxu0
    %4662 = vdwg.mxu0
    %v4663 = vadd.f32 %v4537, %v3164
    %v4664 = vadd.f32 %v4540, %v3168
    %v4665 = vadd.f32 %v4545, %v3175
    %v4666 = vadd.f32 %v4548, %v3179
    %v4667 = vadd.f32 %v4553, %v3186
    %v4668 = vadd.f32 %v4556, %v3190
    %v4669 = vadd.f32 %v4561, %v3197
    %v4670 = vadd.f32 %v4564, %v3201
    %v4671 = vadd.f32 %v4569, %v3208
    %v4672 = vadd.f32 %v4572, %v3212
    %v4673 = vadd.f32 %v4577, %v3219
    %v4674 = vadd.f32 %v4580, %v3223
    %v4675 = vadd.f32 %v4585, %v3230
    %v4676 = vadd.f32 %v4588, %v3234
    %v4677 = vadd.f32 %v4593, %v3241
    %v4678 = vadd.f32 %v4596, %v3245
    %v4679 = vadd.f32 %v4601, %v3252
    %v4680 = vadd.f32 %v4604, %v3256
    %v4681 = vadd.f32 %v4609, %v3263
    %v4682 = vadd.f32 %v4612, %v3267
    %v4683 = vadd.f32 %v4617, %v3274
    %v4684 = vadd.f32 %v4620, %v3278
    %v4685 = vadd.f32 %v4625, %v3285
    %v4686 = vadd.f32 %v4628, %v3289
    %v4687 = vadd.f32 %v4633, %v3296
    %v4688 = vadd.f32 %v4636, %v3300
    %v4689 = vadd.f32 %v4641, %v3307
    %v4690 = vadd.f32 %v4644, %v3311
    %v4691 = vadd.f32 %v4649, %v3318
    %v4692 = vadd.f32 %v4652, %v3322
    %v4693 = vadd.f32 %v4657, %v3329
    %v4694 = vadd.f32 %v4660, %v3333
    %v4695 = vmax.f32 %v4663, %v4664
    %v4696 = vrot.slane %v4695, 4
    %v4697 = vmax.f32 %v4695, %v4696
    %v4698 = vrot.slane %v4697, 2
    %v4699 = vmax.f32 %v4697, %v4698
    %v4700 = vrot.slane %v4699, 1
    %v4701 = vmax.f32 %v4699, %v4700
    %v4702 = vmax.f32 %v4665, %v4666
    %v4703 = vrot.slane %v4702, 4
    %v4704 = vmax.f32 %v4702, %v4703
    %v4705 = vrot.slane %v4704, 2
    %v4706 = vmax.f32 %v4704, %v4705
    %v4707 = vrot.slane %v4706, 1
    %v4708 = vmax.f32 %v4706, %v4707
    %v4709 = vmax.f32 %v4667, %v4668
    %v4710 = vrot.slane %v4709, 4
    %v4711 = vmax.f32 %v4709, %v4710
    %v4712 = vrot.slane %v4711, 2
    %v4713 = vmax.f32 %v4711, %v4712
    %v4714 = vrot.slane %v4713, 1
    %v4715 = vmax.f32 %v4713, %v4714
    %v4716 = vmax.f32 %v4669, %v4670
    %v4717 = vrot.slane %v4716, 4
    %v4718 = vmax.f32 %v4716, %v4717
    %v4719 = vrot.slane %v4718, 2
    %v4720 = vmax.f32 %v4718, %v4719
    %v4721 = vrot.slane %v4720, 1
    %v4722 = vmax.f32 %v4720, %v4721
    %v4723 = vmax.f32 %v4671, %v4672
    %v4724 = vrot.slane %v4723, 4
    %v4725 = vmax.f32 %v4723, %v4724
    %v4726 = vrot.slane %v4725, 2
    %v4727 = vmax.f32 %v4725, %v4726
    %v4728 = vrot.slane %v4727, 1
    %v4729 = vmax.f32 %v4727, %v4728
    %v4730 = vmax.f32 %v4673, %v4674
    %v4731 = vrot.slane %v4730, 4
    %v4732 = vmax.f32 %v4730, %v4731
    %v4733 = vrot.slane %v4732, 2
    %v4734 = vmax.f32 %v4732, %v4733
    %v4735 = vrot.slane %v4734, 1
    %v4736 = vmax.f32 %v4734, %v4735
    %v4737 = vmax.f32 %v4675, %v4676
    %v4738 = vrot.slane %v4737, 4
    %v4739 = vmax.f32 %v4737, %v4738
    %v4740 = vrot.slane %v4739, 2
    %v4741 = vmax.f32 %v4739, %v4740
    %v4742 = vrot.slane %v4741, 1
    %v4743 = vmax.f32 %v4741, %v4742
    %v4744 = vmax.f32 %v4677, %v4678
    %v4745 = vrot.slane %v4744, 4
    %v4746 = vmax.f32 %v4744, %v4745
    %v4747 = vrot.slane %v4746, 2
    %v4748 = vmax.f32 %v4746, %v4747
    %v4749 = vrot.slane %v4748, 1
    %v4750 = vmax.f32 %v4748, %v4749
    %v4751 = vmax.f32 %v4679, %v4680
    %v4752 = vrot.slane %v4751, 4
    %v4753 = vmax.f32 %v4751, %v4752
    %v4754 = vrot.slane %v4753, 2
    %v4755 = vmax.f32 %v4753, %v4754
    %v4756 = vrot.slane %v4755, 1
    %v4757 = vmax.f32 %v4755, %v4756
    %v4758 = vmax.f32 %v4681, %v4682
    %v4759 = vrot.slane %v4758, 4
    %v4760 = vmax.f32 %v4758, %v4759
    %v4761 = vrot.slane %v4760, 2
    %v4762 = vmax.f32 %v4760, %v4761
    %v4763 = vrot.slane %v4762, 1
    %v4764 = vmax.f32 %v4762, %v4763
    %v4765 = vmax.f32 %v4683, %v4684
    %v4766 = vrot.slane %v4765, 4
    %v4767 = vmax.f32 %v4765, %v4766
    %v4768 = vrot.slane %v4767, 2
    %v4769 = vmax.f32 %v4767, %v4768
    %v4770 = vrot.slane %v4769, 1
    %v4771 = vmax.f32 %v4769, %v4770
    %v4772 = vmax.f32 %v4685, %v4686
    %v4773 = vrot.slane %v4772, 4
    %v4774 = vmax.f32 %v4772, %v4773
    %v4775 = vrot.slane %v4774, 2
    %v4776 = vmax.f32 %v4774, %v4775
    %v4777 = vrot.slane %v4776, 1
    %v4778 = vmax.f32 %v4776, %v4777
    %v4779 = vmax.f32 %v4687, %v4688
    %v4780 = vrot.slane %v4779, 4
    %v4781 = vmax.f32 %v4779, %v4780
    %v4782 = vrot.slane %v4781, 2
    %v4783 = vmax.f32 %v4781, %v4782
    %v4784 = vrot.slane %v4783, 1
    %v4785 = vmax.f32 %v4783, %v4784
    %v4786 = vmax.f32 %v4689, %v4690
    %v4787 = vrot.slane %v4786, 4
    %v4788 = vmax.f32 %v4786, %v4787
    %v4789 = vrot.slane %v4788, 2
    %v4790 = vmax.f32 %v4788, %v4789
    %v4791 = vrot.slane %v4790, 1
    %v4792 = vmax.f32 %v4790, %v4791
    %v4793 = vmax.f32 %v4691, %v4692
    %v4794 = vrot.slane %v4793, 4
    %v4795 = vmax.f32 %v4793, %v4794
    %v4796 = vrot.slane %v4795, 2
    %v4797 = vmax.f32 %v4795, %v4796
    %v4798 = vrot.slane %v4797, 1
    %v4799 = vmax.f32 %v4797, %v4798
    %v4800 = vmax.f32 %v4693, %v4694
    %v4801 = vrot.slane %v4800, 4
    %v4802 = vmax.f32 %v4800, %v4801
    %v4803 = vrot.slane %v4802, 2
    %v4804 = vmax.f32 %v4802, %v4803
    %v4805 = vrot.slane %v4804, 1
    %v4806 = vmax.f32 %v4804, %v4805
    %v4807 = vsub.f32 %v4663, %v4701
    %v4808 = vsub.f32 %v4664, %v4701
    %v4809 = vsub.f32 %v4665, %v4708
    %v4810 = vsub.f32 %v4666, %v4708
    %v4811 = vsub.f32 %v4667, %v4715
    %v4812 = vsub.f32 %v4668, %v4715
    %v4813 = vsub.f32 %v4669, %v4722
    %v4814 = vsub.f32 %v4670, %v4722
    %v4815 = vsub.f32 %v4671, %v4729
    %v4816 = vsub.f32 %v4672, %v4729
    %v4817 = vsub.f32 %v4673, %v4736
    %v4818 = vsub.f32 %v4674, %v4736
    %v4819 = vsub.f32 %v4675, %v4743
    %v4820 = vsub.f32 %v4676, %v4743
    %v4821 = vsub.f32 %v4677, %v4750
    %v4822 = vsub.f32 %v4678, %v4750
    %v4823 = vsub.f32 %v4679, %v4757
    %v4824 = vsub.f32 %v4680, %v4757
    %v4825 = vsub.f32 %v4681, %v4764
    %v4826 = vsub.f32 %v4682, %v4764
    %v4827 = vsub.f32 %v4683, %v4771
    %v4828 = vsub.f32 %v4684, %v4771
    %v4829 = vsub.f32 %v4685, %v4778
    %v4830 = vsub.f32 %v4686, %v4778
    %v4831 = vsub.f32 %v4687, %v4785
    %v4832 = vsub.f32 %v4688, %v4785
    %v4833 = vsub.f32 %v4689, %v4792
    %v4834 = vsub.f32 %v4690, %v4792
    %v4835 = vsub.f32 %v4691, %v4799
    %v4836 = vsub.f32 %v4692, %v4799
    %v4837 = vsub.f32 %v4693, %v4806
    %v4838 = vsub.f32 %v4694, %v4806
    %v4839 = vmul.f32 %v4807, 1.442695
    %v4840 = vpow.pop %v4839
    %v4841 = vmul.f32 %v4808, 1.442695
    %v4842 = vpow.pop %v4841
    %v4843 = vmul.f32 %v4809, 1.442695
    %v4844 = vpow.pop %v4843
    %v4845 = vmul.f32 %v4810, 1.442695
    %v4846 = vpow.pop %v4845
    %v4847 = vmul.f32 %v4811, 1.442695
    %v4848 = vpow.pop %v4847
    %v4849 = vmul.f32 %v4812, 1.442695
    %v4850 = vpow.pop %v4849
    %v4851 = vmul.f32 %v4813, 1.442695
    %v4852 = vpow.pop %v4851
    %v4853 = vmul.f32 %v4814, 1.442695
    %v4854 = vpow.pop %v4853
    %v4855 = vmul.f32 %v4815, 1.442695
    %v4856 = vpow.pop %v4855
    %v4857 = vmul.f32 %v4816, 1.442695
    %v4858 = vpow.pop %v4857
    %v4859 = vmul.f32 %v4817, 1.442695
    %v4860 = vpow.pop %v4859
    %v4861 = vmul.f32 %v4818, 1.442695
    %v4862 = vpow.pop %v4861
    %v4863 = vmul.f32 %v4819, 1.442695
    %v4864 = vpow.pop %v4863
    %v4865 = vmul.f32 %v4820, 1.442695
    %v4866 = vpow.pop %v4865
    %v4867 = vmul.f32 %v4821, 1.442695
    %v4868 = vpow.pop %v4867
    %v4869 = vmul.f32 %v4822, 1.442695
    %v4870 = vpow.pop %v4869
    %v4871 = vmul.f32 %v4823, 1.442695
    %v4872 = vpow.pop %v4871
    %v4873 = vmul.f32 %v4824, 1.442695
    %v4874 = vpow.pop %v4873
    %v4875 = vmul.f32 %v4825, 1.442695
    %v4876 = vpow.pop %v4875
    %v4877 = vmul.f32 %v4826, 1.442695
    %v4878 = vpow.pop %v4877
    %v4879 = vmul.f32 %v4827, 1.442695
    %v4880 = vpow.pop %v4879
    %v4881 = vmul.f32 %v4828, 1.442695
    %v4882 = vpow.pop %v4881
    %v4883 = vmul.f32 %v4829, 1.442695
    %v4884 = vpow.pop %v4883
    %v4885 = vmul.f32 %v4830, 1.442695
    %v4886 = vpow.pop %v4885
    %v4887 = vmul.f32 %v4831, 1.442695
    %v4888 = vpow.pop %v4887
    %v4889 = vmul.f32 %v4832, 1.442695
    %v4890 = vpow.pop %v4889
    %v4891 = vmul.f32 %v4833, 1.442695
    %v4892 = vpow.pop %v4891
    %v4893 = vmul.f32 %v4834, 1.442695
    %v4894 = vpow.pop %v4893
    %v4895 = vmul.f32 %v4835, 1.442695
    %v4896 = vpow.pop %v4895
    %v4897 = vmul.f32 %v4836, 1.442695
    %v4898 = vpow.pop %v4897
    %v4899 = vmul.f32 %v4837, 1.442695
    %v4900 = vpow.pop %v4899
    %v4901 = vmul.f32 %v4838, 1.442695
    %v4902 = vpow.pop %v4901
    %v4903 = vadd.f32 %v4840, %v4842
    %v4904 = vrot.slane %v4903, 4
    %v4905 = vadd.f32 %v4903, %v4904
    %v4906 = vrot.slane %v4905, 2
    %v4907 = vadd.f32 %v4905, %v4906
    %v4908 = vrot.slane %v4907, 1
    %v4909 = vadd.f32 %v4907, %v4908
    %v4910 = vadd.f32 %v4844, %v4846
    %v4911 = vrot.slane %v4910, 4
    %v4912 = vadd.f32 %v4910, %v4911
    %v4913 = vrot.slane %v4912, 2
    %v4914 = vadd.f32 %v4912, %v4913
    %v4915 = vrot.slane %v4914, 1
    %v4916 = vadd.f32 %v4914, %v4915
    %v4917 = vadd.f32 %v4848, %v4850
    %v4918 = vrot.slane %v4917, 4
    %v4919 = vadd.f32 %v4917, %v4918
    %v4920 = vrot.slane %v4919, 2
    %v4921 = vadd.f32 %v4919, %v4920
    %v4922 = vrot.slane %v4921, 1
    %v4923 = vadd.f32 %v4921, %v4922
    %v4924 = vadd.f32 %v4852, %v4854
    %v4925 = vrot.slane %v4924, 4
    %v4926 = vadd.f32 %v4924, %v4925
    %v4927 = vrot.slane %v4926, 2
    %v4928 = vadd.f32 %v4926, %v4927
    %v4929 = vrot.slane %v4928, 1
    %v4930 = vadd.f32 %v4928, %v4929
    %v4931 = vadd.f32 %v4856, %v4858
    %v4932 = vrot.slane %v4931, 4
    %v4933 = vadd.f32 %v4931, %v4932
    %v4934 = vrot.slane %v4933, 2
    %v4935 = vadd.f32 %v4933, %v4934
    %v4936 = vrot.slane %v4935, 1
    %v4937 = vadd.f32 %v4935, %v4936
    %v4938 = vadd.f32 %v4860, %v4862
    %v4939 = vrot.slane %v4938, 4
    %v4940 = vadd.f32 %v4938, %v4939
    %v4941 = vrot.slane %v4940, 2
    %v4942 = vadd.f32 %v4940, %v4941
    %v4943 = vrot.slane %v4942, 1
    %v4944 = vadd.f32 %v4942, %v4943
    %v4945 = vadd.f32 %v4864, %v4866
    %v4946 = vrot.slane %v4945, 4
    %v4947 = vadd.f32 %v4945, %v4946
    %v4948 = vrot.slane %v4947, 2
    %v4949 = vadd.f32 %v4947, %v4948
    %v4950 = vrot.slane %v4949, 1
    %v4951 = vadd.f32 %v4949, %v4950
    %v4952 = vadd.f32 %v4868, %v4870
    %v4953 = vrot.slane %v4952, 4
    %v4954 = vadd.f32 %v4952, %v4953
    %v4955 = vrot.slane %v4954, 2
    %v4956 = vadd.f32 %v4954, %v4955
    %v4957 = vrot.slane %v4956, 1
    %v4958 = vadd.f32 %v4956, %v4957
    %v4959 = vadd.f32 %v4872, %v4874
    %v4960 = vrot.slane %v4959, 4
    %v4961 = vadd.f32 %v4959, %v4960
    %v4962 = vrot.slane %v4961, 2
    %v4963 = vadd.f32 %v4961, %v4962
    %v4964 = vrot.slane %v4963, 1
    %v4965 = vadd.f32 %v4963, %v4964
    %v4966 = vadd.f32 %v4876, %v4878
    %v4967 = vrot.slane %v4966, 4
    %v4968 = vadd.f32 %v4966, %v4967
    %v4969 = vrot.slane %v4968, 2
    %v4970 = vadd.f32 %v4968, %v4969
    %v4971 = vrot.slane %v4970, 1
    %v4972 = vadd.f32 %v4970, %v4971
    %v4973 = vadd.f32 %v4880, %v4882
    %v4974 = vrot.slane %v4973, 4
    %v4975 = vadd.f32 %v4973, %v4974
    %v4976 = vrot.slane %v4975, 2
    %v4977 = vadd.f32 %v4975, %v4976
    %v4978 = vrot.slane %v4977, 1
    %v4979 = vadd.f32 %v4977, %v4978
    %v4980 = vadd.f32 %v4884, %v4886
    %v4981 = vrot.slane %v4980, 4
    %v4982 = vadd.f32 %v4980, %v4981
    %v4983 = vrot.slane %v4982, 2
    %v4984 = vadd.f32 %v4982, %v4983
    %v4985 = vrot.slane %v4984, 1
    %v4986 = vadd.f32 %v4984, %v4985
    %v4987 = vadd.f32 %v4888, %v4890
    %v4988 = vrot.slane %v4987, 4
    %v4989 = vadd.f32 %v4987, %v4988
    %v4990 = vrot.slane %v4989, 2
    %v4991 = vadd.f32 %v4989, %v4990
    %v4992 = vrot.slane %v4991, 1
    %v4993 = vadd.f32 %v4991, %v4992
    %v4994 = vadd.f32 %v4892, %v4894
    %v4995 = vrot.slane %v4994, 4
    %v4996 = vadd.f32 %v4994, %v4995
    %v4997 = vrot.slane %v4996, 2
    %v4998 = vadd.f32 %v4996, %v4997
    %v4999 = vrot.slane %v4998, 1
    %v5000 = vadd.f32 %v4998, %v4999
    %v5001 = vadd.f32 %v4896, %v4898
    %v5002 = vrot.slane %v5001, 4
    %v5003 = vadd.f32 %v5001, %v5002
    %v5004 = vrot.slane %v5003, 2
    %v5005 = vadd.f32 %v5003, %v5004
    %v5006 = vrot.slane %v5005, 1
    %v5007 = vadd.f32 %v5005, %v5006
    %v5008 = vadd.f32 %v4900, %v4902
    %v5009 = vrot.slane %v5008, 4
    %v5010 = vadd.f32 %v5008, %v5009
    %v5011 = vrot.slane %v5010, 2
    %v5012 = vadd.f32 %v5010, %v5011
    %v5013 = vrot.slane %v5012, 1
    %v5014 = vadd.f32 %v5012, %v5013
    %v5015 = vrcp.pop %v4909
    %v5016 = vrcp.pop %v4916
    %v5017 = vrcp.pop %v4923
    %v5018 = vrcp.pop %v4930
    %v5019 = vrcp.pop %v4937
    %v5020 = vrcp.pop %v4944
    %v5021 = vrcp.pop %v4951
    %v5022 = vrcp.pop %v4958
    %v5023 = vrcp.pop %v4965
    %v5024 = vrcp.pop %v4972
    %v5025 = vrcp.pop %v4979
    %v5026 = vrcp.pop %v4986
    %v5027 = vrcp.pop %v4993
    %v5028 = vrcp.pop %v5000
    %v5029 = vrcp.pop %v5007
    %v5030 = vrcp.pop %v5014
    %v5031 = vmul.f32 %v4840, %v5015
    %v5032 = vmul.f32 %v4842, %v5015
    %v5033 = vmul.f32 %v4844, %v5016
    %v5034 = vmul.f32 %v4846, %v5016
    %v5035 = vmul.f32 %v4848, %v5017
    %v5036 = vmul.f32 %v4850, %v5017
    %v5037 = vmul.f32 %v4852, %v5018
    %v5038 = vmul.f32 %v4854, %v5018
    %v5039 = vmul.f32 %v4856, %v5019
    %v5040 = vmul.f32 %v4858, %v5019
    %v5041 = vmul.f32 %v4860, %v5020
    %v5042 = vmul.f32 %v4862, %v5020
    %v5043 = vmul.f32 %v4864, %v5021
    %v5044 = vmul.f32 %v4866, %v5021
    %v5045 = vmul.f32 %v4868, %v5022
    %v5046 = vmul.f32 %v4870, %v5022
    %v5047 = vmul.f32 %v4872, %v5023
    %v5048 = vmul.f32 %v4874, %v5023
    %v5049 = vmul.f32 %v4876, %v5024
    %v5050 = vmul.f32 %v4878, %v5024
    %v5051 = vmul.f32 %v4880, %v5025
    %v5052 = vmul.f32 %v4882, %v5025
    %v5053 = vmul.f32 %v4884, %v5026
    %v5054 = vmul.f32 %v4886, %v5026
    %v5055 = vmul.f32 %v4888, %v5027
    %v5056 = vmul.f32 %v4890, %v5027
    %v5057 = vmul.f32 %v4892, %v5028
    %v5058 = vmul.f32 %v4894, %v5028
    %v5059 = vmul.f32 %v4896, %v5029
    %v5060 = vmul.f32 %v4898, %v5029
    %v5061 = vmul.f32 %v4900, %v5030
    %v5062 = vmul.f32 %v4902, %v5030
    %v5063 = vmul.f32 %v5031, %v4154
    %v5064 = vmul.f32 %v5032, %v4158
    %v5065 = vmul.f32 %v5033, %v4154
    %v5066 = vmul.f32 %v5034, %v4158
    %v5067 = vmul.f32 %v5035, %v4154
    %v5068 = vmul.f32 %v5036, %v4158
    %v5069 = vmul.f32 %v5037, %v4154
    %v5070 = vmul.f32 %v5038, %v4158
    %v5071 = vmul.f32 %v5039, %v4154
    %v5072 = vmul.f32 %v5040, %v4158
    %v5073 = vmul.f32 %v5041, %v4154
    %v5074 = vmul.f32 %v5042, %v4158
    %v5075 = vmul.f32 %v5043, %v4154
    %v5076 = vmul.f32 %v5044, %v4158
    %v5077 = vmul.f32 %v5045, %v4154
    %v5078 = vmul.f32 %v5046, %v4158
    %v5079 = vmul.f32 %v5047, %v4154
    %v5080 = vmul.f32 %v5048, %v4158
    %v5081 = vmul.f32 %v5049, %v4154
    %v5082 = vmul.f32 %v5050, %v4158
    %v5083 = vmul.f32 %v5051, %v4154
    %v5084 = vmul.f32 %v5052, %v4158
    %v5085 = vmul.f32 %v5053, %v4154
    %v5086 = vmul.f32 %v5054, %v4158
    %v5087 = vmul.f32 %v5055, %v4154
    %v5088 = vmul.f32 %v5056, %v4158
    %v5089 = vmul.f32 %v5057, %v4154
    %v5090 = vmul.f32 %v5058, %v4158
    %v5091 = vmul.f32 %v5059, %v4154
    %v5092 = vmul.f32 %v5060, %v4158
    %v5093 = vmul.f32 %v5061, %v4154
    %v5094 = vmul.f32 %v5062, %v4158
    %v5095 = vadd.f32 %v5063, %v5064
    %v5096 = vrot.slane %v5095, 4
    %v5097 = vadd.f32 %v5095, %v5096
    %v5098 = vrot.slane %v5097, 2
    %v5099 = vadd.f32 %v5097, %v5098
    %v5100 = vrot.slane %v5099, 1
    %v5101 = vadd.f32 %v5099, %v5100
    %v5102 = vadd.f32 %v5065, %v5066
    %v5103 = vrot.slane %v5102, 4
    %v5104 = vadd.f32 %v5102, %v5103
    %v5105 = vrot.slane %v5104, 2
    %v5106 = vadd.f32 %v5104, %v5105
    %v5107 = vrot.slane %v5106, 1
    %v5108 = vadd.f32 %v5106, %v5107
    %v5109 = vadd.f32 %v5067, %v5068
    %v5110 = vrot.slane %v5109, 4
    %v5111 = vadd.f32 %v5109, %v5110
    %v5112 = vrot.slane %v5111, 2
    %v5113 = vadd.f32 %v5111, %v5112
    %v5114 = vrot.slane %v5113, 1
    %v5115 = vadd.f32 %v5113, %v5114
    %v5116 = vadd.f32 %v5069, %v5070
    %v5117 = vrot.slane %v5116, 4
    %v5118 = vadd.f32 %v5116, %v5117
    %v5119 = vrot.slane %v5118, 2
    %v5120 = vadd.f32 %v5118, %v5119
    %v5121 = vrot.slane %v5120, 1
    %v5122 = vadd.f32 %v5120, %v5121
    %v5123 = vadd.f32 %v5071, %v5072
    %v5124 = vrot.slane %v5123, 4
    %v5125 = vadd.f32 %v5123, %v5124
    %v5126 = vrot.slane %v5125, 2
    %v5127 = vadd.f32 %v5125, %v5126
    %v5128 = vrot.slane %v5127, 1
    %v5129 = vadd.f32 %v5127, %v5128
    %v5130 = vadd.f32 %v5073, %v5074
    %v5131 = vrot.slane %v5130, 4
    %v5132 = vadd.f32 %v5130, %v5131
    %v5133 = vrot.slane %v5132, 2
    %v5134 = vadd.f32 %v5132, %v5133
    %v5135 = vrot.slane %v5134, 1
    %v5136 = vadd.f32 %v5134, %v5135
    %v5137 = vadd.f32 %v5075, %v5076
    %v5138 = vrot.slane %v5137, 4
    %v5139 = vadd.f32 %v5137, %v5138
    %v5140 = vrot.slane %v5139, 2
    %v5141 = vadd.f32 %v5139, %v5140
    %v5142 = vrot.slane %v5141, 1
    %v5143 = vadd.f32 %v5141, %v5142
    %v5144 = vadd.f32 %v5077, %v5078
    %v5145 = vrot.slane %v5144, 4
    %v5146 = vadd.f32 %v5144, %v5145
    %v5147 = vrot.slane %v5146, 2
    %v5148 = vadd.f32 %v5146, %v5147
    %v5149 = vrot.slane %v5148, 1
    %v5150 = vadd.f32 %v5148, %v5149
    %v5151 = vadd.f32 %v5079, %v5080
    %v5152 = vrot.slane %v5151, 4
    %v5153 = vadd.f32 %v5151, %v5152
    %v5154 = vrot.slane %v5153, 2
    %v5155 = vadd.f32 %v5153, %v5154
    %v5156 = vrot.slane %v5155, 1
    %v5157 = vadd.f32 %v5155, %v5156
    %v5158 = vadd.f32 %v5081, %v5082
    %v5159 = vrot.slane %v5158, 4
    %v5160 = vadd.f32 %v5158, %v5159
    %v5161 = vrot.slane %v5160, 2
    %v5162 = vadd.f32 %v5160, %v5161
    %v5163 = vrot.slane %v5162, 1
    %v5164 = vadd.f32 %v5162, %v5163
    %v5165 = vadd.f32 %v5083, %v5084
    %v5166 = vrot.slane %v5165, 4
    %v5167 = vadd.f32 %v5165, %v5166
    %v5168 = vrot.slane %v5167, 2
    %v5169 = vadd.f32 %v5167, %v5168
    %v5170 = vrot.slane %v5169, 1
    %v5171 = vadd.f32 %v5169, %v5170
    %v5172 = vadd.f32 %v5085, %v5086
    %v5173 = vrot.slane %v5172, 4
    %v5174 = vadd.f32 %v5172, %v5173
    %v5175 = vrot.slane %v5174, 2
    %v5176 = vadd.f32 %v5174, %v5175
    %v5177 = vrot.slane %v5176, 1
    %v5178 = vadd.f32 %v5176, %v5177
    %v5179 = vadd.f32 %v5087, %v5088
    %v5180 = vrot.slane %v5179, 4
    %v5181 = vadd.f32 %v5179, %v5180
    %v5182 = vrot.slane %v5181, 2
    %v5183 = vadd.f32 %v5181, %v5182
    %v5184 = vrot.slane %v5183, 1
    %v5185 = vadd.f32 %v5183, %v5184
    %v5186 = vadd.f32 %v5089, %v5090
    %v5187 = vrot.slane %v5186, 4
    %v5188 = vadd.f32 %v5186, %v5187
    %v5189 = vrot.slane %v5188, 2
    %v5190 = vadd.f32 %v5188, %v5189
    %v5191 = vrot.slane %v5190, 1
    %v5192 = vadd.f32 %v5190, %v5191
    %v5193 = vadd.f32 %v5091, %v5092
    %v5194 = vrot.slane %v5193, 4
    %v5195 = vadd.f32 %v5193, %v5194
    %v5196 = vrot.slane %v5195, 2
    %v5197 = vadd.f32 %v5195, %v5196
    %v5198 = vrot.slane %v5197, 1
    %v5199 = vadd.f32 %v5197, %v5198
    %v5200 = vadd.f32 %v5093, %v5094
    %v5201 = vrot.slane %v5200, 4
    %v5202 = vadd.f32 %v5200, %v5201
    %v5203 = vrot.slane %v5202, 2
    %v5204 = vadd.f32 %v5202, %v5203
    %v5205 = vrot.slane %v5204, 1
    %v5206 = vadd.f32 %v5204, %v5205
    %v5208 = vlaneseq
    %v5209 = vshrl.u32 %v5208, 7
    %v5210 = vsub.s32 0, %v5209
    %v5211 = vrot.slane %v3949, %v5210
    %v5213 = vadd.f32 %v5101, %v5211
    %v5214 = vadd.f32 %v5108, %v5211
    %v5215 = vadd.f32 %v5115, %v5211
    %v5216 = vadd.f32 %v5122, %v5211
    %v5217 = vadd.f32 %v5129, %v5211
    %v5218 = vadd.f32 %v5136, %v5211
    %v5219 = vadd.f32 %v5143, %v5211
    %v5220 = vadd.f32 %v5150, %v5211
    %v5221 = vadd.f32 %v5157, %v5211
    %v5222 = vadd.f32 %v5164, %v5211
    %v5223 = vadd.f32 %v5171, %v5211
    %v5224 = vadd.f32 %v5178, %v5211
    %v5225 = vadd.f32 %v5185, %v5211
    %v5226 = vadd.f32 %v5192, %v5211
    %v5227 = vadd.f32 %v5199, %v5211
    %v5228 = vadd.f32 %v5206, %v5211
    %v5229 = vmax.f32 %v5213, 0.0
    %v5230 = vmax.f32 %v5214, 0.0
    %v5231 = vmax.f32 %v5215, 0.0
    %v5232 = vmax.f32 %v5216, 0.0
    %v5233 = vmax.f32 %v5217, 0.0
    %v5234 = vmax.f32 %v5218, 0.0
    %v5235 = vmax.f32 %v5219, 0.0
    %v5236 = vmax.f32 %v5220, 0.0
    %v5237 = vmax.f32 %v5221, 0.0
    %v5238 = vmax.f32 %v5222, 0.0
    %v5239 = vmax.f32 %v5223, 0.0
    %v5240 = vmax.f32 %v5224, 0.0
    %v5241 = vmax.f32 %v5225, 0.0
    %v5242 = vmax.f32 %v5226, 0.0
    %v5243 = vmax.f32 %v5227, 0.0
    %v5244 = vmax.f32 %v5228, 0.0
    %v5261 = vrot.slane %v5230, 7
    %v5262 = vsel %vm1132, %v5261, %v5229
    %v5263 = vrot.slane %v5231, 6
    %v5264 = vsel %vm1135, %v5263, %v5262
    %v5265 = vrot.slane %v5232, 5
    %v5266 = vsel %vm1138, %v5265, %v5264
    %v5267 = vrot.slane %v5233, 4
    %v5268 = vsel %vm1141, %v5267, %v5266
    %v5269 = vrot.slane %v5234, 3
    %v5270 = vsel %vm1144, %v5269, %v5268
    %v5271 = vrot.slane %v5235, 2
    %v5272 = vsel %vm1147, %v5271, %v5270
    %v5273 = vrot.slane %v5236, 1
    %v5274 = vsel %vm1150, %v5273, %v5272
    %v5275 = vrot.slane %v5238, 7
    %v5276 = vsel %vm1132, %v5275, %v5237
    %v5277 = vrot.slane %v5239, 6
    %v5278 = vsel %vm1135, %v5277, %v5276
    %v5279 = vrot.slane %v5240, 5
    %v5280 = vsel %vm1138, %v5279, %v5278
    %v5281 = vrot.slane %v5241, 4
    %v5282 = vsel %vm1141, %v5281, %v5280
    %v5283 = vrot.slane %v5242, 3
    %v5284 = vsel %vm1144, %v5283, %v5282
    %v5285 = vrot.slane %v5243, 2
    %v5286 = vsel %vm1147, %v5285, %v5284
    %v5287 = vrot.slane %v5244, 1
    %v5288 = vsel %vm1150, %v5287, %v5286
    %5291 = vst [vmem:[#allocation34] sm:$0xff] %v5274
    %5292 = vst [vmem:[#allocation34 + $0x8] sm:$0xff] %v5288
    // Predicated region
    $region186: #{tpu_custom_call.1} parent=1 // pred_check
      _
    $region187: #{tpu_custom_call.1} parent=1 // pred_check_branch
      %5294 = sbr.rel (0) target = $region189
    $region188: #{tpu_custom_call.1} parent=1 // pred_region
      %s5296 = ssub.s32 128, 128
      %5297 = vsyncadd [#allocation4], %s5296
      %s5299 = sshll.u32 [#allocation31], 4
      %s5300 = int_to_ptr.vmem [resolvable:$true] %s5299
      %5302 = dma.vmem_to_hbm [thread:$0]  %s5300, 128, %s57, [#allocation4]
    $region189: #{tpu_custom_call.1} parent=1 // pred_fallthru
      _
    // Predicated region
    $region190: #{tpu_custom_call.1} parent=1 // pred_check
      _
    $region191: #{tpu_custom_call.1} parent=1 // pred_check_branch
      %5304 = sbr.rel (0) target = $region193
    $region192: #{tpu_custom_call.1} parent=1 // pred_region
      %s5306 = ssub.s32 128, 128
      %5307 = vsyncadd [#allocation33], %s5306
      %s5309 = sshll.u32 [#allocation32], 4
      %s5310 = int_to_ptr.vmem [resolvable:$true] %s5309
      %5312 = dma.vmem_to_hbm [thread:$0]  %s5310, 128, %s59, [#allocation33]
    $region193: #{tpu_custom_call.1} parent=1 // pred_fallthru
      _
    // Predicated region
    $region194: #{tpu_custom_call.1} parent=1 // pred_check
      _
    $region195: #{tpu_custom_call.1} parent=1 // pred_check_branch
      %5314 = sbr.rel (0) target = $region197
    $region196: #{tpu_custom_call.1} parent=1 // pred_region
      %s5316 = ssub.s32 256, 256
      %5317 = vsyncadd [#allocation33], %s5316
      %s5318 = sshll.u32 [#allocation34], 4
      %s5319 = int_to_ptr.vmem [resolvable:$true] %s5318
      %5324 = dma.vmem_to_hbm [thread:$0]  %s5319, 256, %s61, [#allocation33], 128, 128, 8
    $region197: #{tpu_custom_call.1} parent=1 // pred_fallthru
      _
    // Predicated region
    $region198: #{tpu_custom_call.1} parent=1 // pred_check
      _
    $region199: #{tpu_custom_call.1} parent=1 // pred_check_branch
      %5326 = sbr.rel (0) target = $region201
    $region200: #{tpu_custom_call.1} parent=1 // pred_region
      %5327 = dma.done [#allocation4], 128
    $region201: #{tpu_custom_call.1} parent=1 // pred_fallthru
      _
    // Predicated region
    $region202: #{tpu_custom_call.1} parent=1 // pred_check
      _
    $region203: #{tpu_custom_call.1} parent=1 // pred_check_branch
      %5329 = sbr.rel (0) target = $region205
    $region204: #{tpu_custom_call.1} parent=1 // pred_region
      %5330 = dma.done [#allocation33], 128
    $region205: #{tpu_custom_call.1} parent=1 // pred_fallthru
      _
    // Predicated region
    $region206: #{tpu_custom_call.1} parent=1 // pred_check
      _
    $region207: #{tpu_custom_call.1} parent=1 // pred_check_branch
      %5332 = sbr.rel (0) target = $region209
    $region208: #{tpu_custom_call.1} parent=1 // pred_region
      %5333 = dma.done [#allocation33], 256
    $region209: #{tpu_custom_call.1} parent=1 // pred_fallthru
      _
    %5334 = vsyncpa [#allocation3], 1
    %5335 = vsyncpa [#allocation6], 1
    %5336 = vsyncpa [#allocation9], 1
    %5337 = vsyncpa [#allocation12], 1
    %5338 = vsyncpa [#allocation15], 1
    %5339 = vsyncpa [#allocation18], 1
    %5340 = vsyncpa [#allocation21], 1
    %5341 = vsyncpa [#allocation24], 1
    %5342 = vsyncpa [#allocation27], 1
    %5343 = vsyncpa [#allocation30], 1
    %5344 = vsyncpa [#allocation4], 1
    %5345 = vsyncpa [#allocation33], 1

</llo_original>
